<compile_context>
chip_gen: v7x
topology: tpu7x:2x2x1
jax: 0.10.0
libtpu: 0.0.40
codegen_flags: <defaults>
</compile_context>

<pallas_src>
import jax
import jax.numpy as jnp
import numpy as np
from jax.experimental import pallas as pl
from jax.experimental.pallas import tpu as pltpu

NEG_SLOPE = 0.01      # torch.nn.LeakyReLU default negative_slope
LANE = 128            # lane width -> channel padding target


def _leaky(v):
    return jnp.where(v > 0, v, NEG_SLOPE * v)


# ---------------------------------------------------------------------------
# Fused Pallas kernel: all causal blocks + max-pool + linear head.
# ---------------------------------------------------------------------------
def _make_encoder_kernel(K, dilations, L, CP, res_slot):
    NB = len(dilations)
    PMAX = (K - 1) * max(dilations)

    def kernel(x_ref, W1_ref, B1_ref, W2_ref, B2_ref, WR_ref, BR_ref,
               WL_ref, BL_ref, o_ref, actA_ref, actB_ref):
        BT = actA_ref.shape[0]
        Cin = x_ref.shape[-1]

        def mm(a, b):                       # bf16 x bf16 matmul, f32 accumulate
            return jax.lax.dot_general(
                a.astype(jnp.bfloat16), b,
                dimension_numbers=(((a.ndim - 1,), (0,)), ((), ())),
                preferred_element_type=jnp.float32)

        # Stage the input block lane-densely.  The PMAX causal prefix rows of
        # BOTH buffers are zeroed here (unconditionally every grid step — safe
        # under megacore sharding) and never written again, so every conv sees
        # zeros for t < 0, matching PyTorch's left zero-padding + Chomp1d.
        actA_ref[...] = jnp.zeros_like(actA_ref)
        actA_ref[:, PMAX:PMAX + L, :Cin] = x_ref[...]
        if PMAX > 0:
            actB_ref[:, :PMAX, :] = jnp.zeros((BT, PMAX, CP), jnp.float32)

        def conv(src_ref, W_ref, bias, dil, blk):
            # causal dilated conv: K accumulated (BT,L,CP) @ (CP,CP) matmuls
            P = (K - 1) * dil
            acc = None
            for k in range(K):
                off = PMAX - P + k * dil                       # static offset
                t = mm(src_ref[:, off:off + L, :], W_ref[blk, k])
                acc = t if acc is None else acc + t
            return _leaky(acc + bias[None, :, :])

        for i in range(NB):
            dil = dilations[i]
            # conv1 -> chomp -> LeakyReLU (reads activation in-place from A)
            h1 = conv(actA_ref, W1_ref, B1_ref[i], dil, i)
            # conv2 sees zeros for t < 0 (prefix of B), not h1's past
            actB_ref[:, PMAX:PMAX + L, :] = h1
            h2 = conv(actB_ref, W2_ref, B2_ref[i], dil, i)
            act = actA_ref[:, PMAX:PMAX + L, :]
            if res_slot[i] >= 0:                               # 1x1 up/down-sample
                j = res_slot[i]
                res = mm(act, WR_ref[j]) + BR_ref[j][None, :, :]
            else:                                              # identity: plain add
                res = act
            actA_ref[:, PMAX:PMAX + L, :] = h2 + res

        # AdaptiveMaxPool1d(1) + squeeze + Linear
        pooled = jnp.max(actA_ref[:, PMAX:PMAX + L, :], axis=1, keepdims=True)
        o_ref[...] = mm(pooled, WL_ref[...]) + BL_ref[...][None, :, :]

    return kernel


def causal_cnn_encoder(x_ncl, packed):
    """x_ncl: PyTorch-style (B, C, L) input -> (B, out_channels)."""
    W1, B1, W2, B2, WR, BR, WL, BL = packed["weights"]
    dilations = packed["dilations"]
    res_slot = packed["res_slot"]
    K = packed["kernel_size"]
    out_channels = packed["out_channels"]
    CP = packed["cp"]
    OP = WL.shape[1]

    x = jnp.transpose(x_ncl, (0, 2, 1)).astype(jnp.float32)   # -> (B, L, Cin)
    B, L, Cin = x.shape
    PMAX = (K - 1) * max(dilations)

    # Per-generation VMEM budget (~3/4 of physical: ~96 MiB v5e/v6e, ~48 MiB v7x).
    try:
        vmem_cap = int(getattr(pltpu.get_tpu_info(), "vmem_capacity_bytes", 64 << 20))
    except Exception:
        vmem_cap = 64 << 20                                    # conservative default
    vmem_limit = int(min((vmem_cap * 3) // 4, 100 << 20))

    weight_args = (W1, B1, W2, B2, WR, BR, WL, BL)
    weight_bytes = sum(int(w.size) * w.dtype.itemsize for w in weight_args)

    # Batch tile: fill VMEM (two staging buffers + conv transients), target a
    # matmul M dim (BT*L) >= 512, prefer BT | B, and keep >= 2 grid steps when
    # B >= 2 so both v7x TensorCores get work under "parallel" semantics.
    per_sample = (2 * (PMAX + L) + 2 * L) * CP * 4 + 2 * L * Cin * 4
    avail = max(vmem_limit - 2 * weight_bytes - (2 << 20), per_sample)
    BT = min(max(1, avail // per_sample), max(1, -(-512 // L)), B)
    if B >= 2:
        BT = min(BT, max(1, B // 2))
    while BT > 1 and B % BT != 0:                              # avoid padded tail tile
        BT -= 1
    BT = int(BT)

    B_pad = ((B + BT - 1) // BT) * BT
    if B_pad != B:
        x = jnp.pad(x, ((0, B_pad - B), (0, 0), (0, 0)))

    def _full(arr):
        nd = arr.ndim
        return pl.BlockSpec(arr.shape, lambda b, _nd=nd: (0,) * _nd)
    # TODO(synk): single-buffer the constant weight inputs (pipeline_mode) and add
    # a (batch, time) grid with a PMAX-row VMEM halo for long sequences; at these
    # sizes weights are <1 MiB in bf16 and the full L fits per tile.

    NB = len(dilations)
    NR = sum(1 for s in res_slot if s >= 0)
    M = B_pad * L
    flops = NB * 2 * K * 2 * M * CP * CP + NR * 2 * M * CP * CP + 2 * B_pad * CP * OP
    bytes_accessed = int(x.size * 4 + weight_bytes + B_pad * OP * 4)

    out = pl.pallas_call(
        _make_encoder_kernel(K, tuple(dilations), L, CP, tuple(res_slot)),
        out_shape=jax.ShapeDtypeStruct((B_pad, 1, OP), jnp.float32),
        grid=(B_pad // BT,),
        in_specs=[pl.BlockSpec((BT, L, Cin), lambda b: (b, 0, 0))]
                 + [_full(w) for w in weight_args],
        out_specs=pl.BlockSpec((BT, 1, OP), lambda b: (b, 0, 0)),
        scratch_shapes=[pltpu.VMEM((BT, PMAX + L, CP), jnp.float32),   # activation (A)
                        pltpu.VMEM((BT, PMAX + L, CP), jnp.float32)],  # conv1 out  (B)
        compiler_params=pltpu.CompilerParams(
            dimension_semantics=("parallel",),
            vmem_limit_bytes=vmem_limit),
        cost_estimate=pl.CostEstimate(flops=int(flops), transcendentals=0,
                                      bytes_accessed=bytes_accessed),
    )(x, *weight_args)
    return out[:B, 0, :out_channels]


# ---------------------------------------------------------------------------
# Parameter init (deterministic; shapes follow the PyTorch __init__)
# ---------------------------------------------------------------------------
def _round_bf16(a):
    """Round to nearest bf16 value so the kernel's bf16 weight copies equal the
    f32 master weights used by the reference (only activation casts differ)."""
    return jnp.asarray(a, jnp.bfloat16).astype(jnp.float32)


def init_params(key, in_channels, channels, depth, reduced_size, out_channels,
                kernel_size):
    dilation = 1
    cfgs = []
    for i in range(depth):
        cin = in_channels if i == 0 else channels
        cfgs.append((cin, channels, dilation))
        dilation *= 2
    cfgs.append((channels, reduced_size, dilation))   # final block

    params = []
    for cin, cout, dil in cfgs:
        key, k1, k2, k3, k4, k5, k6 = jax.random.split(key, 7)
        # Conv1d weight (Cout, Cin, K) stored transposed as (K, Cin, Cout)
        w1 = _round_bf16(0.1 * jax.random.normal(k1, (kernel_size, cin, cout), jnp.float32))
        b1 = 0.1 * jax.random.normal(k2, (1, cout), jnp.float32)
        w2 = _round_bf16(0.1 * jax.random.normal(k3, (kernel_size, cout, cout), jnp.float32))
        b2 = 0.1 * jax.random.normal(k4, (1, cout), jnp.float32)
        if cin != cout:                                # 1x1 up/down-sample conv
            wres = _round_bf16(0.1 * jax.random.normal(k5, (cin, cout), jnp.float32))
            bres = 0.1 * jax.random.normal(k6, (1, cout), jnp.float32)
        else:
            wres, bres = None, None
        params.append(((w1, b1, w2, b2, wres, bres), dil))

    key, kl1, kl2 = jax.random.split(key, 3)
    w_lin = _round_bf16(0.1 * jax.random.normal(kl1, (reduced_size, out_channels), jnp.float32))
    b_lin = 0.1 * jax.random.normal(kl2, (1, out_channels), jnp.float32)
    return params, (w_lin, b_lin)


def pack_params(params, head_params, kernel_size, in_channels):
    """Pad channels to a lane-dense width, stack per-block per-tap weights and
    keep 1x1 residual weights only for blocks that actually have one."""
    w_lin, b_lin = head_params
    widths = [in_channels, w_lin.shape[0]]
    for (w1, *_), _ in params:
        widths += [w1.shape[1], w1.shape[2]]
    cp = LANE * (-(-max(widths) // LANE))            # round up to 128 multiple
    op = LANE * (-(-w_lin.shape[1] // LANE))

    NB, K = len(params), kernel_size
    W1 = np.zeros((NB, K, cp, cp), np.float32)
    B1 = np.zeros((NB, 1, cp), np.float32)
    W2 = np.zeros((NB, K, cp, cp), np.float32)
    B2 = np.zeros((NB, 1, cp), np.float32)
    res_slot, wr_list, br_list, dilations = [], [], [], []
    for i, ((w1, b1, w2, b2, wres, bres), dil) in enumerate(params):
        w1, b1, w2, b2 = map(np.asarray, (w1, b1, w2, b2))
        cin, cout = w1.shape[1], w1.shape[2]
        W1[i, :, :cin, :cout] = w1
        W2[i, :, :cout, :cout] = w2
        B1[i, 0, :cout] = b1[0]
        B2[i, 0, :cout] = b2[0]
        if wres is not None:
            res_slot.append(len(wr_list))
            wr = np.zeros((cp, cp), np.float32); wr[:cin, :cout] = np.asarray(wres)
            br = np.zeros((1, cp), np.float32);  br[0, :cout] = np.asarray(bres)[0]
            wr_list.append(wr); br_list.append(br)
        else:
            res_slot.append(-1)                      # identity residual: no matmul
        dilations.append(dil)
    if wr_list:
        WR, BR = np.stack(wr_list), np.stack(br_list)
    else:                                            # dummy (never read)
        WR = np.zeros((1, cp, cp), np.float32); BR = np.zeros((1, 1, cp), np.float32)

    w_lin_np, b_lin_np = np.asarray(w_lin), np.asarray(b_lin)
    R, O = w_lin_np.shape
    WL = np.zeros((cp, op), np.float32); WL[:R, :O] = w_lin_np
    BL = np.zeros((1, op), np.float32);  BL[0, :O] = b_lin_np[0]

    # Matmul weights in bf16 (MXU-native); biases stay f32.
    weights = (jnp.asarray(W1, jnp.bfloat16), jnp.asarray(B1),
               jnp.asarray(W2, jnp.bfloat16), jnp.asarray(B2),
               jnp.asarray(WR, jnp.bfloat16), jnp.asarray(BR),
               jnp.asarray(WL, jnp.bfloat16), jnp.asarray(BL))
    return {"weights": weights, "dilations": tuple(dilations),
            "res_slot": tuple(res_slot), "kernel_size": K,
            "out_channels": int(O), "cp": int(cp)}


# ---------------------------------------------------------------------------
# Pure-JAX reference (f32, for correctness check)
# ---------------------------------------------------------------------------
def _ref_causal_conv(x, w, b, dilation):
    P = (w.shape[0] - 1) * dilation
    xp = jnp.pad(x, ((0, 0), (P, 0), (0, 0)))
    out = jax.lax.conv_general_dilated(
        xp, w, window_strides=(1,), padding='VALID', rhs_dilation=(dilation,),
        dimension_numbers=('NWC', 'WIO', 'NWC'))
    return out + b[None, :, :]


def ref_encoder(x_ncl, params, head_params, kernel_size):
    x = jnp.transpose(x_ncl, (0, 2, 1)).astype(jnp.float32)
    for (w1, b1, w2, b2, wres, bres), dil in params:
        h = _leaky(_ref_causal_conv(x, w1, b1, dil))
        h = _leaky(_ref_causal_conv(h, w2, b2, dil))
        if wres is None:
            res = x
        else:
            res = jnp.einsum('blc,co->blo', x, wres) + bres[None, :, :]
        x = h + res
    pooled = jnp.max(x, axis=1)
    w_lin, b_lin = head_params
    return pooled @ w_lin + b_lin


if __name__ == "__main__":
    # Small shapes consistent with the module's (B, C, L) input convention.
    B, in_channels, L = 2, 4, 16
    channels, depth, reduced_size, out_channels, kernel_size = 8, 2, 16, 8, 3

    key = jax.random.PRNGKey(0)
    kx, kp = jax.random.split(key)
    x = jax.random.normal(kx, (B, in_channels, L), jnp.float32)   # PyTorch NCL
    params, head_params = init_params(kp, in_channels, channels, depth,
                                      reduced_size, out_channels, kernel_size)
    packed = pack_params(params, head_params, kernel_size, in_channels)

    out = causal_cnn_encoder(x, packed)
    out = jax.block_until_ready(out)
    assert out.shape == (B, out_channels)

    # f32 reference; kernel uses bf16 matmul operands with f32 accumulation,
    # so tolerance is relaxed slightly vs. a pure-f32 kernel.
    ref = ref_encoder(x, params, head_params, kernel_size)
    np.testing.assert_allclose(np.asarray(out), np.asarray(ref),
                               rtol=2e-2, atol=2e-2)
    print("KERNEL_OK")
</pallas_src>

<mosaic_0001>
module attributes {stable_mosaic.version = 11 : i64} {
  func.func @kernel(%arg0: i32, %arg1: memref<1x16x4xf32, #tpu.memory_space<vmem>>, %arg2: memref<3x3x128x128xbf16, #tpu.memory_space<vmem>>, %arg3: memref<3x1x128xf32, #tpu.memory_space<vmem>>, %arg4: memref<3x3x128x128xbf16, #tpu.memory_space<vmem>>, %arg5: memref<3x1x128xf32, #tpu.memory_space<vmem>>, %arg6: memref<2x128x128xbf16, #tpu.memory_space<vmem>>, %arg7: memref<2x1x128xf32, #tpu.memory_space<vmem>>, %arg8: memref<128x128xbf16, #tpu.memory_space<vmem>>, %arg9: memref<1x128xf32, #tpu.memory_space<vmem>>, %arg10: memref<1x1x128xf32, #tpu.memory_space<vmem>>, %arg11: memref<1x24x128xf32, #tpu.memory_space<vmem>>, %arg12: memref<1x24x128xf32, #tpu.memory_space<vmem>>) attributes {dimension_semantics = [#tpu.dimension_semantics<parallel>], iteration_bounds = array<i64: 2>, scalar_prefetch = 0 : i64, scratch_operands = 2 : i64, tpu.core_type = #tpu.core_type<tc>, window_params = [{transform_indices = @transform_0, window_bounds = array<i64: 1, 16, 4>}, {pipeline_mode = #tpu.pipeline_mode<synchronous>, transform_indices = @transform_1, window_bounds = array<i64: 3, 3, 128, 128>}, {pipeline_mode = #tpu.pipeline_mode<synchronous>, transform_indices = @transform_2, window_bounds = array<i64: 3, 1, 128>}, {pipeline_mode = #tpu.pipeline_mode<synchronous>, transform_indices = @transform_3, window_bounds = array<i64: 3, 3, 128, 128>}, {pipeline_mode = #tpu.pipeline_mode<synchronous>, transform_indices = @transform_4, window_bounds = array<i64: 3, 1, 128>}, {pipeline_mode = #tpu.pipeline_mode<synchronous>, transform_indices = @transform_5, window_bounds = array<i64: 2, 128, 128>}, {pipeline_mode = #tpu.pipeline_mode<synchronous>, transform_indices = @transform_6, window_bounds = array<i64: 2, 1, 128>}, {pipeline_mode = #tpu.pipeline_mode<synchronous>, transform_indices = @transform_7, window_bounds = array<i64: 128, 128>}, {pipeline_mode = #tpu.pipeline_mode<synchronous>, transform_indices = @transform_8, window_bounds = array<i64: 1, 128>}, {transform_indices = @transform_9, window_bounds = array<i64: 1, 1, 128>}]} {
    %cst = arith.constant 0.000000e+00 : f32
    %0 = vector.broadcast %cst : f32 to vector<1x24x128xf32>
    %c0 = arith.constant 0 : index
    %c0_0 = arith.constant 0 : index
    %c0_1 = arith.constant 0 : index
    %1 = vector.load %arg11[%c0, %c0_0, %c0_1] : memref<1x24x128xf32, #tpu.memory_space<vmem>>, vector<1x24x128xf32>
    tpu.vector_store %arg11[%c0, %c0_0, %c0_1], %0 {strides = array<i32>} : memref<1x24x128xf32, #tpu.memory_space<vmem>>, vector<1x24x128xf32>,
    %c0_2 = arith.constant 0 : index
    %c0_3 = arith.constant 0 : index
    %c0_4 = arith.constant 0 : index
    %2 = vector.load %arg1[%c0_2, %c0_3, %c0_4] : memref<1x16x4xf32, #tpu.memory_space<vmem>>, vector<1x16x4xf32>
    %c0_5 = arith.constant 0 : index
    %c8 = arith.constant 8 : index
    %c0_6 = arith.constant 0 : index
    %3 = vector.load %arg11[%c0_5, %c8, %c0_6] : memref<1x24x128xf32, #tpu.memory_space<vmem>>, vector<1x16x4xf32>
    tpu.vector_store %arg11[%c0_5, %c8, %c0_6], %2 {strides = array<i32>} : memref<1x24x128xf32, #tpu.memory_space<vmem>>, vector<1x16x4xf32>,
    %cst_7 = arith.constant 0.000000e+00 : f32
    %4 = vector.broadcast %cst_7 : f32 to vector<1x8x128xf32>
    %c0_8 = arith.constant 0 : index
    %c0_9 = arith.constant 0 : index
    %c0_10 = arith.constant 0 : index
    %5 = vector.load %arg12[%c0_8, %c0_9, %c0_10] : memref<1x24x128xf32, #tpu.memory_space<vmem>>, vector<1x8x128xf32>
    tpu.vector_store %arg12[%c0_8, %c0_9, %c0_10], %4 {strides = array<i32>} : memref<1x24x128xf32, #tpu.memory_space<vmem>>, vector<1x8x128xf32>,
    %c0_11 = arith.constant 0 : index
    %c0_12 = arith.constant 0 : index
    %c0_13 = arith.constant 0 : index
    %6 = vector.load %arg3[%c0_11, %c0_12, %c0_13] : memref<3x1x128xf32, #tpu.memory_space<vmem>>, vector<1x1x128xf32>
    %7 = vector.shape_cast %6 : vector<1x1x128xf32> to vector<1x128xf32>
    %c0_14 = arith.constant 0 : index
    %c6 = arith.constant 6 : index
    %c0_15 = arith.constant 0 : index
    %8 = vector.load %arg11[%c0_14, %c6, %c0_15] : memref<1x24x128xf32, #tpu.memory_space<vmem>>, vector<1x16x128xf32>
    %c0_16 = arith.constant 0 : index
    %c0_17 = arith.constant 0 : index
    %c0_18 = arith.constant 0 : index
    %c0_19 = arith.constant 0 : index
    %9 = vector.load %arg2[%c0_16, %c0_17, %c0_18, %c0_19] : memref<3x3x128x128xbf16, #tpu.memory_space<vmem>>, vector<1x1x128x128xbf16>
    %10 = vector.shape_cast %9 : vector<1x1x128x128xbf16> to vector<128x128xbf16>
    %11 = arith.truncf %8 : vector<1x16x128xf32> to vector<1x16x128xbf16>
    %cst_20 = arith.constant dense<0.000000e+00> : vector<1x16x128xf32>
    %12 = tpu.matmul %11, %10, %cst_20 {dimension_numbers = #tpu.dot_dimension_numbers<[2], [0], [0, 1], [1], [0, 0, 0, 1, 1, 1], [], []>} : vector<1x16x128xbf16>, vector<128x128xbf16>, vector<1x16x128xf32> -> vector<1x16x128xf32>
    %c0_21 = arith.constant 0 : index
    %c7 = arith.constant 7 : index
    %c0_22 = arith.constant 0 : index
    %13 = vector.load %arg11[%c0_21, %c7, %c0_22] : memref<1x24x128xf32, #tpu.memory_space<vmem>>, vector<1x16x128xf32>
    %c0_23 = arith.constant 0 : index
    %c1 = arith.constant 1 : index
    %c0_24 = arith.constant 0 : index
    %c0_25 = arith.constant 0 : index
    %14 = vector.load %arg2[%c0_23, %c1, %c0_24, %c0_25] : memref<3x3x128x128xbf16, #tpu.memory_space<vmem>>, vector<1x1x128x128xbf16>
    %15 = vector.shape_cast %14 : vector<1x1x128x128xbf16> to vector<128x128xbf16>
    %16 = arith.truncf %13 : vector<1x16x128xf32> to vector<1x16x128xbf16>
    %cst_26 = arith.constant dense<0.000000e+00> : vector<1x16x128xf32>
    %17 = tpu.matmul %16, %15, %cst_26 {dimension_numbers = #tpu.dot_dimension_numbers<[2], [0], [0, 1], [1], [0, 0, 0, 1, 1, 1], [], []>} : vector<1x16x128xbf16>, vector<128x128xbf16>, vector<1x16x128xf32> -> vector<1x16x128xf32>
    %18 = arith.addf %12, %17 : vector<1x16x128xf32>
    %c0_27 = arith.constant 0 : index
    %c8_28 = arith.constant 8 : index
    %c0_29 = arith.constant 0 : index
    %19 = vector.load %arg11[%c0_27, %c8_28, %c0_29] : memref<1x24x128xf32, #tpu.memory_space<vmem>>, vector<1x16x128xf32>
    %c0_30 = arith.constant 0 : index
    %c2 = arith.constant 2 : index
    %c0_31 = arith.constant 0 : index
    %c0_32 = arith.constant 0 : index
    %20 = vector.load %arg2[%c0_30, %c2, %c0_31, %c0_32] : memref<3x3x128x128xbf16, #tpu.memory_space<vmem>>, vector<1x1x128x128xbf16>
    %21 = vector.shape_cast %20 : vector<1x1x128x128xbf16> to vector<128x128xbf16>
    %22 = arith.truncf %19 : vector<1x16x128xf32> to vector<1x16x128xbf16>
    %cst_33 = arith.constant dense<0.000000e+00> : vector<1x16x128xf32>
    %23 = tpu.matmul %22, %21, %cst_33 {dimension_numbers = #tpu.dot_dimension_numbers<[2], [0], [0, 1], [1], [0, 0, 0, 1, 1, 1], [], []>} : vector<1x16x128xbf16>, vector<128x128xbf16>, vector<1x16x128xf32> -> vector<1x16x128xf32>
    %24 = arith.addf %18, %23 : vector<1x16x128xf32>
    %25 = vector.shape_cast %7 : vector<1x128xf32> to vector<1x1x128xf32>
    %26 = vector.broadcast %25 : vector<1x1x128xf32> to vector<1x16x128xf32>
    %27 = arith.addf %24, %26 : vector<1x16x128xf32>
    %cst_34 = arith.constant 0.000000e+00 : f32
    %28 = vector.broadcast %cst_34 : f32 to vector<1x16x128xf32>
    %29 = arith.cmpf ogt, %27, %28 : vector<1x16x128xf32>
    %cst_35 = arith.constant 0.00999999977 : f32
    %30 = vector.broadcast %cst_35 : f32 to vector<1x16x128xf32>
    %31 = arith.mulf %30, %27 : vector<1x16x128xf32>
    %32 = arith.select %29, %27, %31 : vector<1x16x128xi1>, vector<1x16x128xf32>
    %c0_36 = arith.constant 0 : index
    %c8_37 = arith.constant 8 : index
    %c0_38 = arith.constant 0 : index
    %33 = vector.load %arg12[%c0_36, %c8_37, %c0_38] : memref<1x24x128xf32, #tpu.memory_space<vmem>>, vector<1x16x128xf32>
    tpu.vector_store %arg12[%c0_36, %c8_37, %c0_38], %32 {strides = array<i32>} : memref<1x24x128xf32, #tpu.memory_space<vmem>>, vector<1x16x128xf32>,
    %c0_39 = arith.constant 0 : index
    %c0_40 = arith.constant 0 : index
    %c0_41 = arith.constant 0 : index
    %34 = vector.load %arg5[%c0_39, %c0_40, %c0_41] : memref<3x1x128xf32, #tpu.memory_space<vmem>>, vector<1x1x128xf32>
    %35 = vector.shape_cast %34 : vector<1x1x128xf32> to vector<1x128xf32>
    %c0_42 = arith.constant 0 : index
    %c6_43 = arith.constant 6 : index
    %c0_44 = arith.constant 0 : index
    %36 = vector.load %arg12[%c0_42, %c6_43, %c0_44] : memref<1x24x128xf32, #tpu.memory_space<vmem>>, vector<1x16x128xf32>
    %c0_45 = arith.constant 0 : index
    %c0_46 = arith.constant 0 : index
    %c0_47 = arith.constant 0 : index
    %c0_48 = arith.constant 0 : index
    %37 = vector.load %arg4[%c0_45, %c0_46, %c0_47, %c0_48] : memref<3x3x128x128xbf16, #tpu.memory_space<vmem>>, vector<1x1x128x128xbf16>
    %38 = vector.shape_cast %37 : vector<1x1x128x128xbf16> to vector<128x128xbf16>
    %39 = arith.truncf %36 : vector<1x16x128xf32> to vector<1x16x128xbf16>
    %cst_49 = arith.constant dense<0.000000e+00> : vector<1x16x128xf32>
    %40 = tpu.matmul %39, %38, %cst_49 {dimension_numbers = #tpu.dot_dimension_numbers<[2], [0], [0, 1], [1], [0, 0, 0, 1, 1, 1], [], []>} : vector<1x16x128xbf16>, vector<128x128xbf16>, vector<1x16x128xf32> -> vector<1x16x128xf32>
    %c0_50 = arith.constant 0 : index
    %c7_51 = arith.constant 7 : index
    %c0_52 = arith.constant 0 : index
    %41 = vector.load %arg12[%c0_50, %c7_51, %c0_52] : memref<1x24x128xf32, #tpu.memory_space<vmem>>, vector<1x16x128xf32>
    %c0_53 = arith.constant 0 : index
    %c1_54 = arith.constant 1 : index
    %c0_55 = arith.constant 0 : index
    %c0_56 = arith.constant 0 : index
    %42 = vector.load %arg4[%c0_53, %c1_54, %c0_55, %c0_56] : memref<3x3x128x128xbf16, #tpu.memory_space<vmem>>, vector<1x1x128x128xbf16>
    %43 = vector.shape_cast %42 : vector<1x1x128x128xbf16> to vector<128x128xbf16>
    %44 = arith.truncf %41 : vector<1x16x128xf32> to vector<1x16x128xbf16>
    %cst_57 = arith.constant dense<0.000000e+00> : vector<1x16x128xf32>
    %45 = tpu.matmul %44, %43, %cst_57 {dimension_numbers = #tpu.dot_dimension_numbers<[2], [0], [0, 1], [1], [0, 0, 0, 1, 1, 1], [], []>} : vector<1x16x128xbf16>, vector<128x128xbf16>, vector<1x16x128xf32> -> vector<1x16x128xf32>
    %46 = arith.addf %40, %45 : vector<1x16x128xf32>
    %c0_58 = arith.constant 0 : index
    %c8_59 = arith.constant 8 : index
    %c0_60 = arith.constant 0 : index
    %47 = vector.load %arg12[%c0_58, %c8_59, %c0_60] : memref<1x24x128xf32, #tpu.memory_space<vmem>>, vector<1x16x128xf32>
    %c0_61 = arith.constant 0 : index
    %c2_62 = arith.constant 2 : index
    %c0_63 = arith.constant 0 : index
    %c0_64 = arith.constant 0 : index
    %48 = vector.load %arg4[%c0_61, %c2_62, %c0_63, %c0_64] : memref<3x3x128x128xbf16, #tpu.memory_space<vmem>>, vector<1x1x128x128xbf16>
    %49 = vector.shape_cast %48 : vector<1x1x128x128xbf16> to vector<128x128xbf16>
    %50 = arith.truncf %47 : vector<1x16x128xf32> to vector<1x16x128xbf16>
    %cst_65 = arith.constant dense<0.000000e+00> : vector<1x16x128xf32>
    %51 = tpu.matmul %50, %49, %cst_65 {dimension_numbers = #tpu.dot_dimension_numbers<[2], [0], [0, 1], [1], [0, 0, 0, 1, 1, 1], [], []>} : vector<1x16x128xbf16>, vector<128x128xbf16>, vector<1x16x128xf32> -> vector<1x16x128xf32>
    %52 = arith.addf %46, %51 : vector<1x16x128xf32>
    %53 = vector.shape_cast %35 : vector<1x128xf32> to vector<1x1x128xf32>
    %54 = vector.broadcast %53 : vector<1x1x128xf32> to vector<1x16x128xf32>
    %55 = arith.addf %52, %54 : vector<1x16x128xf32>
    %cst_66 = arith.constant 0.000000e+00 : f32
    %56 = vector.broadcast %cst_66 : f32 to vector<1x16x128xf32>
    %57 = arith.cmpf ogt, %55, %56 : vector<1x16x128xf32>
    %cst_67 = arith.constant 0.00999999977 : f32
    %58 = vector.broadcast %cst_67 : f32 to vector<1x16x128xf32>
    %59 = arith.mulf %58, %55 : vector<1x16x128xf32>
    %60 = arith.select %57, %55, %59 : vector<1x16x128xi1>, vector<1x16x128xf32>
    %c0_68 = arith.constant 0 : index
    %c8_69 = arith.constant 8 : index
    %c0_70 = arith.constant 0 : index
    %61 = vector.load %arg11[%c0_68, %c8_69, %c0_70] : memref<1x24x128xf32, #tpu.memory_space<vmem>>, vector<1x16x128xf32>
    %c0_71 = arith.constant 0 : index
    %c0_72 = arith.constant 0 : index
    %c0_73 = arith.constant 0 : index
    %62 = vector.load %arg6[%c0_71, %c0_72, %c0_73] : memref<2x128x128xbf16, #tpu.memory_space<vmem>>, vector<1x128x128xbf16>
    %63 = vector.shape_cast %62 : vector<1x128x128xbf16> to vector<128x128xbf16>
    %64 = arith.truncf %61 : vector<1x16x128xf32> to vector<1x16x128xbf16>
    %cst_74 = arith.constant dense<0.000000e+00> : vector<1x16x128xf32>
    %65 = tpu.matmul %64, %63, %cst_74 {dimension_numbers = #tpu.dot_dimension_numbers<[2], [0], [0, 1], [1], [0, 0, 0, 1, 1, 1], [], []>} : vector<1x16x128xbf16>, vector<128x128xbf16>, vector<1x16x128xf32> -> vector<1x16x128xf32>
    %c0_75 = arith.constant 0 : index
    %c0_76 = arith.constant 0 : index
    %c0_77 = arith.constant 0 : index
    %66 = vector.load %arg7[%c0_75, %c0_76, %c0_77] : memref<2x1x128xf32, #tpu.memory_space<vmem>>, vector<1x1x128xf32>
    %67 = vector.shape_cast %66 : vector<1x1x128xf32> to vector<1x128xf32>
    %68 = vector.shape_cast %67 : vector<1x128xf32> to vector<1x1x128xf32>
    %69 = vector.broadcast %68 : vector<1x1x128xf32> to vector<1x16x128xf32>
    %70 = arith.addf %65, %69 : vector<1x16x128xf32>
    %71 = arith.addf %60, %70 : vector<1x16x128xf32>
    %c0_78 = arith.constant 0 : index
    %c8_79 = arith.constant 8 : index
    %c0_80 = arith.constant 0 : index
    %72 = vector.load %arg11[%c0_78, %c8_79, %c0_80] : memref<1x24x128xf32, #tpu.memory_space<vmem>>, vector<1x16x128xf32>
    tpu.vector_store %arg11[%c0_78, %c8_79, %c0_80], %71 {strides = array<i32>} : memref<1x24x128xf32, #tpu.memory_space<vmem>>, vector<1x16x128xf32>,
    %c1_81 = arith.constant 1 : index
    %c0_82 = arith.constant 0 : index
    %c0_83 = arith.constant 0 : index
    %73 = vector.load %arg3[%c1_81, %c0_82, %c0_83] : memref<3x1x128xf32, #tpu.memory_space<vmem>>, vector<1x1x128xf32>
    %74 = vector.shape_cast %73 : vector<1x1x128xf32> to vector<1x128xf32>
    %c0_84 = arith.constant 0 : index
    %c4 = arith.constant 4 : index
    %c0_85 = arith.constant 0 : index
    %75 = vector.load %arg11[%c0_84, %c4, %c0_85] : memref<1x24x128xf32, #tpu.memory_space<vmem>>, vector<1x16x128xf32>
    %c1_86 = arith.constant 1 : index
    %c0_87 = arith.constant 0 : index
    %c0_88 = arith.constant 0 : index
    %c0_89 = arith.constant 0 : index
    %76 = vector.load %arg2[%c1_86, %c0_87, %c0_88, %c0_89] : memref<3x3x128x128xbf16, #tpu.memory_space<vmem>>, vector<1x1x128x128xbf16>
    %77 = vector.shape_cast %76 : vector<1x1x128x128xbf16> to vector<128x128xbf16>
    %78 = arith.truncf %75 : vector<1x16x128xf32> to vector<1x16x128xbf16>
    %cst_90 = arith.constant dense<0.000000e+00> : vector<1x16x128xf32>
    %79 = tpu.matmul %78, %77, %cst_90 {dimension_numbers = #tpu.dot_dimension_numbers<[2], [0], [0, 1], [1], [0, 0, 0, 1, 1, 1], [], []>} : vector<1x16x128xbf16>, vector<128x128xbf16>, vector<1x16x128xf32> -> vector<1x16x128xf32>
    %c0_91 = arith.constant 0 : index
    %c6_92 = arith.constant 6 : index
    %c0_93 = arith.constant 0 : index
    %80 = vector.load %arg11[%c0_91, %c6_92, %c0_93] : memref<1x24x128xf32, #tpu.memory_space<vmem>>, vector<1x16x128xf32>
    %c1_94 = arith.constant 1 : index
    %c1_95 = arith.constant 1 : index
    %c0_96 = arith.constant 0 : index
    %c0_97 = arith.constant 0 : index
    %81 = vector.load %arg2[%c1_94, %c1_95, %c0_96, %c0_97] : memref<3x3x128x128xbf16, #tpu.memory_space<vmem>>, vector<1x1x128x128xbf16>
    %82 = vector.shape_cast %81 : vector<1x1x128x128xbf16> to vector<128x128xbf16>
    %83 = arith.truncf %80 : vector<1x16x128xf32> to vector<1x16x128xbf16>
    %cst_98 = arith.constant dense<0.000000e+00> : vector<1x16x128xf32>
    %84 = tpu.matmul %83, %82, %cst_98 {dimension_numbers = #tpu.dot_dimension_numbers<[2], [0], [0, 1], [1], [0, 0, 0, 1, 1, 1], [], []>} : vector<1x16x128xbf16>, vector<128x128xbf16>, vector<1x16x128xf32> -> vector<1x16x128xf32>
    %85 = arith.addf %79, %84 : vector<1x16x128xf32>
    %c0_99 = arith.constant 0 : index
    %c8_100 = arith.constant 8 : index
    %c0_101 = arith.constant 0 : index
    %86 = vector.load %arg11[%c0_99, %c8_100, %c0_101] : memref<1x24x128xf32, #tpu.memory_space<vmem>>, vector<1x16x128xf32>
    %c1_102 = arith.constant 1 : index
    %c2_103 = arith.constant 2 : index
    %c0_104 = arith.constant 0 : index
    %c0_105 = arith.constant 0 : index
    %87 = vector.load %arg2[%c1_102, %c2_103, %c0_104, %c0_105] : memref<3x3x128x128xbf16, #tpu.memory_space<vmem>>, vector<1x1x128x128xbf16>
    %88 = vector.shape_cast %87 : vector<1x1x128x128xbf16> to vector<128x128xbf16>
    %89 = arith.truncf %86 : vector<1x16x128xf32> to vector<1x16x128xbf16>
    %cst_106 = arith.constant dense<0.000000e+00> : vector<1x16x128xf32>
    %90 = tpu.matmul %89, %88, %cst_106 {dimension_numbers = #tpu.dot_dimension_numbers<[2], [0], [0, 1], [1], [0, 0, 0, 1, 1, 1], [], []>} : vector<1x16x128xbf16>, vector<128x128xbf16>, vector<1x16x128xf32> -> vector<1x16x128xf32>
    %91 = arith.addf %85, %90 : vector<1x16x128xf32>
    %92 = vector.shape_cast %74 : vector<1x128xf32> to vector<1x1x128xf32>
    %93 = vector.broadcast %92 : vector<1x1x128xf32> to vector<1x16x128xf32>
    %94 = arith.addf %91, %93 : vector<1x16x128xf32>
    %cst_107 = arith.constant 0.000000e+00 : f32
    %95 = vector.broadcast %cst_107 : f32 to vector<1x16x128xf32>
    %96 = arith.cmpf ogt, %94, %95 : vector<1x16x128xf32>
    %cst_108 = arith.constant 0.00999999977 : f32
    %97 = vector.broadcast %cst_108 : f32 to vector<1x16x128xf32>
    %98 = arith.mulf %97, %94 : vector<1x16x128xf32>
    %99 = arith.select %96, %94, %98 : vector<1x16x128xi1>, vector<1x16x128xf32>
    %c0_109 = arith.constant 0 : index
    %c8_110 = arith.constant 8 : index
    %c0_111 = arith.constant 0 : index
    %100 = vector.load %arg12[%c0_109, %c8_110, %c0_111] : memref<1x24x128xf32, #tpu.memory_space<vmem>>, vector<1x16x128xf32>
    tpu.vector_store %arg12[%c0_109, %c8_110, %c0_111], %99 {strides = array<i32>} : memref<1x24x128xf32, #tpu.memory_space<vmem>>, vector<1x16x128xf32>,
    %c1_112 = arith.constant 1 : index
    %c0_113 = arith.constant 0 : index
    %c0_114 = arith.constant 0 : index
    %101 = vector.load %arg5[%c1_112, %c0_113, %c0_114] : memref<3x1x128xf32, #tpu.memory_space<vmem>>, vector<1x1x128xf32>
    %102 = vector.shape_cast %101 : vector<1x1x128xf32> to vector<1x128xf32>
    %c0_115 = arith.constant 0 : index
    %c4_116 = arith.constant 4 : index
    %c0_117 = arith.constant 0 : index
    %103 = vector.load %arg12[%c0_115, %c4_116, %c0_117] : memref<1x24x128xf32, #tpu.memory_space<vmem>>, vector<1x16x128xf32>
    %c1_118 = arith.constant 1 : index
    %c0_119 = arith.constant 0 : index
    %c0_120 = arith.constant 0 : index
    %c0_121 = arith.constant 0 : index
    %104 = vector.load %arg4[%c1_118, %c0_119, %c0_120, %c0_121] : memref<3x3x128x128xbf16, #tpu.memory_space<vmem>>, vector<1x1x128x128xbf16>
    %105 = vector.shape_cast %104 : vector<1x1x128x128xbf16> to vector<128x128xbf16>
    %106 = arith.truncf %103 : vector<1x16x128xf32> to vector<1x16x128xbf16>
    %cst_122 = arith.constant dense<0.000000e+00> : vector<1x16x128xf32>
    %107 = tpu.matmul %106, %105, %cst_122 {dimension_numbers = #tpu.dot_dimension_numbers<[2], [0], [0, 1], [1], [0, 0, 0, 1, 1, 1], [], []>} : vector<1x16x128xbf16>, vector<128x128xbf16>, vector<1x16x128xf32> -> vector<1x16x128xf32>
    %c0_123 = arith.constant 0 : index
    %c6_124 = arith.constant 6 : index
    %c0_125 = arith.constant 0 : index
    %108 = vector.load %arg12[%c0_123, %c6_124, %c0_125] : memref<1x24x128xf32, #tpu.memory_space<vmem>>, vector<1x16x128xf32>
    %c1_126 = arith.constant 1 : index
    %c1_127 = arith.constant 1 : index
    %c0_128 = arith.constant 0 : index
    %c0_129 = arith.constant 0 : index
    %109 = vector.load %arg4[%c1_126, %c1_127, %c0_128, %c0_129] : memref<3x3x128x128xbf16, #tpu.memory_space<vmem>>, vector<1x1x128x128xbf16>
    %110 = vector.shape_cast %109 : vector<1x1x128x128xbf16> to vector<128x128xbf16>
    %111 = arith.truncf %108 : vector<1x16x128xf32> to vector<1x16x128xbf16>
    %cst_130 = arith.constant dense<0.000000e+00> : vector<1x16x128xf32>
    %112 = tpu.matmul %111, %110, %cst_130 {dimension_numbers = #tpu.dot_dimension_numbers<[2], [0], [0, 1], [1], [0, 0, 0, 1, 1, 1], [], []>} : vector<1x16x128xbf16>, vector<128x128xbf16>, vector<1x16x128xf32> -> vector<1x16x128xf32>
    %113 = arith.addf %107, %112 : vector<1x16x128xf32>
    %c0_131 = arith.constant 0 : index
    %c8_132 = arith.constant 8 : index
    %c0_133 = arith.constant 0 : index
    %114 = vector.load %arg12[%c0_131, %c8_132, %c0_133] : memref<1x24x128xf32, #tpu.memory_space<vmem>>, vector<1x16x128xf32>
    %c1_134 = arith.constant 1 : index
    %c2_135 = arith.constant 2 : index
    %c0_136 = arith.constant 0 : index
    %c0_137 = arith.constant 0 : index
    %115 = vector.load %arg4[%c1_134, %c2_135, %c0_136, %c0_137] : memref<3x3x128x128xbf16, #tpu.memory_space<vmem>>, vector<1x1x128x128xbf16>
    %116 = vector.shape_cast %115 : vector<1x1x128x128xbf16> to vector<128x128xbf16>
    %117 = arith.truncf %114 : vector<1x16x128xf32> to vector<1x16x128xbf16>
    %cst_138 = arith.constant dense<0.000000e+00> : vector<1x16x128xf32>
    %118 = tpu.matmul %117, %116, %cst_138 {dimension_numbers = #tpu.dot_dimension_numbers<[2], [0], [0, 1], [1], [0, 0, 0, 1, 1, 1], [], []>} : vector<1x16x128xbf16>, vector<128x128xbf16>, vector<1x16x128xf32> -> vector<1x16x128xf32>
    %119 = arith.addf %113, %118 : vector<1x16x128xf32>
    %120 = vector.shape_cast %102 : vector<1x128xf32> to vector<1x1x128xf32>
    %121 = vector.broadcast %120 : vector<1x1x128xf32> to vector<1x16x128xf32>
    %122 = arith.addf %119, %121 : vector<1x16x128xf32>
    %cst_139 = arith.constant 0.000000e+00 : f32
    %123 = vector.broadcast %cst_139 : f32 to vector<1x16x128xf32>
    %124 = arith.cmpf ogt, %122, %123 : vector<1x16x128xf32>
    %cst_140 = arith.constant 0.00999999977 : f32
    %125 = vector.broadcast %cst_140 : f32 to vector<1x16x128xf32>
    %126 = arith.mulf %125, %122 : vector<1x16x128xf32>
    %127 = arith.select %124, %122, %126 : vector<1x16x128xi1>, vector<1x16x128xf32>
    %c0_141 = arith.constant 0 : index
    %c8_142 = arith.constant 8 : index
    %c0_143 = arith.constant 0 : index
    %128 = vector.load %arg11[%c0_141, %c8_142, %c0_143] : memref<1x24x128xf32, #tpu.memory_space<vmem>>, vector<1x16x128xf32>
    %129 = arith.addf %127, %128 : vector<1x16x128xf32>
    %c0_144 = arith.constant 0 : index
    %c8_145 = arith.constant 8 : index
    %c0_146 = arith.constant 0 : index
    %130 = vector.load %arg11[%c0_144, %c8_145, %c0_146] : memref<1x24x128xf32, #tpu.memory_space<vmem>>, vector<1x16x128xf32>
    tpu.vector_store %arg11[%c0_144, %c8_145, %c0_146], %129 {strides = array<i32>} : memref<1x24x128xf32, #tpu.memory_space<vmem>>, vector<1x16x128xf32>,
    %c2_147 = arith.constant 2 : index
    %c0_148 = arith.constant 0 : index
    %c0_149 = arith.constant 0 : index
    %131 = vector.load %arg3[%c2_147, %c0_148, %c0_149] : memref<3x1x128xf32, #tpu.memory_space<vmem>>, vector<1x1x128xf32>
    %132 = vector.shape_cast %131 : vector<1x1x128xf32> to vector<1x128xf32>
    %c0_150 = arith.constant 0 : index
    %c0_151 = arith.constant 0 : index
    %c0_152 = arith.constant 0 : index
    %133 = vector.load %arg11[%c0_150, %c0_151, %c0_152] : memref<1x24x128xf32, #tpu.memory_space<vmem>>, vector<1x16x128xf32>
    %c2_153 = arith.constant 2 : index
    %c0_154 = arith.constant 0 : index
    %c0_155 = arith.constant 0 : index
    %c0_156 = arith.constant 0 : index
    %134 = vector.load %arg2[%c2_153, %c0_154, %c0_155, %c0_156] : memref<3x3x128x128xbf16, #tpu.memory_space<vmem>>, vector<1x1x128x128xbf16>
    %135 = vector.shape_cast %134 : vector<1x1x128x128xbf16> to vector<128x128xbf16>
    %136 = arith.truncf %133 : vector<1x16x128xf32> to vector<1x16x128xbf16>
    %cst_157 = arith.constant dense<0.000000e+00> : vector<1x16x128xf32>
    %137 = tpu.matmul %136, %135, %cst_157 {dimension_numbers = #tpu.dot_dimension_numbers<[2], [0], [0, 1], [1], [0, 0, 0, 1, 1, 1], [], []>} : vector<1x16x128xbf16>, vector<128x128xbf16>, vector<1x16x128xf32> -> vector<1x16x128xf32>
    %c0_158 = arith.constant 0 : index
    %c4_159 = arith.constant 4 : index
    %c0_160 = arith.constant 0 : index
    %138 = vector.load %arg11[%c0_158, %c4_159, %c0_160] : memref<1x24x128xf32, #tpu.memory_space<vmem>>, vector<1x16x128xf32>
    %c2_161 = arith.constant 2 : index
    %c1_162 = arith.constant 1 : index
    %c0_163 = arith.constant 0 : index
    %c0_164 = arith.constant 0 : index
    %139 = vector.load %arg2[%c2_161, %c1_162, %c0_163, %c0_164] : memref<3x3x128x128xbf16, #tpu.memory_space<vmem>>, vector<1x1x128x128xbf16>
    %140 = vector.shape_cast %139 : vector<1x1x128x128xbf16> to vector<128x128xbf16>
    %141 = arith.truncf %138 : vector<1x16x128xf32> to vector<1x16x128xbf16>
    %cst_165 = arith.constant dense<0.000000e+00> : vector<1x16x128xf32>
    %142 = tpu.matmul %141, %140, %cst_165 {dimension_numbers = #tpu.dot_dimension_numbers<[2], [0], [0, 1], [1], [0, 0, 0, 1, 1, 1], [], []>} : vector<1x16x128xbf16>, vector<128x128xbf16>, vector<1x16x128xf32> -> vector<1x16x128xf32>
    %143 = arith.addf %137, %142 : vector<1x16x128xf32>
    %c0_166 = arith.constant 0 : index
    %c8_167 = arith.constant 8 : index
    %c0_168 = arith.constant 0 : index
    %144 = vector.load %arg11[%c0_166, %c8_167, %c0_168] : memref<1x24x128xf32, #tpu.memory_space<vmem>>, vector<1x16x128xf32>
    %c2_169 = arith.constant 2 : index
    %c2_170 = arith.constant 2 : index
    %c0_171 = arith.constant 0 : index
    %c0_172 = arith.constant 0 : index
    %145 = vector.load %arg2[%c2_169, %c2_170, %c0_171, %c0_172] : memref<3x3x128x128xbf16, #tpu.memory_space<vmem>>, vector<1x1x128x128xbf16>
    %146 = vector.shape_cast %145 : vector<1x1x128x128xbf16> to vector<128x128xbf16>
    %147 = arith.truncf %144 : vector<1x16x128xf32> to vector<1x16x128xbf16>
    %cst_173 = arith.constant dense<0.000000e+00> : vector<1x16x128xf32>
    %148 = tpu.matmul %147, %146, %cst_173 {dimension_numbers = #tpu.dot_dimension_numbers<[2], [0], [0, 1], [1], [0, 0, 0, 1, 1, 1], [], []>} : vector<1x16x128xbf16>, vector<128x128xbf16>, vector<1x16x128xf32> -> vector<1x16x128xf32>
    %149 = arith.addf %143, %148 : vector<1x16x128xf32>
    %150 = vector.shape_cast %132 : vector<1x128xf32> to vector<1x1x128xf32>
    %151 = vector.broadcast %150 : vector<1x1x128xf32> to vector<1x16x128xf32>
    %152 = arith.addf %149, %151 : vector<1x16x128xf32>
    %cst_174 = arith.constant 0.000000e+00 : f32
    %153 = vector.broadcast %cst_174 : f32 to vector<1x16x128xf32>
    %154 = arith.cmpf ogt, %152, %153 : vector<1x16x128xf32>
    %cst_175 = arith.constant 0.00999999977 : f32
    %155 = vector.broadcast %cst_175 : f32 to vector<1x16x128xf32>
    %156 = arith.mulf %155, %152 : vector<1x16x128xf32>
    %157 = arith.select %154, %152, %156 : vector<1x16x128xi1>, vector<1x16x128xf32>
    %c0_176 = arith.constant 0 : index
    %c8_177 = arith.constant 8 : index
    %c0_178 = arith.constant 0 : index
    %158 = vector.load %arg12[%c0_176, %c8_177, %c0_178] : memref<1x24x128xf32, #tpu.memory_space<vmem>>, vector<1x16x128xf32>
    tpu.vector_store %arg12[%c0_176, %c8_177, %c0_178], %157 {strides = array<i32>} : memref<1x24x128xf32, #tpu.memory_space<vmem>>, vector<1x16x128xf32>,
    %c2_179 = arith.constant 2 : index
    %c0_180 = arith.constant 0 : index
    %c0_181 = arith.constant 0 : index
    %159 = vector.load %arg5[%c2_179, %c0_180, %c0_181] : memref<3x1x128xf32, #tpu.memory_space<vmem>>, vector<1x1x128xf32>
    %160 = vector.shape_cast %159 : vector<1x1x128xf32> to vector<1x128xf32>
    %c0_182 = arith.constant 0 : index
    %c0_183 = arith.constant 0 : index
    %c0_184 = arith.constant 0 : index
    %161 = vector.load %arg12[%c0_182, %c0_183, %c0_184] : memref<1x24x128xf32, #tpu.memory_space<vmem>>, vector<1x16x128xf32>
    %c2_185 = arith.constant 2 : index
    %c0_186 = arith.constant 0 : index
    %c0_187 = arith.constant 0 : index
    %c0_188 = arith.constant 0 : index
    %162 = vector.load %arg4[%c2_185, %c0_186, %c0_187, %c0_188] : memref<3x3x128x128xbf16, #tpu.memory_space<vmem>>, vector<1x1x128x128xbf16>
    %163 = vector.shape_cast %162 : vector<1x1x128x128xbf16> to vector<128x128xbf16>
    %164 = arith.truncf %161 : vector<1x16x128xf32> to vector<1x16x128xbf16>
    %cst_189 = arith.constant dense<0.000000e+00> : vector<1x16x128xf32>
    %165 = tpu.matmul %164, %163, %cst_189 {dimension_numbers = #tpu.dot_dimension_numbers<[2], [0], [0, 1], [1], [0, 0, 0, 1, 1, 1], [], []>} : vector<1x16x128xbf16>, vector<128x128xbf16>, vector<1x16x128xf32> -> vector<1x16x128xf32>
    %c0_190 = arith.constant 0 : index
    %c4_191 = arith.constant 4 : index
    %c0_192 = arith.constant 0 : index
    %166 = vector.load %arg12[%c0_190, %c4_191, %c0_192] : memref<1x24x128xf32, #tpu.memory_space<vmem>>, vector<1x16x128xf32>
    %c2_193 = arith.constant 2 : index
    %c1_194 = arith.constant 1 : index
    %c0_195 = arith.constant 0 : index
    %c0_196 = arith.constant 0 : index
    %167 = vector.load %arg4[%c2_193, %c1_194, %c0_195, %c0_196] : memref<3x3x128x128xbf16, #tpu.memory_space<vmem>>, vector<1x1x128x128xbf16>
    %168 = vector.shape_cast %167 : vector<1x1x128x128xbf16> to vector<128x128xbf16>
    %169 = arith.truncf %166 : vector<1x16x128xf32> to vector<1x16x128xbf16>
    %cst_197 = arith.constant dense<0.000000e+00> : vector<1x16x128xf32>
    %170 = tpu.matmul %169, %168, %cst_197 {dimension_numbers = #tpu.dot_dimension_numbers<[2], [0], [0, 1], [1], [0, 0, 0, 1, 1, 1], [], []>} : vector<1x16x128xbf16>, vector<128x128xbf16>, vector<1x16x128xf32> -> vector<1x16x128xf32>
    %171 = arith.addf %165, %170 : vector<1x16x128xf32>
    %c0_198 = arith.constant 0 : index
    %c8_199 = arith.constant 8 : index
    %c0_200 = arith.constant 0 : index
    %172 = vector.load %arg12[%c0_198, %c8_199, %c0_200] : memref<1x24x128xf32, #tpu.memory_space<vmem>>, vector<1x16x128xf32>
    %c2_201 = arith.constant 2 : index
    %c2_202 = arith.constant 2 : index
    %c0_203 = arith.constant 0 : index
    %c0_204 = arith.constant 0 : index
    %173 = vector.load %arg4[%c2_201, %c2_202, %c0_203, %c0_204] : memref<3x3x128x128xbf16, #tpu.memory_space<vmem>>, vector<1x1x128x128xbf16>
    %174 = vector.shape_cast %173 : vector<1x1x128x128xbf16> to vector<128x128xbf16>
    %175 = arith.truncf %172 : vector<1x16x128xf32> to vector<1x16x128xbf16>
    %cst_205 = arith.constant dense<0.000000e+00> : vector<1x16x128xf32>
    %176 = tpu.matmul %175, %174, %cst_205 {dimension_numbers = #tpu.dot_dimension_numbers<[2], [0], [0, 1], [1], [0, 0, 0, 1, 1, 1], [], []>} : vector<1x16x128xbf16>, vector<128x128xbf16>, vector<1x16x128xf32> -> vector<1x16x128xf32>
    %177 = arith.addf %171, %176 : vector<1x16x128xf32>
    %178 = vector.shape_cast %160 : vector<1x128xf32> to vector<1x1x128xf32>
    %179 = vector.broadcast %178 : vector<1x1x128xf32> to vector<1x16x128xf32>
    %180 = arith.addf %177, %179 : vector<1x16x128xf32>
    %cst_206 = arith.constant 0.000000e+00 : f32
    %181 = vector.broadcast %cst_206 : f32 to vector<1x16x128xf32>
    %182 = arith.cmpf ogt, %180, %181 : vector<1x16x128xf32>
    %cst_207 = arith.constant 0.00999999977 : f32
    %183 = vector.broadcast %cst_207 : f32 to vector<1x16x128xf32>
    %184 = arith.mulf %183, %180 : vector<1x16x128xf32>
    %185 = arith.select %182, %180, %184 : vector<1x16x128xi1>, vector<1x16x128xf32>
    %c0_208 = arith.constant 0 : index
    %c8_209 = arith.constant 8 : index
    %c0_210 = arith.constant 0 : index
    %186 = vector.load %arg11[%c0_208, %c8_209, %c0_210] : memref<1x24x128xf32, #tpu.memory_space<vmem>>, vector<1x16x128xf32>
    %c1_211 = arith.constant 1 : index
    %c0_212 = arith.constant 0 : index
    %c0_213 = arith.constant 0 : index
    %187 = vector.load %arg6[%c1_211, %c0_212, %c0_213] : memref<2x128x128xbf16, #tpu.memory_space<vmem>>, vector<1x128x128xbf16>
    %188 = vector.shape_cast %187 : vector<1x128x128xbf16> to vector<128x128xbf16>
    %189 = arith.truncf %186 : vector<1x16x128xf32> to vector<1x16x128xbf16>
    %cst_214 = arith.constant dense<0.000000e+00> : vector<1x16x128xf32>
    %190 = tpu.matmul %189, %188, %cst_214 {dimension_numbers = #tpu.dot_dimension_numbers<[2], [0], [0, 1], [1], [0, 0, 0, 1, 1, 1], [], []>} : vector<1x16x128xbf16>, vector<128x128xbf16>, vector<1x16x128xf32> -> vector<1x16x128xf32>
    %c1_215 = arith.constant 1 : index
    %c0_216 = arith.constant 0 : index
    %c0_217 = arith.constant 0 : index
    %191 = vector.load %arg7[%c1_215, %c0_216, %c0_217] : memref<2x1x128xf32, #tpu.memory_space<vmem>>, vector<1x1x128xf32>
    %192 = vector.shape_cast %191 : vector<1x1x128xf32> to vector<1x128xf32>
    %193 = vector.shape_cast %192 : vector<1x128xf32> to vector<1x1x128xf32>
    %194 = vector.broadcast %193 : vector<1x1x128xf32> to vector<1x16x128xf32>
    %195 = arith.addf %190, %194 : vector<1x16x128xf32>
    %196 = arith.addf %185, %195 : vector<1x16x128xf32>
    %c0_218 = arith.constant 0 : index
    %c8_219 = arith.constant 8 : index
    %c0_220 = arith.constant 0 : index
    %197 = vector.load %arg11[%c0_218, %c8_219, %c0_220] : memref<1x24x128xf32, #tpu.memory_space<vmem>>, vector<1x16x128xf32>
    tpu.vector_store %arg11[%c0_218, %c8_219, %c0_220], %196 {strides = array<i32>} : memref<1x24x128xf32, #tpu.memory_space<vmem>>, vector<1x16x128xf32>,
    %c0_221 = arith.constant 0 : index
    %c8_222 = arith.constant 8 : index
    %c0_223 = arith.constant 0 : index
    %198 = vector.load %arg11[%c0_221, %c8_222, %c0_223] : memref<1x24x128xf32, #tpu.memory_space<vmem>>, vector<1x16x128xf32>
    %cst_224 = arith.constant dense<0xFF800000> : vector<1x128xf32>
    %199 = vector.multi_reduction <maximumf>, %198, %cst_224 [1] : vector<1x16x128xf32> to vector<1x128xf32>
    %200 = vector.shape_cast %199 : vector<1x128xf32> to vector<1x1x128xf32>
    %c0_225 = arith.constant 0 : index
    %c0_226 = arith.constant 0 : index
    %201 = vector.load %arg8[%c0_225, %c0_226] : memref<128x128xbf16, #tpu.memory_space<vmem>>, vector<128x128xbf16>
    %202 = arith.truncf %200 : vector<1x1x128xf32> to vector<1x1x128xbf16>
    %cst_227 = arith.constant dense<0.000000e+00> : vector<1x1x128xf32>
    %203 = tpu.matmul %202, %201, %cst_227 {dimension_numbers = #tpu.dot_dimension_numbers<[2], [0], [0, 1], [1], [0, 0, 0, 1, 1, 1], [], []>} : vector<1x1x128xbf16>, vector<128x128xbf16>, vector<1x1x128xf32> -> vector<1x1x128xf32>
    %c0_228 = arith.constant 0 : index
    %c0_229 = arith.constant 0 : index
    %204 = vector.load %arg9[%c0_228, %c0_229] : memref<1x128xf32, #tpu.memory_space<vmem>>, vector<1x128xf32>
    %205 = vector.shape_cast %204 : vector<1x128xf32> to vector<1x1x128xf32>
    %206 = arith.addf %203, %205 : vector<1x1x128xf32>
    %c0_230 = arith.constant 0 : index
    %c0_231 = arith.constant 0 : index
    %c0_232 = arith.constant 0 : index
    %207 = vector.load %arg10[%c0_230, %c0_231, %c0_232] : memref<1x1x128xf32, #tpu.memory_space<vmem>>, vector<1x1x128xf32>
    tpu.vector_store %arg10[%c0_230, %c0_231, %c0_232], %206 {strides = array<i32>} : memref<1x1x128xf32, #tpu.memory_space<vmem>>, vector<1x1x128xf32>,
    return
  }
  func.func @transform_0(%arg0: i32) -> (i32, i32, i32) {
    %c0_i32 = arith.constant 0 : i32
    %c0_i32_0 = arith.constant 0 : i32
    %c0_i32_1 = arith.constant 0 : i32
    return %arg0, %c0_i32, %c0_i32_0 : i32, i32, i32
  }
  func.func @transform_1(%arg0: i32) -> (i32, i32, i32, i32) {
    %c0_i32 = arith.constant 0 : i32
    %c0_i32_0 = arith.constant 0 : i32
    %c0_i32_1 = arith.constant 0 : i32
    %c0_i32_2 = arith.constant 0 : i32
    %c0_i32_3 = arith.constant 0 : i32
    return %c0_i32, %c0_i32_0, %c0_i32_1, %c0_i32_2 : i32, i32, i32, i32
  }
  func.func @transform_2(%arg0: i32) -> (i32, i32, i32) {
    %c0_i32 = arith.constant 0 : i32
    %c0_i32_0 = arith.constant 0 : i32
    %c0_i32_1 = arith.constant 0 : i32
    %c0_i32_2 = arith.constant 0 : i32
    return %c0_i32, %c0_i32_0, %c0_i32_1 : i32, i32, i32
  }
  func.func @transform_3(%arg0: i32) -> (i32, i32, i32, i32) {
    %c0_i32 = arith.constant 0 : i32
    %c0_i32_0 = arith.constant 0 : i32
    %c0_i32_1 = arith.constant 0 : i32
    %c0_i32_2 = arith.constant 0 : i32
    %c0_i32_3 = arith.constant 0 : i32
    return %c0_i32, %c0_i32_0, %c0_i32_1, %c0_i32_2 : i32, i32, i32, i32
  }
  func.func @transform_4(%arg0: i32) -> (i32, i32, i32) {
    %c0_i32 = arith.constant 0 : i32
    %c0_i32_0 = arith.constant 0 : i32
    %c0_i32_1 = arith.constant 0 : i32
    %c0_i32_2 = arith.constant 0 : i32
    return %c0_i32, %c0_i32_0, %c0_i32_1 : i32, i32, i32
  }
  func.func @transform_5(%arg0: i32) -> (i32, i32, i32) {
    %c0_i32 = arith.constant 0 : i32
    %c0_i32_0 = arith.constant 0 : i32
    %c0_i32_1 = arith.constant 0 : i32
    %c0_i32_2 = arith.constant 0 : i32
    return %c0_i32, %c0_i32_0, %c0_i32_1 : i32, i32, i32
  }
  func.func @transform_6(%arg0: i32) -> (i32, i32, i32) {
    %c0_i32 = arith.constant 0 : i32
    %c0_i32_0 = arith.constant 0 : i32
    %c0_i32_1 = arith.constant 0 : i32
    %c0_i32_2 = arith.constant 0 : i32
    return %c0_i32, %c0_i32_0, %c0_i32_1 : i32, i32, i32
  }
  func.func @transform_7(%arg0: i32) -> (i32, i32) {
    %c0_i32 = arith.constant 0 : i32
    %c0_i32_0 = arith.constant 0 : i32
    %c0_i32_1 = arith.constant 0 : i32
    return %c0_i32, %c0_i32_0 : i32, i32
  }
  func.func @transform_8(%arg0: i32) -> (i32, i32) {
    %c0_i32 = arith.constant 0 : i32
    %c0_i32_0 = arith.constant 0 : i32
    %c0_i32_1 = arith.constant 0 : i32
    return %c0_i32, %c0_i32_0 : i32, i32
  }
  func.func @transform_9(%arg0: i32) -> (i32, i32, i32) {
    %c0_i32 = arith.constant 0 : i32
    %c0_i32_0 = arith.constant 0 : i32
    %c0_i32_1 = arith.constant 0 : i32
    return %arg0, %c0_i32, %c0_i32_0 : i32, i32, i32
  }
}

</mosaic_0001>

<llo_original>
// kernel: tpu_custom_call.1
$region0: #{tpu_custom_call.1}
  #allocation0 [shape = 'u32[]', space=smem, size = 0x4, offset = 0x4, fixed_abs, tag = 'smem constant byte address 0x4 - core index']
  #allocation1 [shape = 'u32[144,128]{1,0:T(1,128)}', space=vmem, size = 0x12000, scoped, tag = 'internal scratch']
  #allocation2 [shape = 'f32[1,24,128]{2,1,0:T(8,128)}', space=vmem, size = 0x3000, scoped, tag = 'scratch operand']
  #allocation3 [shape = 'f32[1,24,128]{2,1,0:T(8,128)}', space=vmem, size = 0x3000, scoped, tag = 'scratch operand']
  %s0 = inlined_call_operand.vmem [shape: f32[2,16,4], index: 0, kind: input, shape index: {}]
  %s1 = inlined_call_operand.hbm [shape: bf16[3,3,128,128], index: 1, kind: input, shape index: {}]
  %s2 = inlined_call_operand.hbm [shape: f32[3,1,128], index: 2, kind: input, shape index: {}]
  %s3 = inlined_call_operand.hbm [shape: bf16[3,3,128,128], index: 3, kind: input, shape index: {}]
  %s4 = inlined_call_operand.hbm [shape: f32[3,1,128], index: 4, kind: input, shape index: {}]
  %s5 = inlined_call_operand.hbm [shape: bf16[2,128,128], index: 5, kind: input, shape index: {}]
  %s6 = inlined_call_operand.vmem [shape: f32[2,1,128], index: 6, kind: input, shape index: {}]
  %s7 = inlined_call_operand.vmem [shape: bf16[128,128], index: 7, kind: input, shape index: {}]
  %s8 = inlined_call_operand.vmem [shape: f32[1,128], index: 8, kind: input, shape index: {}]
  %s9 = inlined_call_operand.hbm [shape: f32[2,1,128], index: 9, kind: output, shape index: {}]
  %s10 = sld [smem:[#allocation0]]
  $region89: #{tpu_custom_call.1} parent=0
    _
  %s12 = ssub.s32 1, %s10
  %s13 = scalar_select 0, %s12, %s10
  $region1: #{tpu_custom_call.1} parent=0
    #allocation4 [shape = 'u8[294912]{0}', space=vmem, size = 0x48000, scoped, tag = 'input window, operand 1, single buffered']
    #allocation5 [shape = 's32[2]{0}', space=sflag, size = 0x8, scoped, tag = 'scoped memory for tpu_custom_call.1']
    #allocation6 [shape = 's32[2]{0}', space=sflag, size = 0x8, scoped, tag = 'scoped memory for tpu_custom_call.1']
    #allocation7 [shape = 'u8[1536]{0}', space=vmem, size = 0x800, scoped, tag = 'input window, operand 2, single buffered']
    #allocation8 [shape = 's32[1]{0}', space=sflag, size = 0x4, scoped, tag = 'scoped memory for tpu_custom_call.1']
    #allocation9 [shape = 'u8[294912]{0}', space=vmem, size = 0x48000, scoped, tag = 'input window, operand 3, single buffered']
    #allocation10 [shape = 'u8[1536]{0}', space=vmem, size = 0x800, scoped, tag = 'input window, operand 4, single buffered']
    #allocation11 [shape = 's32[1]{0}', space=sflag, size = 0x4, scoped, tag = 'scoped memory for tpu_custom_call.1']
    #allocation12 [shape = 'u8[65536]{0}', space=vmem, size = 0x10000, scoped, tag = 'input window, operand 5, single buffered']
    #allocation13 [shape = 'u8[1024]{0}', space=vmem, size = 0x400, scoped, tag = 'output window, operand 0']
    %14 = vsyncpa [#allocation5], 0
    %15 = vsyncpa [#allocation8], 0
    %16 = vsyncpa [#allocation11], 0
    %17 = vsyncpa [#allocation6], 0
    %s18 = scalar_lea.sflag [#allocation6], 1
    %19 = vsyncpa %s18, 0
    loop: start=0, step=1, limit=4
    $region2: #{tpu_custom_call.1} parent=1 // loop_pre_header
      _
    $region3: #{tpu_custom_call.1} parent=1 // loop_header
      %s21 = sphi 0, %s25
      %p22 = scmp.ge.s32.totalorder %s21, 4
      %s31 = sphi 0, %s33
      %s34 = sphi 0, %s31
      %s35 = sphi 0, %s34
      %s51 = sphi 0, %s35
      %s55 = sphi 0, %s55
      %s57 = sphi 0, %s55
      %s58 = sphi 0, %s57
      %s72 = sphi 0, %s58
      %s76 = sphi 0, %s76
      %s78 = sphi 0, %s76
      %s79 = sphi 0, %s78
      %s93 = sphi 0, %s79
      %s97 = sphi 0, %s97
      %s99 = sphi 0, %s97
      %s100 = sphi 0, %s99
      %s114 = sphi 0, %s100
      %s118 = sphi 0, %s118
      %s120 = sphi 0, %s118
      %s121 = sphi 0, %s120
      %s135 = sphi 0, %s121
      %s139 = sphi 0, %s139
      %s141 = sphi 0, %s139
      %s142 = sphi 0, %s141
      %s156 = sphi 0, %s142
      %s160 = sphi 0, %s160
      %s162 = sphi 0, %s160
      %s163 = sphi 0, %s162
      %s177 = sphi 0, %s163
      %s181 = sphi 0, %s181
      %s183 = sphi 0, %s181
      %s184 = sphi 0, %s183
      %s198 = sphi 0, %s184
      %s202 = sphi 0, %s202
      %s204 = sphi 0, %s202
      %s205 = sphi 0, %s204
      %s219 = sphi 0, %s205
      %s225 = sphi 0, %s227
      %s228 = sphi 0, %s225
      %s229 = sphi 0, %s228
      %s245 = sphi 0, %s229
    $region4: #{tpu_custom_call.1} parent=1 // loop_header_branch
      %24 = sbr.rel (%p22) target = $region8
    $region5: #{tpu_custom_call.1} parent=1 // loop_body
      %s26 = ssub.s32 %s21, 1
      %s27 = ssub.s32 %s21, 2
      %s28 = sadd.s32 %s21, 1
      %s29 = ssub.s32 %s21, %s28
      %p30 = scmp.eq.s32.totalorder %s29, 0
      %s32 = sadd.s32 %s31, 1
      %s33 = scalar_select %p30, %s31, %s32
      %p36 = pneg %p30
      %p37 = scmp.eq.s32.totalorder %s21, 1
      %p38 = por %p36, %p37
      %p39 = scmp.ne.s32.totalorder %s31, %s34
      %p40 = scmp.eq.s32.totalorder %s21, 0
      %p41 = por %p39, %p40
      %p42 = scmp.ne.s32.totalorder %s31, %s34
      %p43 = scmp.eq.s32.totalorder %s26, 1
      %p44 = por %p42, %p43
      %p45 = scmp.ne.s32.totalorder %s34, %s35
      %p46 = scmp.eq.s32.totalorder %s26, 0
      %p47 = por %p45, %p46
      %p48 = scmp.ne.s32.totalorder %s34, %s35
      %p49 = scmp.eq.s32.totalorder %s27, 1
      %p50 = por %p48, %p49
      %p52 = scmp.ne.s32.totalorder %s35, %s51
      %p53 = scmp.eq.s32.totalorder %s27, 0
      %p54 = por %p52, %p53
      %s56 = sadd.s32 %s55, 1
      %p59 = scmp.eq.s32.totalorder %s21, 1
      %p60 = scmp.ne.s32.totalorder %s55, %s57
      %p61 = scmp.eq.s32.totalorder %s21, 0
      %p62 = por %p60, %p61
      %p63 = scmp.ne.s32.totalorder %s55, %s57
      %p64 = scmp.eq.s32.totalorder %s26, 1
      %p65 = por %p63, %p64
      %p66 = scmp.ne.s32.totalorder %s57, %s58
      %p67 = scmp.eq.s32.totalorder %s26, 0
      %p68 = por %p66, %p67
      %p69 = scmp.ne.s32.totalorder %s57, %s58
      %p70 = scmp.eq.s32.totalorder %s27, 1
      %p71 = por %p69, %p70
      %p73 = scmp.ne.s32.totalorder %s58, %s72
      %p74 = scmp.eq.s32.totalorder %s27, 0
      %p75 = por %p73, %p74
      %s77 = sadd.s32 %s76, 1
      %p80 = scmp.eq.s32.totalorder %s21, 1
      %p81 = scmp.ne.s32.totalorder %s76, %s78
      %p82 = scmp.eq.s32.totalorder %s21, 0
      %p83 = por %p81, %p82
      %p84 = scmp.ne.s32.totalorder %s76, %s78
      %p85 = scmp.eq.s32.totalorder %s26, 1
      %p86 = por %p84, %p85
      %p87 = scmp.ne.s32.totalorder %s78, %s79
      %p88 = scmp.eq.s32.totalorder %s26, 0
      %p89 = por %p87, %p88
      %p90 = scmp.ne.s32.totalorder %s78, %s79
      %p91 = scmp.eq.s32.totalorder %s27, 1
      %p92 = por %p90, %p91
      %p94 = scmp.ne.s32.totalorder %s79, %s93
      %p95 = scmp.eq.s32.totalorder %s27, 0
      %p96 = por %p94, %p95
      %s98 = sadd.s32 %s97, 1
      %p101 = scmp.eq.s32.totalorder %s21, 1
      %p102 = scmp.ne.s32.totalorder %s97, %s99
      %p103 = scmp.eq.s32.totalorder %s21, 0
      %p104 = por %p102, %p103
      %p105 = scmp.ne.s32.totalorder %s97, %s99
      %p106 = scmp.eq.s32.totalorder %s26, 1
      %p107 = por %p105, %p106
      %p108 = scmp.ne.s32.totalorder %s99, %s100
      %p109 = scmp.eq.s32.totalorder %s26, 0
      %p110 = por %p108, %p109
      %p111 = scmp.ne.s32.totalorder %s99, %s100
      %p112 = scmp.eq.s32.totalorder %s27, 1
      %p113 = por %p111, %p112
      %p115 = scmp.ne.s32.totalorder %s100, %s114
      %p116 = scmp.eq.s32.totalorder %s27, 0
      %p117 = por %p115, %p116
      %s119 = sadd.s32 %s118, 1
      %p122 = scmp.eq.s32.totalorder %s21, 1
      %p123 = scmp.ne.s32.totalorder %s118, %s120
      %p124 = scmp.eq.s32.totalorder %s21, 0
      %p125 = por %p123, %p124
      %p126 = scmp.ne.s32.totalorder %s118, %s120
      %p127 = scmp.eq.s32.totalorder %s26, 1
      %p128 = por %p126, %p127
      %p129 = scmp.ne.s32.totalorder %s120, %s121
      %p130 = scmp.eq.s32.totalorder %s26, 0
      %p131 = por %p129, %p130
      %p132 = scmp.ne.s32.totalorder %s120, %s121
      %p133 = scmp.eq.s32.totalorder %s27, 1
      %p134 = por %p132, %p133
      %p136 = scmp.ne.s32.totalorder %s121, %s135
      %p137 = scmp.eq.s32.totalorder %s27, 0
      %p138 = por %p136, %p137
      %s140 = sadd.s32 %s139, 1
      %p143 = scmp.eq.s32.totalorder %s21, 1
      %p144 = scmp.ne.s32.totalorder %s139, %s141
      %p145 = scmp.eq.s32.totalorder %s21, 0
      %p146 = por %p144, %p145
      %p147 = scmp.ne.s32.totalorder %s139, %s141
      %p148 = scmp.eq.s32.totalorder %s26, 1
      %p149 = por %p147, %p148
      %p150 = scmp.ne.s32.totalorder %s141, %s142
      %p151 = scmp.eq.s32.totalorder %s26, 0
      %p152 = por %p150, %p151
      %p153 = scmp.ne.s32.totalorder %s141, %s142
      %p154 = scmp.eq.s32.totalorder %s27, 1
      %p155 = por %p153, %p154
      %p157 = scmp.ne.s32.totalorder %s142, %s156
      %p158 = scmp.eq.s32.totalorder %s27, 0
      %p159 = por %p157, %p158
      %s161 = sadd.s32 %s160, 1
      %p164 = scmp.eq.s32.totalorder %s21, 1
      %p165 = scmp.ne.s32.totalorder %s160, %s162
      %p166 = scmp.eq.s32.totalorder %s21, 0
      %p167 = por %p165, %p166
      %p168 = scmp.ne.s32.totalorder %s160, %s162
      %p169 = scmp.eq.s32.totalorder %s26, 1
      %p170 = por %p168, %p169
      %p171 = scmp.ne.s32.totalorder %s162, %s163
      %p172 = scmp.eq.s32.totalorder %s26, 0
      %p173 = por %p171, %p172
      %p174 = scmp.ne.s32.totalorder %s162, %s163
      %p175 = scmp.eq.s32.totalorder %s27, 1
      %p176 = por %p174, %p175
      %p178 = scmp.ne.s32.totalorder %s163, %s177
      %p179 = scmp.eq.s32.totalorder %s27, 0
      %p180 = por %p178, %p179
      %s182 = sadd.s32 %s181, 1
      %p185 = scmp.eq.s32.totalorder %s21, 1
      %p186 = scmp.ne.s32.totalorder %s181, %s183
      %p187 = scmp.eq.s32.totalorder %s21, 0
      %p188 = por %p186, %p187
      %p189 = scmp.ne.s32.totalorder %s181, %s183
      %p190 = scmp.eq.s32.totalorder %s26, 1
      %p191 = por %p189, %p190
      %p192 = scmp.ne.s32.totalorder %s183, %s184
      %p193 = scmp.eq.s32.totalorder %s26, 0
      %p194 = por %p192, %p193
      %p195 = scmp.ne.s32.totalorder %s183, %s184
      %p196 = scmp.eq.s32.totalorder %s27, 1
      %p197 = por %p195, %p196
      %p199 = scmp.ne.s32.totalorder %s184, %s198
      %p200 = scmp.eq.s32.totalorder %s27, 0
      %p201 = por %p199, %p200
      %s203 = sadd.s32 %s202, 1
      %p206 = scmp.eq.s32.totalorder %s21, 1
      %p207 = scmp.ne.s32.totalorder %s202, %s204
      %p208 = scmp.eq.s32.totalorder %s21, 0
      %p209 = por %p207, %p208
      %p210 = scmp.ne.s32.totalorder %s202, %s204
      %p211 = scmp.eq.s32.totalorder %s26, 1
      %p212 = por %p210, %p211
      %p213 = scmp.ne.s32.totalorder %s204, %s205
      %p214 = scmp.eq.s32.totalorder %s26, 0
      %p215 = por %p213, %p214
      %p216 = scmp.ne.s32.totalorder %s204, %s205
      %p217 = scmp.eq.s32.totalorder %s27, 1
      %p218 = por %p216, %p217
      %p220 = scmp.ne.s32.totalorder %s205, %s219
      %p221 = scmp.eq.s32.totalorder %s27, 0
      %p222 = por %p220, %p221
      %s223 = ssub.s32 %s21, %s28
      %p224 = scmp.eq.s32.totalorder %s223, 0
      %s226 = sadd.s32 %s225, 1
      %s227 = scalar_select %p224, %s225, %s226
      %p230 = pneg %p224
      %p231 = scmp.eq.s32.totalorder %s21, 1
      %p232 = por %p230, %p231
      %p233 = scmp.ne.s32.totalorder %s225, %s228
      %p234 = scmp.eq.s32.totalorder %s21, 0
      %p235 = por %p233, %p234
      %p236 = scmp.ne.s32.totalorder %s225, %s228
      %p237 = scmp.eq.s32.totalorder %s26, 1
      %p238 = por %p236, %p237
      %p239 = scmp.ne.s32.totalorder %s228, %s229
      %p240 = scmp.eq.s32.totalorder %s26, 0
      %p241 = por %p239, %p240
      %p242 = scmp.ne.s32.totalorder %s228, %s229
      %p243 = scmp.eq.s32.totalorder %s27, 1
      %p244 = por %p242, %p243
      %p246 = scmp.ne.s32.totalorder %s229, %s245
      %p247 = scmp.eq.s32.totalorder %s27, 0
      %p248 = por %p246, %p247
      %p249 = scmp.le.s32.totalorder 1, %s21
      %p250 = scmp.lt.s32.totalorder %s21, 3
      %p251 = pnand %p249, %p250
      %p252 = pneg %p251
      // Predicated region
      $region9: #{tpu_custom_call.1} parent=5 // pred_check
        _
      $region10: #{tpu_custom_call.1} parent=5 // pred_check_branch
        %254 = sbr.rel (%p251) target = $region12
      $region11: #{tpu_custom_call.1} parent=5 // pred_region
        %s255 = ssub.s32 %s21, 1
        // Predicated region
        $region13: #{tpu_custom_call.1} parent=11 // pred_check
          %p256 = pneg %p68
        $region14: #{tpu_custom_call.1} parent=11 // pred_check_branch
          %258 = sbr.rel (%p256) target = $region16
        $region15: #{tpu_custom_call.1} parent=11 // pred_region
          %s260 = ssub.s32 9216, 9216
          %261 = vsyncadd [#allocation5], %s260
          %s262 = sshll.u32 [#allocation4], 4
          %s263 = int_to_ptr.vmem [resolvable:$true] %s262
          %268 = dma.hbm_to_vmem [thread:$0]  %s1, 9216, %s263, [#allocation5], 64, 64, 4
        $region16: #{tpu_custom_call.1} parent=11 // pred_fallthru
          _
        // Predicated region
        $region17: #{tpu_custom_call.1} parent=11 // pred_check
          %p269 = pneg %p89
        $region18: #{tpu_custom_call.1} parent=11 // pred_check_branch
          %271 = sbr.rel (%p269) target = $region20
        $region19: #{tpu_custom_call.1} parent=11 // pred_region
          %s273 = ssub.s32 48, 48
          %274 = vsyncadd [#allocation8], %s273
          %s275 = sshll.u32 [#allocation7], 4
          %s276 = int_to_ptr.vmem [resolvable:$true] %s275
          %281 = dma.hbm_to_vmem [thread:$0]  %s2, 48, %s276, [#allocation8], 16, 16, 1
        $region20: #{tpu_custom_call.1} parent=11 // pred_fallthru
          _
        // Predicated region
        $region21: #{tpu_custom_call.1} parent=11 // pred_check
          %p282 = pneg %p110
        $region22: #{tpu_custom_call.1} parent=11 // pred_check_branch
          %284 = sbr.rel (%p282) target = $region24
        $region23: #{tpu_custom_call.1} parent=11 // pred_region
          %s286 = ssub.s32 9216, 9216
          %287 = vsyncadd [#allocation8], %s286
          %s288 = sshll.u32 [#allocation9], 4
          %s289 = int_to_ptr.vmem [resolvable:$true] %s288
          %294 = dma.hbm_to_vmem [thread:$0]  %s3, 9216, %s289, [#allocation8], 64, 64, 4
        $region24: #{tpu_custom_call.1} parent=11 // pred_fallthru
          _
        // Predicated region
        $region25: #{tpu_custom_call.1} parent=11 // pred_check
          %p295 = pneg %p131
        $region26: #{tpu_custom_call.1} parent=11 // pred_check_branch
          %297 = sbr.rel (%p295) target = $region28
        $region27: #{tpu_custom_call.1} parent=11 // pred_region
          %s299 = ssub.s32 48, 48
          %300 = vsyncadd [#allocation11], %s299
          %s301 = sshll.u32 [#allocation10], 4
          %s302 = int_to_ptr.vmem [resolvable:$true] %s301
          %307 = dma.hbm_to_vmem [thread:$0]  %s4, 48, %s302, [#allocation11], 16, 16, 1
        $region28: #{tpu_custom_call.1} parent=11 // pred_fallthru
          _
        // Predicated region
        $region29: #{tpu_custom_call.1} parent=11 // pred_check
          %p308 = pneg %p152
        $region30: #{tpu_custom_call.1} parent=11 // pred_check_branch
          %310 = sbr.rel (%p308) target = $region32
        $region31: #{tpu_custom_call.1} parent=11 // pred_region
          %s312 = ssub.s32 2048, 2048
          %313 = vsyncadd [#allocation11], %s312
          %s314 = sshll.u32 [#allocation12], 4
          %s315 = int_to_ptr.vmem [resolvable:$true] %s314
          %320 = dma.hbm_to_vmem [thread:$0]  %s5, 2048, %s315, [#allocation11], 64, 64, 4
        $region32: #{tpu_custom_call.1} parent=11 // pred_fallthru
          _
        // Predicated region
        $region33: #{tpu_custom_call.1} parent=11 // pred_check
          %p321 = pneg %p173
        $region34: #{tpu_custom_call.1} parent=11 // pred_check_branch
          %323 = sbr.rel (%p321) target = $region36
        $region35: #{tpu_custom_call.1} parent=11 // pred_region
          _
        $region36: #{tpu_custom_call.1} parent=11 // pred_fallthru
          _
        // Predicated region
        $region37: #{tpu_custom_call.1} parent=11 // pred_check
          %p324 = pneg %p194
        $region38: #{tpu_custom_call.1} parent=11 // pred_check_branch
          %326 = sbr.rel (%p324) target = $region40
        $region39: #{tpu_custom_call.1} parent=11 // pred_region
          _
        $region40: #{tpu_custom_call.1} parent=11 // pred_fallthru
          _
        // Predicated region
        $region41: #{tpu_custom_call.1} parent=11 // pred_check
          %p327 = pneg %p215
        $region42: #{tpu_custom_call.1} parent=11 // pred_check_branch
          %329 = sbr.rel (%p327) target = $region44
        $region43: #{tpu_custom_call.1} parent=11 // pred_region
          _
        $region44: #{tpu_custom_call.1} parent=11 // pred_fallthru
          _
      $region12: #{tpu_custom_call.1} parent=5 // pred_fallthru
        _
      %p330 = scmp.lt.s32.totalorder %s21, 2
      // Predicated region
      $region45: #{tpu_custom_call.1} parent=5 // pred_check
        %p331 = pneg %p330
      $region46: #{tpu_custom_call.1} parent=5 // pred_check_branch
        %333 = sbr.rel (%p331) target = $region48
      $region47: #{tpu_custom_call.1} parent=5 // pred_region
        // Predicated region
        $region49: #{tpu_custom_call.1} parent=47 // pred_check
          %p334 = pneg %p41
        $region50: #{tpu_custom_call.1} parent=47 // pred_check_branch
          %336 = sbr.rel (%p334) target = $region52
        $region51: #{tpu_custom_call.1} parent=47 // pred_region
          %p337 = scmp.lt.s32.totalorder %s21, 1
          %s338 = scalar_select %p337, %s21, 1
          %s339 = smul.addr %s338, 2
          %s340 = smul.addr %s339, 8
          %s341 = scalar_lea.vmem %s0, %s340
        $region52: #{tpu_custom_call.1} parent=47 // pred_fallthru
          _
      $region48: #{tpu_custom_call.1} parent=5 // pred_fallthru
        _
      %p342 = scmp.le.s32.totalorder 1, %s21
      %p343 = scmp.lt.s32.totalorder %s21, 3
      %p344 = pnand %p342, %p343
      %p345 = pneg %p344
      // Predicated region
      $region53: #{tpu_custom_call.1} parent=5 // pred_check
        _
      $region54: #{tpu_custom_call.1} parent=5 // pred_check_branch
        %347 = sbr.rel (%p344) target = $region56
      $region55: #{tpu_custom_call.1} parent=5 // pred_region
        %s348 = ssub.s32 %s21, 1
        // Predicated region
        $region57: #{tpu_custom_call.1} parent=55 // pred_check
          %p349 = pneg %p68
        $region58: #{tpu_custom_call.1} parent=55 // pred_check_branch
          %351 = sbr.rel (%p349) target = $region60
        $region59: #{tpu_custom_call.1} parent=55 // pred_region
          %352 = dma.done [#allocation5], 9216
        $region60: #{tpu_custom_call.1} parent=55 // pred_fallthru
          _
        // Predicated region
        $region61: #{tpu_custom_call.1} parent=55 // pred_check
          %p353 = pneg %p89
        $region62: #{tpu_custom_call.1} parent=55 // pred_check_branch
          %355 = sbr.rel (%p353) target = $region64
        $region63: #{tpu_custom_call.1} parent=55 // pred_region
          %356 = dma.done [#allocation8], 48
        $region64: #{tpu_custom_call.1} parent=55 // pred_fallthru
          _
        // Predicated region
        $region65: #{tpu_custom_call.1} parent=55 // pred_check
          %p357 = pneg %p110
        $region66: #{tpu_custom_call.1} parent=55 // pred_check_branch
          %359 = sbr.rel (%p357) target = $region68
        $region67: #{tpu_custom_call.1} parent=55 // pred_region
          %360 = dma.done [#allocation8], 9216
        $region68: #{tpu_custom_call.1} parent=55 // pred_fallthru
          _
        // Predicated region
        $region69: #{tpu_custom_call.1} parent=55 // pred_check
          %p361 = pneg %p131
        $region70: #{tpu_custom_call.1} parent=55 // pred_check_branch
          %363 = sbr.rel (%p361) target = $region72
        $region71: #{tpu_custom_call.1} parent=55 // pred_region
          %364 = dma.done [#allocation11], 48
        $region72: #{tpu_custom_call.1} parent=55 // pred_fallthru
          _
        // Predicated region
        $region73: #{tpu_custom_call.1} parent=55 // pred_check
          %p365 = pneg %p152
        $region74: #{tpu_custom_call.1} parent=55 // pred_check_branch
          %367 = sbr.rel (%p365) target = $region76
        $region75: #{tpu_custom_call.1} parent=55 // pred_region
          %368 = dma.done [#allocation11], 2048
        $region76: #{tpu_custom_call.1} parent=55 // pred_fallthru
          _
        %p369 = scmp.lt.s32.totalorder %s26, 1
        %s370 = scalar_select %p369, %s26, 1
        %s371 = smul.addr %s370, 2
        %s372 = smul.addr %s371, 8
        %s373 = scalar_lea.vmem %s0, %s372
        %p374 = pneg %p47
        %p375 = pneg %p44
        %p376 = pneg %p68
        %p377 = pneg %p65
        %p378 = pneg %p89
        %p379 = pneg %p86
        %p380 = pneg %p110
        %p381 = pneg %p107
        %p382 = pneg %p131
        %p383 = pneg %p128
        %p384 = pneg %p152
        %p385 = pneg %p149
        %p386 = pneg %p173
        %p387 = pneg %p170
        %p388 = pneg %p194
        %p389 = pneg %p191
        %p390 = pneg %p215
        %p391 = pneg %p212
        %p392 = pneg %p241
        %p393 = pneg %p238
        %s394 = sand.u32 %s228, 1
        %s395 = scalar_lea.sflag [#allocation6], %s394
        %s396 = sand.u32 %s228, 1
        %s397 = scalar_lea.vmem [#allocation13], %s396
        %p398 = scmp.lt.s32.totalorder %s26, 1
        %s399 = scalar_select %p398, %s26, 1
        %s400 = smul.addr %s399, 2
        %s401 = smul.addr %s400, 8
        %s402 = scalar_lea.vmem %s0, %s401
        %404 = vst [vmem:[#allocation2] sm:$0xff] 0.0
        %405 = vst [vmem:[#allocation2 + $0x8] sm:$0xff] 0.0
        %406 = vst [vmem:[#allocation2 + $0x10] sm:$0xff] 0.0
        %v407 = vld [vmem:[%s402] sm:$0xff]
        %v408 = vld [vmem:[%s402 + $0x8] sm:$0xff]
        %vm409 = vcmask 31744
        %410 = vst.msk [vmem:[#allocation2 + $0x8] sm:$0xff] %vm409, %v407
        %411 = vst.msk [vmem:[#allocation2 + $0x10] sm:$0xff] %vm409, %v408
        %412 = vst [vmem:[#allocation3] sm:$0xff] 0.0
        %v413 = vld [vmem:[#allocation7] sm:$0x1]
        %v414 = vld [vmem:[#allocation2 + $0x6] sm:$0xff]
        %v415 = vld [vmem:[#allocation2 + $0xe] sm:$0xff]
        %v416 = vld [vmem:[#allocation4] sm:$0xf]
        %v417 = vld [vmem:[#allocation4 + $0x4] sm:$0xf]
        %v418 = vld [vmem:[#allocation4 + $0x8] sm:$0xf]
        %v419 = vld [vmem:[#allocation4 + $0xc] sm:$0xf]
        %v420 = vld [vmem:[#allocation4 + $0x10] sm:$0xf]
        %v421 = vld [vmem:[#allocation4 + $0x14] sm:$0xf]
        %v422 = vld [vmem:[#allocation4 + $0x18] sm:$0xf]
        %v423 = vld [vmem:[#allocation4 + $0x1c] sm:$0xf]
        %v424 = vld [vmem:[#allocation4 + $0x20] sm:$0xf]
        %v425 = vld [vmem:[#allocation4 + $0x24] sm:$0xf]
        %v426 = vld [vmem:[#allocation4 + $0x28] sm:$0xf]
        %v427 = vld [vmem:[#allocation4 + $0x2c] sm:$0xf]
        %v428 = vld [vmem:[#allocation4 + $0x30] sm:$0xf]
        %v429 = vld [vmem:[#allocation4 + $0x34] sm:$0xf]
        %v430 = vld [vmem:[#allocation4 + $0x38] sm:$0xf]
        %v431 = vld [vmem:[#allocation4 + $0x3c] sm:$0xf]
        %v432 = vpack.c.bf16 %v415, %v414
        %v433 = vld [vmem:[#allocation2 + $0x7] sm:$0xff]
        %v434 = vld [vmem:[#allocation2 + $0xf] sm:$0xff]
        %s435 = scalar_lea.vmem [#allocation4], 64
        %v436 = vld [vmem:[%s435] sm:$0xf]
        %v437 = vld [vmem:[%s435 + $0x4] sm:$0xf]
        %v438 = vld [vmem:[%s435 + $0x8] sm:$0xf]
        %v439 = vld [vmem:[%s435 + $0xc] sm:$0xf]
        %v440 = vld [vmem:[%s435 + $0x10] sm:$0xf]
        %v441 = vld [vmem:[%s435 + $0x14] sm:$0xf]
        %v442 = vld [vmem:[%s435 + $0x18] sm:$0xf]
        %v443 = vld [vmem:[%s435 + $0x1c] sm:$0xf]
        %v444 = vld [vmem:[%s435 + $0x20] sm:$0xf]
        %v445 = vld [vmem:[%s435 + $0x24] sm:$0xf]
        %v446 = vld [vmem:[%s435 + $0x28] sm:$0xf]
        %v447 = vld [vmem:[%s435 + $0x2c] sm:$0xf]
        %v448 = vld [vmem:[%s435 + $0x30] sm:$0xf]
        %v449 = vld [vmem:[%s435 + $0x34] sm:$0xf]
        %v450 = vld [vmem:[%s435 + $0x38] sm:$0xf]
        %v451 = vld [vmem:[%s435 + $0x3c] sm:$0xf]
        %v452 = vpack.c.bf16 %v434, %v433
        %v469 = vunpack.c.l.b16 %v436
        %v470 = vunpack.c.l.b16 %v437
        %v471 = vunpack.c.l.b16 %v438
        %v472 = vunpack.c.l.b16 %v439
        %v473 = vunpack.c.l.b16 %v440
        %v474 = vunpack.c.l.b16 %v441
        %v475 = vunpack.c.l.b16 %v442
        %v476 = vunpack.c.l.b16 %v443
        %v477 = vunpack.c.l.b16 %v444
        %v478 = vunpack.c.l.b16 %v445
        %v479 = vunpack.c.l.b16 %v446
        %v480 = vunpack.c.l.b16 %v447
        %v481 = vunpack.c.l.b16 %v448
        %v482 = vunpack.c.l.b16 %v449
        %v483 = vunpack.c.l.b16 %v450
        %v484 = vunpack.c.l.b16 %v451
        %v485 = vpack.c.b16 %v470, %v469
        %v486 = vpack.c.b16 %v472, %v471
        %v487 = vpack.c.b16 %v474, %v473
        %v488 = vpack.c.b16 %v476, %v475
        %v489 = vpack.c.b16 %v478, %v477
        %v490 = vpack.c.b16 %v480, %v479
        %v491 = vpack.c.b16 %v482, %v481
        %v492 = vpack.c.b16 %v484, %v483
        %501 = vmatprep.subr.bf16.mxu0 0
        %502 = vmatpush1.bf16.msra.mxu0 %v485
        %503 = vmatprep.subr.bf16.mxu0 0
        %504 = vmatpush1.bf16.msra.mxu0 %v486
        %505 = vmatprep.subr.bf16.mxu0 0
        %506 = vmatpush1.bf16.msra.mxu0 %v487
        %507 = vmatprep.subr.bf16.mxu0 0
        %508 = vmatpush1.bf16.msra.mxu0 %v488
        %509 = vmatprep.subr.bf16.mxu0 0
        %510 = vmatpush1.bf16.msra.mxu0 %v489
        %511 = vmatprep.subr.bf16.mxu0 0
        %512 = vmatpush1.bf16.msra.mxu0 %v490
        %513 = vmatprep.subr.bf16.mxu0 0
        %514 = vmatpush1.bf16.msra.mxu0 %v491
        %515 = vmatprep.subr.bf16.mxu0 0
        %516 = vmatpush1.bf16.msra.mxu0 %v492
        %517 = vmatprep.subr.bf16.mxu0 0
        %518 = vmatpush1.bf16.msra.mxu0 0
        %519 = vmatprep.subr.bf16.mxu0 0
        %520 = vmatpush1.bf16.msra.mxu0 0
        %521 = vmatprep.subr.bf16.mxu0 0
        %522 = vmatpush1.bf16.msra.mxu0 0
        %523 = vmatprep.subr.bf16.mxu0 0
        %524 = vmatpush1.bf16.msra.mxu0 0
        %525 = vmatprep.subr.bf16.mxu0 0
        %526 = vmatpush1.bf16.msra.mxu0 0
        %527 = vmatprep.subr.bf16.mxu0 0
        %528 = vmatpush1.bf16.msra.mxu0 0
        %529 = vmatprep.subr.bf16.mxu0 0
        %530 = vmatpush1.bf16.msra.mxu0 0
        %531 = vmatprep.subr.bf16.mxu0 0
        %532 = vmatpush1.bf16.msra.mxu0 0
        %533 = vmatprep.mubr.bf16.mxu0 0
        %534 = vmatmul.mubr.bf16.gmra.mrb[0].mxu0 %v452
        %v535 = vpop.f32.mrb[0].mxu0
        %v536 = vadd.f32 0.0, %v535
        %v537 = vpop.f32.mrb[0].mxu0
        %v538 = vpop.f32.mrb[0].mxu0
        %v539 = vadd.f32 0.0, %v538
        %v540 = vpop.f32.mrb[0].mxu0
        %541 = vdwg.mxu0
        %v558 = vunpack.c.l.b16 %v416
        %v559 = vunpack.c.l.b16 %v417
        %v560 = vunpack.c.l.b16 %v418
        %v561 = vunpack.c.l.b16 %v419
        %v562 = vunpack.c.l.b16 %v420
        %v563 = vunpack.c.l.b16 %v421
        %v564 = vunpack.c.l.b16 %v422
        %v565 = vunpack.c.l.b16 %v423
        %v566 = vunpack.c.l.b16 %v424
        %v567 = vunpack.c.l.b16 %v425
        %v568 = vunpack.c.l.b16 %v426
        %v569 = vunpack.c.l.b16 %v427
        %v570 = vunpack.c.l.b16 %v428
        %v571 = vunpack.c.l.b16 %v429
        %v572 = vunpack.c.l.b16 %v430
        %v573 = vunpack.c.l.b16 %v431
        %v574 = vpack.c.b16 %v559, %v558
        %v575 = vpack.c.b16 %v561, %v560
        %v576 = vpack.c.b16 %v563, %v562
        %v577 = vpack.c.b16 %v565, %v564
        %v578 = vpack.c.b16 %v567, %v566
        %v579 = vpack.c.b16 %v569, %v568
        %v580 = vpack.c.b16 %v571, %v570
        %v581 = vpack.c.b16 %v573, %v572
        %590 = vmatprep.subr.bf16.mxu0 0
        %591 = vmatpush1.bf16.msra.mxu0 %v574
        %592 = vmatprep.subr.bf16.mxu0 0
        %593 = vmatpush1.bf16.msra.mxu0 %v575
        %594 = vmatprep.subr.bf16.mxu0 0
        %595 = vmatpush1.bf16.msra.mxu0 %v576
        %596 = vmatprep.subr.bf16.mxu0 0
        %597 = vmatpush1.bf16.msra.mxu0 %v577
        %598 = vmatprep.subr.bf16.mxu0 0
        %599 = vmatpush1.bf16.msra.mxu0 %v578
        %600 = vmatprep.subr.bf16.mxu0 0
        %601 = vmatpush1.bf16.msra.mxu0 %v579
        %602 = vmatprep.subr.bf16.mxu0 0
        %603 = vmatpush1.bf16.msra.mxu0 %v580
        %604 = vmatprep.subr.bf16.mxu0 0
        %605 = vmatpush1.bf16.msra.mxu0 %v581
        %606 = vmatprep.subr.bf16.mxu0 0
        %607 = vmatpush1.bf16.msra.mxu0 0
        %608 = vmatprep.subr.bf16.mxu0 0
        %609 = vmatpush1.bf16.msra.mxu0 0
        %610 = vmatprep.subr.bf16.mxu0 0
        %611 = vmatpush1.bf16.msra.mxu0 0
        %612 = vmatprep.subr.bf16.mxu0 0
        %613 = vmatpush1.bf16.msra.mxu0 0
        %614 = vmatprep.subr.bf16.mxu0 0
        %615 = vmatpush1.bf16.msra.mxu0 0
        %616 = vmatprep.subr.bf16.mxu0 0
        %617 = vmatpush1.bf16.msra.mxu0 0
        %618 = vmatprep.subr.bf16.mxu0 0
        %619 = vmatpush1.bf16.msra.mxu0 0
        %620 = vmatprep.subr.bf16.mxu0 0
        %621 = vmatpush1.bf16.msra.mxu0 0
        %622 = vmatprep.mubr.bf16.mxu0 0
        %623 = vmatmul.mubr.bf16.gmra.mrb[0].mxu0 %v432
        %v624 = vpop.f32.mrb[0].mxu0
        %v625 = vadd.f32 %v536, %v624
        %v626 = vpop.f32.mrb[0].mxu0
        %v627 = vpop.f32.mrb[0].mxu0
        %v628 = vadd.f32 %v539, %v627
        %v629 = vpop.f32.mrb[0].mxu0
        %630 = vdwg.mxu0
        %v631 = vld [vmem:[#allocation2 + $0x8] sm:$0xff]
        %v632 = vld [vmem:[#allocation2 + $0x10] sm:$0xff]
        %s633 = scalar_lea.vmem [#allocation4], 128
        %v634 = vld [vmem:[%s633] sm:$0xf]
        %v635 = vld [vmem:[%s633 + $0x4] sm:$0xf]
        %v636 = vld [vmem:[%s633 + $0x8] sm:$0xf]
        %v637 = vld [vmem:[%s633 + $0xc] sm:$0xf]
        %v638 = vld [vmem:[%s633 + $0x10] sm:$0xf]
        %v639 = vld [vmem:[%s633 + $0x14] sm:$0xf]
        %v640 = vld [vmem:[%s633 + $0x18] sm:$0xf]
        %v641 = vld [vmem:[%s633 + $0x1c] sm:$0xf]
        %v642 = vld [vmem:[%s633 + $0x20] sm:$0xf]
        %v643 = vld [vmem:[%s633 + $0x24] sm:$0xf]
        %v644 = vld [vmem:[%s633 + $0x28] sm:$0xf]
        %v645 = vld [vmem:[%s633 + $0x2c] sm:$0xf]
        %v646 = vld [vmem:[%s633 + $0x30] sm:$0xf]
        %v647 = vld [vmem:[%s633 + $0x34] sm:$0xf]
        %v648 = vld [vmem:[%s633 + $0x38] sm:$0xf]
        %v649 = vld [vmem:[%s633 + $0x3c] sm:$0xf]
        %v650 = vpack.c.bf16 %v632, %v631
        %v667 = vunpack.c.l.b16 %v634
        %v668 = vunpack.c.l.b16 %v635
        %v669 = vunpack.c.l.b16 %v636
        %v670 = vunpack.c.l.b16 %v637
        %v671 = vunpack.c.l.b16 %v638
        %v672 = vunpack.c.l.b16 %v639
        %v673 = vunpack.c.l.b16 %v640
        %v674 = vunpack.c.l.b16 %v641
        %v675 = vunpack.c.l.b16 %v642
        %v676 = vunpack.c.l.b16 %v643
        %v677 = vunpack.c.l.b16 %v644
        %v678 = vunpack.c.l.b16 %v645
        %v679 = vunpack.c.l.b16 %v646
        %v680 = vunpack.c.l.b16 %v647
        %v681 = vunpack.c.l.b16 %v648
        %v682 = vunpack.c.l.b16 %v649
        %v683 = vpack.c.b16 %v668, %v667
        %v684 = vpack.c.b16 %v670, %v669
        %v685 = vpack.c.b16 %v672, %v671
        %v686 = vpack.c.b16 %v674, %v673
        %v687 = vpack.c.b16 %v676, %v675
        %v688 = vpack.c.b16 %v678, %v677
        %v689 = vpack.c.b16 %v680, %v679
        %v690 = vpack.c.b16 %v682, %v681
        %699 = vmatprep.subr.bf16.mxu0 0
        %700 = vmatpush1.bf16.msra.mxu0 %v683
        %701 = vmatprep.subr.bf16.mxu0 0
        %702 = vmatpush1.bf16.msra.mxu0 %v684
        %703 = vmatprep.subr.bf16.mxu0 0
        %704 = vmatpush1.bf16.msra.mxu0 %v685
        %705 = vmatprep.subr.bf16.mxu0 0
        %706 = vmatpush1.bf16.msra.mxu0 %v686
        %707 = vmatprep.subr.bf16.mxu0 0
        %708 = vmatpush1.bf16.msra.mxu0 %v687
        %709 = vmatprep.subr.bf16.mxu0 0
        %710 = vmatpush1.bf16.msra.mxu0 %v688
        %711 = vmatprep.subr.bf16.mxu0 0
        %712 = vmatpush1.bf16.msra.mxu0 %v689
        %713 = vmatprep.subr.bf16.mxu0 0
        %714 = vmatpush1.bf16.msra.mxu0 %v690
        %715 = vmatprep.subr.bf16.mxu0 0
        %716 = vmatpush1.bf16.msra.mxu0 0
        %717 = vmatprep.subr.bf16.mxu0 0
        %718 = vmatpush1.bf16.msra.mxu0 0
        %719 = vmatprep.subr.bf16.mxu0 0
        %720 = vmatpush1.bf16.msra.mxu0 0
        %721 = vmatprep.subr.bf16.mxu0 0
        %722 = vmatpush1.bf16.msra.mxu0 0
        %723 = vmatprep.subr.bf16.mxu0 0
        %724 = vmatpush1.bf16.msra.mxu0 0
        %725 = vmatprep.subr.bf16.mxu0 0
        %726 = vmatpush1.bf16.msra.mxu0 0
        %727 = vmatprep.subr.bf16.mxu0 0
        %728 = vmatpush1.bf16.msra.mxu0 0
        %729 = vmatprep.subr.bf16.mxu0 0
        %730 = vmatpush1.bf16.msra.mxu0 0
        %731 = vmatprep.mubr.bf16.mxu0 0
        %732 = vmatmul.mubr.bf16.gmra.mrb[0].mxu0 %v650
        %v733 = vpop.f32.mrb[0].mxu0
        %v734 = vadd.f32 0.0, %v733
        %v735 = vpop.f32.mrb[0].mxu0
        %v736 = vpop.f32.mrb[0].mxu0
        %v737 = vadd.f32 0.0, %v736
        %v738 = vpop.f32.mrb[0].mxu0
        %739 = vdwg.mxu0
        %v740 = vadd.f32 %v625, %v734
        %v741 = vadd.f32 %v628, %v737
        %v743 = vlaneseq
        %v744 = vshrl.u32 %v743, 7
        %v745 = vsub.s32 0, %v744
        %v746 = vrot.slane %v413, %v745
        %v748 = vadd.f32 %v740, %v746
        %v749 = vadd.f32 %v741, %v746
        %vm750 = vcmp.gt.f32.partialorder %v748, 0.0
        %vm751 = vcmp.gt.f32.partialorder %v749, 0.0
        %v752 = vmul.f32 %v748, 0.01
        %v753 = vmul.f32 %v749, 0.01
        %v754 = vsel %vm750, %v748, %v752
        %v755 = vsel %vm751, %v749, %v753
        %756 = vst [vmem:[#allocation3 + $0x8] sm:$0xff] %v754
        %757 = vst [vmem:[#allocation3 + $0x10] sm:$0xff] %v755
        %v758 = vld [vmem:[#allocation10] sm:$0x1]
        %v759 = vld [vmem:[#allocation3 + $0x6] sm:$0xff]
        %v760 = vld [vmem:[#allocation3 + $0xe] sm:$0xff]
        %v761 = vld [vmem:[#allocation9] sm:$0xf]
        %v762 = vld [vmem:[#allocation9 + $0x4] sm:$0xf]
        %v763 = vld [vmem:[#allocation9 + $0x8] sm:$0xf]
        %v764 = vld [vmem:[#allocation9 + $0xc] sm:$0xf]
        %v765 = vld [vmem:[#allocation9 + $0x10] sm:$0xf]
        %v766 = vld [vmem:[#allocation9 + $0x14] sm:$0xf]
        %v767 = vld [vmem:[#allocation9 + $0x18] sm:$0xf]
        %v768 = vld [vmem:[#allocation9 + $0x1c] sm:$0xf]
        %v769 = vld [vmem:[#allocation9 + $0x20] sm:$0xf]
        %v770 = vld [vmem:[#allocation9 + $0x24] sm:$0xf]
        %v771 = vld [vmem:[#allocation9 + $0x28] sm:$0xf]
        %v772 = vld [vmem:[#allocation9 + $0x2c] sm:$0xf]
        %v773 = vld [vmem:[#allocation9 + $0x30] sm:$0xf]
        %v774 = vld [vmem:[#allocation9 + $0x34] sm:$0xf]
        %v775 = vld [vmem:[#allocation9 + $0x38] sm:$0xf]
        %v776 = vld [vmem:[#allocation9 + $0x3c] sm:$0xf]
        %v777 = vpack.c.bf16 %v760, %v759
        %v778 = vld [vmem:[#allocation3 + $0x7] sm:$0xff]
        %v779 = vld [vmem:[#allocation3 + $0xf] sm:$0xff]
        %s780 = scalar_lea.vmem [#allocation9], 64
        %v781 = vld [vmem:[%s780] sm:$0xf]
        %v782 = vld [vmem:[%s780 + $0x4] sm:$0xf]
        %v783 = vld [vmem:[%s780 + $0x8] sm:$0xf]
        %v784 = vld [vmem:[%s780 + $0xc] sm:$0xf]
        %v785 = vld [vmem:[%s780 + $0x10] sm:$0xf]
        %v786 = vld [vmem:[%s780 + $0x14] sm:$0xf]
        %v787 = vld [vmem:[%s780 + $0x18] sm:$0xf]
        %v788 = vld [vmem:[%s780 + $0x1c] sm:$0xf]
        %v789 = vld [vmem:[%s780 + $0x20] sm:$0xf]
        %v790 = vld [vmem:[%s780 + $0x24] sm:$0xf]
        %v791 = vld [vmem:[%s780 + $0x28] sm:$0xf]
        %v792 = vld [vmem:[%s780 + $0x2c] sm:$0xf]
        %v793 = vld [vmem:[%s780 + $0x30] sm:$0xf]
        %v794 = vld [vmem:[%s780 + $0x34] sm:$0xf]
        %v795 = vld [vmem:[%s780 + $0x38] sm:$0xf]
        %v796 = vld [vmem:[%s780 + $0x3c] sm:$0xf]
        %v797 = vpack.c.bf16 %v779, %v778
        %v814 = vunpack.c.l.b16 %v781
        %v815 = vunpack.c.l.b16 %v782
        %v816 = vunpack.c.l.b16 %v783
        %v817 = vunpack.c.l.b16 %v784
        %v818 = vunpack.c.l.b16 %v785
        %v819 = vunpack.c.l.b16 %v786
        %v820 = vunpack.c.l.b16 %v787
        %v821 = vunpack.c.l.b16 %v788
        %v822 = vunpack.c.l.b16 %v789
        %v823 = vunpack.c.l.b16 %v790
        %v824 = vunpack.c.l.b16 %v791
        %v825 = vunpack.c.l.b16 %v792
        %v826 = vunpack.c.l.b16 %v793
        %v827 = vunpack.c.l.b16 %v794
        %v828 = vunpack.c.l.b16 %v795
        %v829 = vunpack.c.l.b16 %v796
        %v830 = vpack.c.b16 %v815, %v814
        %v831 = vpack.c.b16 %v817, %v816
        %v832 = vpack.c.b16 %v819, %v818
        %v833 = vpack.c.b16 %v821, %v820
        %v834 = vpack.c.b16 %v823, %v822
        %v835 = vpack.c.b16 %v825, %v824
        %v836 = vpack.c.b16 %v827, %v826
        %v837 = vpack.c.b16 %v829, %v828
        %846 = vmatprep.subr.bf16.mxu0 0
        %847 = vmatpush1.bf16.msra.mxu0 %v830
        %848 = vmatprep.subr.bf16.mxu0 0
        %849 = vmatpush1.bf16.msra.mxu0 %v831
        %850 = vmatprep.subr.bf16.mxu0 0
        %851 = vmatpush1.bf16.msra.mxu0 %v832
        %852 = vmatprep.subr.bf16.mxu0 0
        %853 = vmatpush1.bf16.msra.mxu0 %v833
        %854 = vmatprep.subr.bf16.mxu0 0
        %855 = vmatpush1.bf16.msra.mxu0 %v834
        %856 = vmatprep.subr.bf16.mxu0 0
        %857 = vmatpush1.bf16.msra.mxu0 %v835
        %858 = vmatprep.subr.bf16.mxu0 0
        %859 = vmatpush1.bf16.msra.mxu0 %v836
        %860 = vmatprep.subr.bf16.mxu0 0
        %861 = vmatpush1.bf16.msra.mxu0 %v837
        %862 = vmatprep.subr.bf16.mxu0 0
        %863 = vmatpush1.bf16.msra.mxu0 0
        %864 = vmatprep.subr.bf16.mxu0 0
        %865 = vmatpush1.bf16.msra.mxu0 0
        %866 = vmatprep.subr.bf16.mxu0 0
        %867 = vmatpush1.bf16.msra.mxu0 0
        %868 = vmatprep.subr.bf16.mxu0 0
        %869 = vmatpush1.bf16.msra.mxu0 0
        %870 = vmatprep.subr.bf16.mxu0 0
        %871 = vmatpush1.bf16.msra.mxu0 0
        %872 = vmatprep.subr.bf16.mxu0 0
        %873 = vmatpush1.bf16.msra.mxu0 0
        %874 = vmatprep.subr.bf16.mxu0 0
        %875 = vmatpush1.bf16.msra.mxu0 0
        %876 = vmatprep.subr.bf16.mxu0 0
        %877 = vmatpush1.bf16.msra.mxu0 0
        %878 = vmatprep.mubr.bf16.mxu0 0
        %879 = vmatmul.mubr.bf16.gmra.mrb[0].mxu0 %v797
        %v880 = vpop.f32.mrb[0].mxu0
        %v881 = vadd.f32 0.0, %v880
        %v882 = vpop.f32.mrb[0].mxu0
        %v883 = vpop.f32.mrb[0].mxu0
        %v884 = vadd.f32 0.0, %v883
        %v885 = vpop.f32.mrb[0].mxu0
        %886 = vdwg.mxu0
        %v903 = vunpack.c.l.b16 %v761
        %v904 = vunpack.c.l.b16 %v762
        %v905 = vunpack.c.l.b16 %v763
        %v906 = vunpack.c.l.b16 %v764
        %v907 = vunpack.c.l.b16 %v765
        %v908 = vunpack.c.l.b16 %v766
        %v909 = vunpack.c.l.b16 %v767
        %v910 = vunpack.c.l.b16 %v768
        %v911 = vunpack.c.l.b16 %v769
        %v912 = vunpack.c.l.b16 %v770
        %v913 = vunpack.c.l.b16 %v771
        %v914 = vunpack.c.l.b16 %v772
        %v915 = vunpack.c.l.b16 %v773
        %v916 = vunpack.c.l.b16 %v774
        %v917 = vunpack.c.l.b16 %v775
        %v918 = vunpack.c.l.b16 %v776
        %v919 = vpack.c.b16 %v904, %v903
        %v920 = vpack.c.b16 %v906, %v905
        %v921 = vpack.c.b16 %v908, %v907
        %v922 = vpack.c.b16 %v910, %v909
        %v923 = vpack.c.b16 %v912, %v911
        %v924 = vpack.c.b16 %v914, %v913
        %v925 = vpack.c.b16 %v916, %v915
        %v926 = vpack.c.b16 %v918, %v917
        %935 = vmatprep.subr.bf16.mxu0 0
        %936 = vmatpush1.bf16.msra.mxu0 %v919
        %937 = vmatprep.subr.bf16.mxu0 0
        %938 = vmatpush1.bf16.msra.mxu0 %v920
        %939 = vmatprep.subr.bf16.mxu0 0
        %940 = vmatpush1.bf16.msra.mxu0 %v921
        %941 = vmatprep.subr.bf16.mxu0 0
        %942 = vmatpush1.bf16.msra.mxu0 %v922
        %943 = vmatprep.subr.bf16.mxu0 0
        %944 = vmatpush1.bf16.msra.mxu0 %v923
        %945 = vmatprep.subr.bf16.mxu0 0
        %946 = vmatpush1.bf16.msra.mxu0 %v924
        %947 = vmatprep.subr.bf16.mxu0 0
        %948 = vmatpush1.bf16.msra.mxu0 %v925
        %949 = vmatprep.subr.bf16.mxu0 0
        %950 = vmatpush1.bf16.msra.mxu0 %v926
        %951 = vmatprep.subr.bf16.mxu0 0
        %952 = vmatpush1.bf16.msra.mxu0 0
        %953 = vmatprep.subr.bf16.mxu0 0
        %954 = vmatpush1.bf16.msra.mxu0 0
        %955 = vmatprep.subr.bf16.mxu0 0
        %956 = vmatpush1.bf16.msra.mxu0 0
        %957 = vmatprep.subr.bf16.mxu0 0
        %958 = vmatpush1.bf16.msra.mxu0 0
        %959 = vmatprep.subr.bf16.mxu0 0
        %960 = vmatpush1.bf16.msra.mxu0 0
        %961 = vmatprep.subr.bf16.mxu0 0
        %962 = vmatpush1.bf16.msra.mxu0 0
        %963 = vmatprep.subr.bf16.mxu0 0
        %964 = vmatpush1.bf16.msra.mxu0 0
        %965 = vmatprep.subr.bf16.mxu0 0
        %966 = vmatpush1.bf16.msra.mxu0 0
        %967 = vmatprep.mubr.bf16.mxu0 0
        %968 = vmatmul.mubr.bf16.gmra.mrb[0].mxu0 %v777
        %v969 = vpop.f32.mrb[0].mxu0
        %v970 = vadd.f32 %v881, %v969
        %v971 = vpop.f32.mrb[0].mxu0
        %v972 = vpop.f32.mrb[0].mxu0
        %v973 = vadd.f32 %v884, %v972
        %v974 = vpop.f32.mrb[0].mxu0
        %975 = vdwg.mxu0
        %v976 = vld [vmem:[#allocation3 + $0x8] sm:$0xff]
        %v977 = vld [vmem:[#allocation3 + $0x10] sm:$0xff]
        %s978 = scalar_lea.vmem [#allocation9], 128
        %v979 = vld [vmem:[%s978] sm:$0xf]
        %v980 = vld [vmem:[%s978 + $0x4] sm:$0xf]
        %v981 = vld [vmem:[%s978 + $0x8] sm:$0xf]
        %v982 = vld [vmem:[%s978 + $0xc] sm:$0xf]
        %v983 = vld [vmem:[%s978 + $0x10] sm:$0xf]
        %v984 = vld [vmem:[%s978 + $0x14] sm:$0xf]
        %v985 = vld [vmem:[%s978 + $0x18] sm:$0xf]
        %v986 = vld [vmem:[%s978 + $0x1c] sm:$0xf]
        %v987 = vld [vmem:[%s978 + $0x20] sm:$0xf]
        %v988 = vld [vmem:[%s978 + $0x24] sm:$0xf]
        %v989 = vld [vmem:[%s978 + $0x28] sm:$0xf]
        %v990 = vld [vmem:[%s978 + $0x2c] sm:$0xf]
        %v991 = vld [vmem:[%s978 + $0x30] sm:$0xf]
        %v992 = vld [vmem:[%s978 + $0x34] sm:$0xf]
        %v993 = vld [vmem:[%s978 + $0x38] sm:$0xf]
        %v994 = vld [vmem:[%s978 + $0x3c] sm:$0xf]
        %v995 = vpack.c.bf16 %v977, %v976
        %v1012 = vunpack.c.l.b16 %v979
        %v1013 = vunpack.c.l.b16 %v980
        %v1014 = vunpack.c.l.b16 %v981
        %v1015 = vunpack.c.l.b16 %v982
        %v1016 = vunpack.c.l.b16 %v983
        %v1017 = vunpack.c.l.b16 %v984
        %v1018 = vunpack.c.l.b16 %v985
        %v1019 = vunpack.c.l.b16 %v986
        %v1020 = vunpack.c.l.b16 %v987
        %v1021 = vunpack.c.l.b16 %v988
        %v1022 = vunpack.c.l.b16 %v989
        %v1023 = vunpack.c.l.b16 %v990
        %v1024 = vunpack.c.l.b16 %v991
        %v1025 = vunpack.c.l.b16 %v992
        %v1026 = vunpack.c.l.b16 %v993
        %v1027 = vunpack.c.l.b16 %v994
        %v1028 = vpack.c.b16 %v1013, %v1012
        %v1029 = vpack.c.b16 %v1015, %v1014
        %v1030 = vpack.c.b16 %v1017, %v1016
        %v1031 = vpack.c.b16 %v1019, %v1018
        %v1032 = vpack.c.b16 %v1021, %v1020
        %v1033 = vpack.c.b16 %v1023, %v1022
        %v1034 = vpack.c.b16 %v1025, %v1024
        %v1035 = vpack.c.b16 %v1027, %v1026
        %1044 = vmatprep.subr.bf16.mxu0 0
        %1045 = vmatpush1.bf16.msra.mxu0 %v1028
        %1046 = vmatprep.subr.bf16.mxu0 0
        %1047 = vmatpush1.bf16.msra.mxu0 %v1029
        %1048 = vmatprep.subr.bf16.mxu0 0
        %1049 = vmatpush1.bf16.msra.mxu0 %v1030
        %1050 = vmatprep.subr.bf16.mxu0 0
        %1051 = vmatpush1.bf16.msra.mxu0 %v1031
        %1052 = vmatprep.subr.bf16.mxu0 0
        %1053 = vmatpush1.bf16.msra.mxu0 %v1032
        %1054 = vmatprep.subr.bf16.mxu0 0
        %1055 = vmatpush1.bf16.msra.mxu0 %v1033
        %1056 = vmatprep.subr.bf16.mxu0 0
        %1057 = vmatpush1.bf16.msra.mxu0 %v1034
        %1058 = vmatprep.subr.bf16.mxu0 0
        %1059 = vmatpush1.bf16.msra.mxu0 %v1035
        %1060 = vmatprep.subr.bf16.mxu0 0
        %1061 = vmatpush1.bf16.msra.mxu0 0
        %1062 = vmatprep.subr.bf16.mxu0 0
        %1063 = vmatpush1.bf16.msra.mxu0 0
        %1064 = vmatprep.subr.bf16.mxu0 0
        %1065 = vmatpush1.bf16.msra.mxu0 0
        %1066 = vmatprep.subr.bf16.mxu0 0
        %1067 = vmatpush1.bf16.msra.mxu0 0
        %1068 = vmatprep.subr.bf16.mxu0 0
        %1069 = vmatpush1.bf16.msra.mxu0 0
        %1070 = vmatprep.subr.bf16.mxu0 0
        %1071 = vmatpush1.bf16.msra.mxu0 0
        %1072 = vmatprep.subr.bf16.mxu0 0
        %1073 = vmatpush1.bf16.msra.mxu0 0
        %1074 = vmatprep.subr.bf16.mxu0 0
        %1075 = vmatpush1.bf16.msra.mxu0 0
        %1076 = vmatprep.mubr.bf16.mxu0 0
        %1077 = vmatmul.mubr.bf16.gmra.mrb[0].mxu0 %v995
        %v1078 = vpop.f32.mrb[0].mxu0
        %v1079 = vadd.f32 0.0, %v1078
        %v1080 = vpop.f32.mrb[0].mxu0
        %v1081 = vpop.f32.mrb[0].mxu0
        %v1082 = vadd.f32 0.0, %v1081
        %v1083 = vpop.f32.mrb[0].mxu0
        %1084 = vdwg.mxu0
        %v1085 = vadd.f32 %v970, %v1079
        %v1086 = vadd.f32 %v973, %v1082
        %v1088 = vlaneseq
        %v1089 = vshrl.u32 %v1088, 7
        %v1090 = vsub.s32 0, %v1089
        %v1091 = vrot.slane %v758, %v1090
        %v1093 = vadd.f32 %v1085, %v1091
        %v1094 = vadd.f32 %v1086, %v1091
        %vm1095 = vcmp.gt.f32.partialorder %v1093, 0.0
        %vm1096 = vcmp.gt.f32.partialorder %v1094, 0.0
        %v1097 = vmul.f32 %v1093, 0.01
        %v1098 = vmul.f32 %v1094, 0.01
        %v1099 = vsel %vm1095, %v1093, %v1097
        %v1100 = vsel %vm1096, %v1094, %v1098
        %v1101 = vld [vmem:[#allocation2 + $0x8] sm:$0xff]
        %v1102 = vld [vmem:[#allocation2 + $0x10] sm:$0xff]
        %v1103 = vld [vmem:[#allocation12] sm:$0xf]
        %v1104 = vld [vmem:[#allocation12 + $0x4] sm:$0xf]
        %v1105 = vld [vmem:[#allocation12 + $0x8] sm:$0xf]
        %v1106 = vld [vmem:[#allocation12 + $0xc] sm:$0xf]
        %v1107 = vld [vmem:[#allocation12 + $0x10] sm:$0xf]
        %v1108 = vld [vmem:[#allocation12 + $0x14] sm:$0xf]
        %v1109 = vld [vmem:[#allocation12 + $0x18] sm:$0xf]
        %v1110 = vld [vmem:[#allocation12 + $0x1c] sm:$0xf]
        %v1111 = vld [vmem:[#allocation12 + $0x20] sm:$0xf]
        %v1112 = vld [vmem:[#allocation12 + $0x24] sm:$0xf]
        %v1113 = vld [vmem:[#allocation12 + $0x28] sm:$0xf]
        %v1114 = vld [vmem:[#allocation12 + $0x2c] sm:$0xf]
        %v1115 = vld [vmem:[#allocation12 + $0x30] sm:$0xf]
        %v1116 = vld [vmem:[#allocation12 + $0x34] sm:$0xf]
        %v1117 = vld [vmem:[#allocation12 + $0x38] sm:$0xf]
        %v1118 = vld [vmem:[#allocation12 + $0x3c] sm:$0xf]
        %v1119 = vpack.c.bf16 %v1102, %v1101
        %v1120 = vld [vmem:[%s6] sm:$0x1]
        %v1122 = vlaneseq
        %v1123 = vshrl.u32 %v1122, 7
        %v1124 = vsub.s32 0, %v1123
        %v1125 = vrot.slane %v1120, %v1124
        %v1143 = vunpack.c.l.b16 %v1103
        %v1144 = vunpack.c.l.b16 %v1104
        %v1145 = vunpack.c.l.b16 %v1105
        %v1146 = vunpack.c.l.b16 %v1106
        %v1147 = vunpack.c.l.b16 %v1107
        %v1148 = vunpack.c.l.b16 %v1108
        %v1149 = vunpack.c.l.b16 %v1109
        %v1150 = vunpack.c.l.b16 %v1110
        %v1151 = vunpack.c.l.b16 %v1111
        %v1152 = vunpack.c.l.b16 %v1112
        %v1153 = vunpack.c.l.b16 %v1113
        %v1154 = vunpack.c.l.b16 %v1114
        %v1155 = vunpack.c.l.b16 %v1115
        %v1156 = vunpack.c.l.b16 %v1116
        %v1157 = vunpack.c.l.b16 %v1117
        %v1158 = vunpack.c.l.b16 %v1118
        %v1159 = vpack.c.b16 %v1144, %v1143
        %v1160 = vpack.c.b16 %v1146, %v1145
        %v1161 = vpack.c.b16 %v1148, %v1147
        %v1162 = vpack.c.b16 %v1150, %v1149
        %v1163 = vpack.c.b16 %v1152, %v1151
        %v1164 = vpack.c.b16 %v1154, %v1153
        %v1165 = vpack.c.b16 %v1156, %v1155
        %v1166 = vpack.c.b16 %v1158, %v1157
        %1175 = vmatprep.subr.bf16.mxu0 0
        %1176 = vmatpush1.bf16.msra.mxu0 %v1159
        %1177 = vmatprep.subr.bf16.mxu0 0
        %1178 = vmatpush1.bf16.msra.mxu0 %v1160
        %1179 = vmatprep.subr.bf16.mxu0 0
        %1180 = vmatpush1.bf16.msra.mxu0 %v1161
        %1181 = vmatprep.subr.bf16.mxu0 0
        %1182 = vmatpush1.bf16.msra.mxu0 %v1162
        %1183 = vmatprep.subr.bf16.mxu0 0
        %1184 = vmatpush1.bf16.msra.mxu0 %v1163
        %1185 = vmatprep.subr.bf16.mxu0 0
        %1186 = vmatpush1.bf16.msra.mxu0 %v1164
        %1187 = vmatprep.subr.bf16.mxu0 0
        %1188 = vmatpush1.bf16.msra.mxu0 %v1165
        %1189 = vmatprep.subr.bf16.mxu0 0
        %1190 = vmatpush1.bf16.msra.mxu0 %v1166
        %1191 = vmatprep.subr.bf16.mxu0 0
        %1192 = vmatpush1.bf16.msra.mxu0 0
        %1193 = vmatprep.subr.bf16.mxu0 0
        %1194 = vmatpush1.bf16.msra.mxu0 0
        %1195 = vmatprep.subr.bf16.mxu0 0
        %1196 = vmatpush1.bf16.msra.mxu0 0
        %1197 = vmatprep.subr.bf16.mxu0 0
        %1198 = vmatpush1.bf16.msra.mxu0 0
        %1199 = vmatprep.subr.bf16.mxu0 0
        %1200 = vmatpush1.bf16.msra.mxu0 0
        %1201 = vmatprep.subr.bf16.mxu0 0
        %1202 = vmatpush1.bf16.msra.mxu0 0
        %1203 = vmatprep.subr.bf16.mxu0 0
        %1204 = vmatpush1.bf16.msra.mxu0 0
        %1205 = vmatprep.subr.bf16.mxu0 0
        %1206 = vmatpush1.bf16.msra.mxu0 0
        %1207 = vmatprep.mubr.bf16.mxu0 0
        %1208 = vmatmul.mubr.bf16.gmra.mrb[0].mxu0 %v1119
        %v1209 = vpop.f32.mrb[0].mxu0
        %v1210 = vadd.f32 %v1125, %v1209
        %v1211 = vpop.f32.mrb[0].mxu0
        %v1212 = vpop.f32.mrb[0].mxu0
        %v1213 = vadd.f32 %v1125, %v1212
        %v1214 = vpop.f32.mrb[0].mxu0
        %1215 = vdwg.mxu0
        %v1216 = vadd.f32 %v1099, %v1210
        %v1217 = vadd.f32 %v1100, %v1213
        %1218 = vst [vmem:[#allocation2 + $0x8] sm:$0xff] %v1216
        %1219 = vst [vmem:[#allocation2 + $0x10] sm:$0xff] %v1217
        %s1220 = scalar_lea.vmem [#allocation7], 1
        %v1221 = vld [vmem:[%s1220] sm:$0x1]
        %v1222 = vld [vmem:[#allocation2 + $0x4] sm:$0xff]
        %v1223 = vld [vmem:[#allocation2 + $0xc] sm:$0xff]
        %s1224 = scalar_lea.vmem [#allocation4], 192
        %v1225 = vld [vmem:[%s1224] sm:$0xf]
        %v1226 = vld [vmem:[%s1224 + $0x4] sm:$0xf]
        %v1227 = vld [vmem:[%s1224 + $0x8] sm:$0xf]
        %v1228 = vld [vmem:[%s1224 + $0xc] sm:$0xf]
        %v1229 = vld [vmem:[%s1224 + $0x10] sm:$0xf]
        %v1230 = vld [vmem:[%s1224 + $0x14] sm:$0xf]
        %v1231 = vld [vmem:[%s1224 + $0x18] sm:$0xf]
        %v1232 = vld [vmem:[%s1224 + $0x1c] sm:$0xf]
        %v1233 = vld [vmem:[%s1224 + $0x20] sm:$0xf]
        %v1234 = vld [vmem:[%s1224 + $0x24] sm:$0xf]
        %v1235 = vld [vmem:[%s1224 + $0x28] sm:$0xf]
        %v1236 = vld [vmem:[%s1224 + $0x2c] sm:$0xf]
        %v1237 = vld [vmem:[%s1224 + $0x30] sm:$0xf]
        %v1238 = vld [vmem:[%s1224 + $0x34] sm:$0xf]
        %v1239 = vld [vmem:[%s1224 + $0x38] sm:$0xf]
        %v1240 = vld [vmem:[%s1224 + $0x3c] sm:$0xf]
        %v1241 = vpack.c.bf16 %v1223, %v1222
        %v1242 = vld [vmem:[#allocation2 + $0x6] sm:$0xff]
        %v1243 = vld [vmem:[#allocation2 + $0xe] sm:$0xff]
        %s1244 = scalar_lea.vmem [#allocation4], 256
        %v1245 = vld [vmem:[%s1244] sm:$0xf]
        %v1246 = vld [vmem:[%s1244 + $0x4] sm:$0xf]
        %v1247 = vld [vmem:[%s1244 + $0x8] sm:$0xf]
        %v1248 = vld [vmem:[%s1244 + $0xc] sm:$0xf]
        %v1249 = vld [vmem:[%s1244 + $0x10] sm:$0xf]
        %v1250 = vld [vmem:[%s1244 + $0x14] sm:$0xf]
        %v1251 = vld [vmem:[%s1244 + $0x18] sm:$0xf]
        %v1252 = vld [vmem:[%s1244 + $0x1c] sm:$0xf]
        %v1253 = vld [vmem:[%s1244 + $0x20] sm:$0xf]
        %v1254 = vld [vmem:[%s1244 + $0x24] sm:$0xf]
        %v1255 = vld [vmem:[%s1244 + $0x28] sm:$0xf]
        %v1256 = vld [vmem:[%s1244 + $0x2c] sm:$0xf]
        %v1257 = vld [vmem:[%s1244 + $0x30] sm:$0xf]
        %v1258 = vld [vmem:[%s1244 + $0x34] sm:$0xf]
        %v1259 = vld [vmem:[%s1244 + $0x38] sm:$0xf]
        %v1260 = vld [vmem:[%s1244 + $0x3c] sm:$0xf]
        %v1261 = vpack.c.bf16 %v1243, %v1242
        %v1278 = vunpack.c.l.b16 %v1245
        %v1279 = vunpack.c.l.b16 %v1246
        %v1280 = vunpack.c.l.b16 %v1247
        %v1281 = vunpack.c.l.b16 %v1248
        %v1282 = vunpack.c.l.b16 %v1249
        %v1283 = vunpack.c.l.b16 %v1250
        %v1284 = vunpack.c.l.b16 %v1251
        %v1285 = vunpack.c.l.b16 %v1252
        %v1286 = vunpack.c.l.b16 %v1253
        %v1287 = vunpack.c.l.b16 %v1254
        %v1288 = vunpack.c.l.b16 %v1255
        %v1289 = vunpack.c.l.b16 %v1256
        %v1290 = vunpack.c.l.b16 %v1257
        %v1291 = vunpack.c.l.b16 %v1258
        %v1292 = vunpack.c.l.b16 %v1259
        %v1293 = vunpack.c.l.b16 %v1260
        %v1294 = vpack.c.b16 %v1279, %v1278
        %v1295 = vpack.c.b16 %v1281, %v1280
        %v1296 = vpack.c.b16 %v1283, %v1282
        %v1297 = vpack.c.b16 %v1285, %v1284
        %v1298 = vpack.c.b16 %v1287, %v1286
        %v1299 = vpack.c.b16 %v1289, %v1288
        %v1300 = vpack.c.b16 %v1291, %v1290
        %v1301 = vpack.c.b16 %v1293, %v1292
        %1310 = vmatprep.subr.bf16.mxu0 0
        %1311 = vmatpush1.bf16.msra.mxu0 %v1294
        %1312 = vmatprep.subr.bf16.mxu0 0
        %1313 = vmatpush1.bf16.msra.mxu0 %v1295
        %1314 = vmatprep.subr.bf16.mxu0 0
        %1315 = vmatpush1.bf16.msra.mxu0 %v1296
        %1316 = vmatprep.subr.bf16.mxu0 0
        %1317 = vmatpush1.bf16.msra.mxu0 %v1297
        %1318 = vmatprep.subr.bf16.mxu0 0
        %1319 = vmatpush1.bf16.msra.mxu0 %v1298
        %1320 = vmatprep.subr.bf16.mxu0 0
        %1321 = vmatpush1.bf16.msra.mxu0 %v1299
        %1322 = vmatprep.subr.bf16.mxu0 0
        %1323 = vmatpush1.bf16.msra.mxu0 %v1300
        %1324 = vmatprep.subr.bf16.mxu0 0
        %1325 = vmatpush1.bf16.msra.mxu0 %v1301
        %1326 = vmatprep.subr.bf16.mxu0 0
        %1327 = vmatpush1.bf16.msra.mxu0 0
        %1328 = vmatprep.subr.bf16.mxu0 0
        %1329 = vmatpush1.bf16.msra.mxu0 0
        %1330 = vmatprep.subr.bf16.mxu0 0
        %1331 = vmatpush1.bf16.msra.mxu0 0
        %1332 = vmatprep.subr.bf16.mxu0 0
        %1333 = vmatpush1.bf16.msra.mxu0 0
        %1334 = vmatprep.subr.bf16.mxu0 0
        %1335 = vmatpush1.bf16.msra.mxu0 0
        %1336 = vmatprep.subr.bf16.mxu0 0
        %1337 = vmatpush1.bf16.msra.mxu0 0
        %1338 = vmatprep.subr.bf16.mxu0 0
        %1339 = vmatpush1.bf16.msra.mxu0 0
        %1340 = vmatprep.subr.bf16.mxu0 0
        %1341 = vmatpush1.bf16.msra.mxu0 0
        %1342 = vmatprep.mubr.bf16.mxu0 0
        %1343 = vmatmul.mubr.bf16.gmra.mrb[0].mxu0 %v1261
        %v1344 = vpop.f32.mrb[0].mxu0
        %v1345 = vadd.f32 0.0, %v1344
        %v1346 = vpop.f32.mrb[0].mxu0
        %v1347 = vpop.f32.mrb[0].mxu0
        %v1348 = vadd.f32 0.0, %v1347
        %v1349 = vpop.f32.mrb[0].mxu0
        %1350 = vdwg.mxu0
        %v1367 = vunpack.c.l.b16 %v1225
        %v1368 = vunpack.c.l.b16 %v1226
        %v1369 = vunpack.c.l.b16 %v1227
        %v1370 = vunpack.c.l.b16 %v1228
        %v1371 = vunpack.c.l.b16 %v1229
        %v1372 = vunpack.c.l.b16 %v1230
        %v1373 = vunpack.c.l.b16 %v1231
        %v1374 = vunpack.c.l.b16 %v1232
        %v1375 = vunpack.c.l.b16 %v1233
        %v1376 = vunpack.c.l.b16 %v1234
        %v1377 = vunpack.c.l.b16 %v1235
        %v1378 = vunpack.c.l.b16 %v1236
        %v1379 = vunpack.c.l.b16 %v1237
        %v1380 = vunpack.c.l.b16 %v1238
        %v1381 = vunpack.c.l.b16 %v1239
        %v1382 = vunpack.c.l.b16 %v1240
        %v1383 = vpack.c.b16 %v1368, %v1367
        %v1384 = vpack.c.b16 %v1370, %v1369
        %v1385 = vpack.c.b16 %v1372, %v1371
        %v1386 = vpack.c.b16 %v1374, %v1373
        %v1387 = vpack.c.b16 %v1376, %v1375
        %v1388 = vpack.c.b16 %v1378, %v1377
        %v1389 = vpack.c.b16 %v1380, %v1379
        %v1390 = vpack.c.b16 %v1382, %v1381
        %1399 = vmatprep.subr.bf16.mxu0 0
        %1400 = vmatpush1.bf16.msra.mxu0 %v1383
        %1401 = vmatprep.subr.bf16.mxu0 0
        %1402 = vmatpush1.bf16.msra.mxu0 %v1384
        %1403 = vmatprep.subr.bf16.mxu0 0
        %1404 = vmatpush1.bf16.msra.mxu0 %v1385
        %1405 = vmatprep.subr.bf16.mxu0 0
        %1406 = vmatpush1.bf16.msra.mxu0 %v1386
        %1407 = vmatprep.subr.bf16.mxu0 0
        %1408 = vmatpush1.bf16.msra.mxu0 %v1387
        %1409 = vmatprep.subr.bf16.mxu0 0
        %1410 = vmatpush1.bf16.msra.mxu0 %v1388
        %1411 = vmatprep.subr.bf16.mxu0 0
        %1412 = vmatpush1.bf16.msra.mxu0 %v1389
        %1413 = vmatprep.subr.bf16.mxu0 0
        %1414 = vmatpush1.bf16.msra.mxu0 %v1390
        %1415 = vmatprep.subr.bf16.mxu0 0
        %1416 = vmatpush1.bf16.msra.mxu0 0
        %1417 = vmatprep.subr.bf16.mxu0 0
        %1418 = vmatpush1.bf16.msra.mxu0 0
        %1419 = vmatprep.subr.bf16.mxu0 0
        %1420 = vmatpush1.bf16.msra.mxu0 0
        %1421 = vmatprep.subr.bf16.mxu0 0
        %1422 = vmatpush1.bf16.msra.mxu0 0
        %1423 = vmatprep.subr.bf16.mxu0 0
        %1424 = vmatpush1.bf16.msra.mxu0 0
        %1425 = vmatprep.subr.bf16.mxu0 0
        %1426 = vmatpush1.bf16.msra.mxu0 0
        %1427 = vmatprep.subr.bf16.mxu0 0
        %1428 = vmatpush1.bf16.msra.mxu0 0
        %1429 = vmatprep.subr.bf16.mxu0 0
        %1430 = vmatpush1.bf16.msra.mxu0 0
        %1431 = vmatprep.mubr.bf16.mxu0 0
        %1432 = vmatmul.mubr.bf16.gmra.mrb[0].mxu0 %v1241
        %v1433 = vpop.f32.mrb[0].mxu0
        %v1434 = vadd.f32 %v1345, %v1433
        %v1435 = vpop.f32.mrb[0].mxu0
        %v1436 = vpop.f32.mrb[0].mxu0
        %v1437 = vadd.f32 %v1348, %v1436
        %v1438 = vpop.f32.mrb[0].mxu0
        %1439 = vdwg.mxu0
        %v1440 = vld [vmem:[#allocation2 + $0x8] sm:$0xff]
        %v1441 = vld [vmem:[#allocation2 + $0x10] sm:$0xff]
        %s1442 = scalar_lea.vmem [#allocation4], 320
        %v1443 = vld [vmem:[%s1442] sm:$0xf]
        %v1444 = vld [vmem:[%s1442 + $0x4] sm:$0xf]
        %v1445 = vld [vmem:[%s1442 + $0x8] sm:$0xf]
        %v1446 = vld [vmem:[%s1442 + $0xc] sm:$0xf]
        %v1447 = vld [vmem:[%s1442 + $0x10] sm:$0xf]
        %v1448 = vld [vmem:[%s1442 + $0x14] sm:$0xf]
        %v1449 = vld [vmem:[%s1442 + $0x18] sm:$0xf]
        %v1450 = vld [vmem:[%s1442 + $0x1c] sm:$0xf]
        %v1451 = vld [vmem:[%s1442 + $0x20] sm:$0xf]
        %v1452 = vld [vmem:[%s1442 + $0x24] sm:$0xf]
        %v1453 = vld [vmem:[%s1442 + $0x28] sm:$0xf]
        %v1454 = vld [vmem:[%s1442 + $0x2c] sm:$0xf]
        %v1455 = vld [vmem:[%s1442 + $0x30] sm:$0xf]
        %v1456 = vld [vmem:[%s1442 + $0x34] sm:$0xf]
        %v1457 = vld [vmem:[%s1442 + $0x38] sm:$0xf]
        %v1458 = vld [vmem:[%s1442 + $0x3c] sm:$0xf]
        %v1459 = vpack.c.bf16 %v1441, %v1440
        %v1476 = vunpack.c.l.b16 %v1443
        %v1477 = vunpack.c.l.b16 %v1444
        %v1478 = vunpack.c.l.b16 %v1445
        %v1479 = vunpack.c.l.b16 %v1446
        %v1480 = vunpack.c.l.b16 %v1447
        %v1481 = vunpack.c.l.b16 %v1448
        %v1482 = vunpack.c.l.b16 %v1449
        %v1483 = vunpack.c.l.b16 %v1450
        %v1484 = vunpack.c.l.b16 %v1451
        %v1485 = vunpack.c.l.b16 %v1452
        %v1486 = vunpack.c.l.b16 %v1453
        %v1487 = vunpack.c.l.b16 %v1454
        %v1488 = vunpack.c.l.b16 %v1455
        %v1489 = vunpack.c.l.b16 %v1456
        %v1490 = vunpack.c.l.b16 %v1457
        %v1491 = vunpack.c.l.b16 %v1458
        %v1492 = vpack.c.b16 %v1477, %v1476
        %v1493 = vpack.c.b16 %v1479, %v1478
        %v1494 = vpack.c.b16 %v1481, %v1480
        %v1495 = vpack.c.b16 %v1483, %v1482
        %v1496 = vpack.c.b16 %v1485, %v1484
        %v1497 = vpack.c.b16 %v1487, %v1486
        %v1498 = vpack.c.b16 %v1489, %v1488
        %v1499 = vpack.c.b16 %v1491, %v1490
        %1508 = vmatprep.subr.bf16.mxu0 0
        %1509 = vmatpush1.bf16.msra.mxu0 %v1492
        %1510 = vmatprep.subr.bf16.mxu0 0
        %1511 = vmatpush1.bf16.msra.mxu0 %v1493
        %1512 = vmatprep.subr.bf16.mxu0 0
        %1513 = vmatpush1.bf16.msra.mxu0 %v1494
        %1514 = vmatprep.subr.bf16.mxu0 0
        %1515 = vmatpush1.bf16.msra.mxu0 %v1495
        %1516 = vmatprep.subr.bf16.mxu0 0
        %1517 = vmatpush1.bf16.msra.mxu0 %v1496
        %1518 = vmatprep.subr.bf16.mxu0 0
        %1519 = vmatpush1.bf16.msra.mxu0 %v1497
        %1520 = vmatprep.subr.bf16.mxu0 0
        %1521 = vmatpush1.bf16.msra.mxu0 %v1498
        %1522 = vmatprep.subr.bf16.mxu0 0
        %1523 = vmatpush1.bf16.msra.mxu0 %v1499
        %1524 = vmatprep.subr.bf16.mxu0 0
        %1525 = vmatpush1.bf16.msra.mxu0 0
        %1526 = vmatprep.subr.bf16.mxu0 0
        %1527 = vmatpush1.bf16.msra.mxu0 0
        %1528 = vmatprep.subr.bf16.mxu0 0
        %1529 = vmatpush1.bf16.msra.mxu0 0
        %1530 = vmatprep.subr.bf16.mxu0 0
        %1531 = vmatpush1.bf16.msra.mxu0 0
        %1532 = vmatprep.subr.bf16.mxu0 0
        %1533 = vmatpush1.bf16.msra.mxu0 0
        %1534 = vmatprep.subr.bf16.mxu0 0
        %1535 = vmatpush1.bf16.msra.mxu0 0
        %1536 = vmatprep.subr.bf16.mxu0 0
        %1537 = vmatpush1.bf16.msra.mxu0 0
        %1538 = vmatprep.subr.bf16.mxu0 0
        %1539 = vmatpush1.bf16.msra.mxu0 0
        %1540 = vmatprep.mubr.bf16.mxu0 0
        %1541 = vmatmul.mubr.bf16.gmra.mrb[0].mxu0 %v1459
        %v1542 = vpop.f32.mrb[0].mxu0
        %v1543 = vadd.f32 0.0, %v1542
        %v1544 = vpop.f32.mrb[0].mxu0
        %v1545 = vpop.f32.mrb[0].mxu0
        %v1546 = vadd.f32 0.0, %v1545
        %v1547 = vpop.f32.mrb[0].mxu0
        %1548 = vdwg.mxu0
        %v1549 = vadd.f32 %v1434, %v1543
        %v1550 = vadd.f32 %v1437, %v1546
        %v1552 = vlaneseq
        %v1553 = vshrl.u32 %v1552, 7
        %v1554 = vsub.s32 0, %v1553
        %v1555 = vrot.slane %v1221, %v1554
        %v1557 = vadd.f32 %v1549, %v1555
        %v1558 = vadd.f32 %v1550, %v1555
        %vm1559 = vcmp.gt.f32.partialorder %v1557, 0.0
        %vm1560 = vcmp.gt.f32.partialorder %v1558, 0.0
        %v1561 = vmul.f32 %v1557, 0.01
        %v1562 = vmul.f32 %v1558, 0.01
        %v1563 = vsel %vm1559, %v1557, %v1561
        %v1564 = vsel %vm1560, %v1558, %v1562
        %1565 = vst [vmem:[#allocation3 + $0x8] sm:$0xff] %v1563
        %1566 = vst [vmem:[#allocation3 + $0x10] sm:$0xff] %v1564
        %s1567 = scalar_lea.vmem [#allocation10], 1
        %v1568 = vld [vmem:[%s1567] sm:$0x1]
        %v1569 = vld [vmem:[#allocation3 + $0x4] sm:$0xff]
        %v1570 = vld [vmem:[#allocation3 + $0xc] sm:$0xff]
        %s1571 = scalar_lea.vmem [#allocation9], 192
        %v1572 = vld [vmem:[%s1571] sm:$0xf]
        %v1573 = vld [vmem:[%s1571 + $0x4] sm:$0xf]
        %v1574 = vld [vmem:[%s1571 + $0x8] sm:$0xf]
        %v1575 = vld [vmem:[%s1571 + $0xc] sm:$0xf]
        %v1576 = vld [vmem:[%s1571 + $0x10] sm:$0xf]
        %v1577 = vld [vmem:[%s1571 + $0x14] sm:$0xf]
        %v1578 = vld [vmem:[%s1571 + $0x18] sm:$0xf]
        %v1579 = vld [vmem:[%s1571 + $0x1c] sm:$0xf]
        %v1580 = vld [vmem:[%s1571 + $0x20] sm:$0xf]
        %v1581 = vld [vmem:[%s1571 + $0x24] sm:$0xf]
        %v1582 = vld [vmem:[%s1571 + $0x28] sm:$0xf]
        %v1583 = vld [vmem:[%s1571 + $0x2c] sm:$0xf]
        %v1584 = vld [vmem:[%s1571 + $0x30] sm:$0xf]
        %v1585 = vld [vmem:[%s1571 + $0x34] sm:$0xf]
        %v1586 = vld [vmem:[%s1571 + $0x38] sm:$0xf]
        %v1587 = vld [vmem:[%s1571 + $0x3c] sm:$0xf]
        %v1588 = vpack.c.bf16 %v1570, %v1569
        %v1589 = vld [vmem:[#allocation3 + $0x6] sm:$0xff]
        %v1590 = vld [vmem:[#allocation3 + $0xe] sm:$0xff]
        %s1591 = scalar_lea.vmem [#allocation9], 256
        %v1592 = vld [vmem:[%s1591] sm:$0xf]
        %v1593 = vld [vmem:[%s1591 + $0x4] sm:$0xf]
        %v1594 = vld [vmem:[%s1591 + $0x8] sm:$0xf]
        %v1595 = vld [vmem:[%s1591 + $0xc] sm:$0xf]
        %v1596 = vld [vmem:[%s1591 + $0x10] sm:$0xf]
        %v1597 = vld [vmem:[%s1591 + $0x14] sm:$0xf]
        %v1598 = vld [vmem:[%s1591 + $0x18] sm:$0xf]
        %v1599 = vld [vmem:[%s1591 + $0x1c] sm:$0xf]
        %v1600 = vld [vmem:[%s1591 + $0x20] sm:$0xf]
        %v1601 = vld [vmem:[%s1591 + $0x24] sm:$0xf]
        %v1602 = vld [vmem:[%s1591 + $0x28] sm:$0xf]
        %v1603 = vld [vmem:[%s1591 + $0x2c] sm:$0xf]
        %v1604 = vld [vmem:[%s1591 + $0x30] sm:$0xf]
        %v1605 = vld [vmem:[%s1591 + $0x34] sm:$0xf]
        %v1606 = vld [vmem:[%s1591 + $0x38] sm:$0xf]
        %v1607 = vld [vmem:[%s1591 + $0x3c] sm:$0xf]
        %v1608 = vpack.c.bf16 %v1590, %v1589
        %v1625 = vunpack.c.l.b16 %v1592
        %v1626 = vunpack.c.l.b16 %v1593
        %v1627 = vunpack.c.l.b16 %v1594
        %v1628 = vunpack.c.l.b16 %v1595
        %v1629 = vunpack.c.l.b16 %v1596
        %v1630 = vunpack.c.l.b16 %v1597
        %v1631 = vunpack.c.l.b16 %v1598
        %v1632 = vunpack.c.l.b16 %v1599
        %v1633 = vunpack.c.l.b16 %v1600
        %v1634 = vunpack.c.l.b16 %v1601
        %v1635 = vunpack.c.l.b16 %v1602
        %v1636 = vunpack.c.l.b16 %v1603
        %v1637 = vunpack.c.l.b16 %v1604
        %v1638 = vunpack.c.l.b16 %v1605
        %v1639 = vunpack.c.l.b16 %v1606
        %v1640 = vunpack.c.l.b16 %v1607
        %v1641 = vpack.c.b16 %v1626, %v1625
        %v1642 = vpack.c.b16 %v1628, %v1627
        %v1643 = vpack.c.b16 %v1630, %v1629
        %v1644 = vpack.c.b16 %v1632, %v1631
        %v1645 = vpack.c.b16 %v1634, %v1633
        %v1646 = vpack.c.b16 %v1636, %v1635
        %v1647 = vpack.c.b16 %v1638, %v1637
        %v1648 = vpack.c.b16 %v1640, %v1639
        %1657 = vmatprep.subr.bf16.mxu0 0
        %1658 = vmatpush1.bf16.msra.mxu0 %v1641
        %1659 = vmatprep.subr.bf16.mxu0 0
        %1660 = vmatpush1.bf16.msra.mxu0 %v1642
        %1661 = vmatprep.subr.bf16.mxu0 0
        %1662 = vmatpush1.bf16.msra.mxu0 %v1643
        %1663 = vmatprep.subr.bf16.mxu0 0
        %1664 = vmatpush1.bf16.msra.mxu0 %v1644
        %1665 = vmatprep.subr.bf16.mxu0 0
        %1666 = vmatpush1.bf16.msra.mxu0 %v1645
        %1667 = vmatprep.subr.bf16.mxu0 0
        %1668 = vmatpush1.bf16.msra.mxu0 %v1646
        %1669 = vmatprep.subr.bf16.mxu0 0
        %1670 = vmatpush1.bf16.msra.mxu0 %v1647
        %1671 = vmatprep.subr.bf16.mxu0 0
        %1672 = vmatpush1.bf16.msra.mxu0 %v1648
        %1673 = vmatprep.subr.bf16.mxu0 0
        %1674 = vmatpush1.bf16.msra.mxu0 0
        %1675 = vmatprep.subr.bf16.mxu0 0
        %1676 = vmatpush1.bf16.msra.mxu0 0
        %1677 = vmatprep.subr.bf16.mxu0 0
        %1678 = vmatpush1.bf16.msra.mxu0 0
        %1679 = vmatprep.subr.bf16.mxu0 0
        %1680 = vmatpush1.bf16.msra.mxu0 0
        %1681 = vmatprep.subr.bf16.mxu0 0
        %1682 = vmatpush1.bf16.msra.mxu0 0
        %1683 = vmatprep.subr.bf16.mxu0 0
        %1684 = vmatpush1.bf16.msra.mxu0 0
        %1685 = vmatprep.subr.bf16.mxu0 0
        %1686 = vmatpush1.bf16.msra.mxu0 0
        %1687 = vmatprep.subr.bf16.mxu0 0
        %1688 = vmatpush1.bf16.msra.mxu0 0
        %1689 = vmatprep.mubr.bf16.mxu0 0
        %1690 = vmatmul.mubr.bf16.gmra.mrb[0].mxu0 %v1608
        %v1691 = vpop.f32.mrb[0].mxu0
        %v1692 = vadd.f32 0.0, %v1691
        %v1693 = vpop.f32.mrb[0].mxu0
        %v1694 = vpop.f32.mrb[0].mxu0
        %v1695 = vadd.f32 0.0, %v1694
        %v1696 = vpop.f32.mrb[0].mxu0
        %1697 = vdwg.mxu0
        %v1714 = vunpack.c.l.b16 %v1572
        %v1715 = vunpack.c.l.b16 %v1573
        %v1716 = vunpack.c.l.b16 %v1574
        %v1717 = vunpack.c.l.b16 %v1575
        %v1718 = vunpack.c.l.b16 %v1576
        %v1719 = vunpack.c.l.b16 %v1577
        %v1720 = vunpack.c.l.b16 %v1578
        %v1721 = vunpack.c.l.b16 %v1579
        %v1722 = vunpack.c.l.b16 %v1580
        %v1723 = vunpack.c.l.b16 %v1581
        %v1724 = vunpack.c.l.b16 %v1582
        %v1725 = vunpack.c.l.b16 %v1583
        %v1726 = vunpack.c.l.b16 %v1584
        %v1727 = vunpack.c.l.b16 %v1585
        %v1728 = vunpack.c.l.b16 %v1586
        %v1729 = vunpack.c.l.b16 %v1587
        %v1730 = vpack.c.b16 %v1715, %v1714
        %v1731 = vpack.c.b16 %v1717, %v1716
        %v1732 = vpack.c.b16 %v1719, %v1718
        %v1733 = vpack.c.b16 %v1721, %v1720
        %v1734 = vpack.c.b16 %v1723, %v1722
        %v1735 = vpack.c.b16 %v1725, %v1724
        %v1736 = vpack.c.b16 %v1727, %v1726
        %v1737 = vpack.c.b16 %v1729, %v1728
        %1746 = vmatprep.subr.bf16.mxu0 0
        %1747 = vmatpush1.bf16.msra.mxu0 %v1730
        %1748 = vmatprep.subr.bf16.mxu0 0
        %1749 = vmatpush1.bf16.msra.mxu0 %v1731
        %1750 = vmatprep.subr.bf16.mxu0 0
        %1751 = vmatpush1.bf16.msra.mxu0 %v1732
        %1752 = vmatprep.subr.bf16.mxu0 0
        %1753 = vmatpush1.bf16.msra.mxu0 %v1733
        %1754 = vmatprep.subr.bf16.mxu0 0
        %1755 = vmatpush1.bf16.msra.mxu0 %v1734
        %1756 = vmatprep.subr.bf16.mxu0 0
        %1757 = vmatpush1.bf16.msra.mxu0 %v1735
        %1758 = vmatprep.subr.bf16.mxu0 0
        %1759 = vmatpush1.bf16.msra.mxu0 %v1736
        %1760 = vmatprep.subr.bf16.mxu0 0
        %1761 = vmatpush1.bf16.msra.mxu0 %v1737
        %1762 = vmatprep.subr.bf16.mxu0 0
        %1763 = vmatpush1.bf16.msra.mxu0 0
        %1764 = vmatprep.subr.bf16.mxu0 0
        %1765 = vmatpush1.bf16.msra.mxu0 0
        %1766 = vmatprep.subr.bf16.mxu0 0
        %1767 = vmatpush1.bf16.msra.mxu0 0
        %1768 = vmatprep.subr.bf16.mxu0 0
        %1769 = vmatpush1.bf16.msra.mxu0 0
        %1770 = vmatprep.subr.bf16.mxu0 0
        %1771 = vmatpush1.bf16.msra.mxu0 0
        %1772 = vmatprep.subr.bf16.mxu0 0
        %1773 = vmatpush1.bf16.msra.mxu0 0
        %1774 = vmatprep.subr.bf16.mxu0 0
        %1775 = vmatpush1.bf16.msra.mxu0 0
        %1776 = vmatprep.subr.bf16.mxu0 0
        %1777 = vmatpush1.bf16.msra.mxu0 0
        %1778 = vmatprep.mubr.bf16.mxu0 0
        %1779 = vmatmul.mubr.bf16.gmra.mrb[0].mxu0 %v1588
        %v1780 = vpop.f32.mrb[0].mxu0
        %v1781 = vadd.f32 %v1692, %v1780
        %v1782 = vpop.f32.mrb[0].mxu0
        %v1783 = vpop.f32.mrb[0].mxu0
        %v1784 = vadd.f32 %v1695, %v1783
        %v1785 = vpop.f32.mrb[0].mxu0
        %1786 = vdwg.mxu0
        %v1787 = vld [vmem:[#allocation3 + $0x8] sm:$0xff]
        %v1788 = vld [vmem:[#allocation3 + $0x10] sm:$0xff]
        %s1789 = scalar_lea.vmem [#allocation9], 320
        %v1790 = vld [vmem:[%s1789] sm:$0xf]
        %v1791 = vld [vmem:[%s1789 + $0x4] sm:$0xf]
        %v1792 = vld [vmem:[%s1789 + $0x8] sm:$0xf]
        %v1793 = vld [vmem:[%s1789 + $0xc] sm:$0xf]
        %v1794 = vld [vmem:[%s1789 + $0x10] sm:$0xf]
        %v1795 = vld [vmem:[%s1789 + $0x14] sm:$0xf]
        %v1796 = vld [vmem:[%s1789 + $0x18] sm:$0xf]
        %v1797 = vld [vmem:[%s1789 + $0x1c] sm:$0xf]
        %v1798 = vld [vmem:[%s1789 + $0x20] sm:$0xf]
        %v1799 = vld [vmem:[%s1789 + $0x24] sm:$0xf]
        %v1800 = vld [vmem:[%s1789 + $0x28] sm:$0xf]
        %v1801 = vld [vmem:[%s1789 + $0x2c] sm:$0xf]
        %v1802 = vld [vmem:[%s1789 + $0x30] sm:$0xf]
        %v1803 = vld [vmem:[%s1789 + $0x34] sm:$0xf]
        %v1804 = vld [vmem:[%s1789 + $0x38] sm:$0xf]
        %v1805 = vld [vmem:[%s1789 + $0x3c] sm:$0xf]
        %v1806 = vpack.c.bf16 %v1788, %v1787
        %v1823 = vunpack.c.l.b16 %v1790
        %v1824 = vunpack.c.l.b16 %v1791
        %v1825 = vunpack.c.l.b16 %v1792
        %v1826 = vunpack.c.l.b16 %v1793
        %v1827 = vunpack.c.l.b16 %v1794
        %v1828 = vunpack.c.l.b16 %v1795
        %v1829 = vunpack.c.l.b16 %v1796
        %v1830 = vunpack.c.l.b16 %v1797
        %v1831 = vunpack.c.l.b16 %v1798
        %v1832 = vunpack.c.l.b16 %v1799
        %v1833 = vunpack.c.l.b16 %v1800
        %v1834 = vunpack.c.l.b16 %v1801
        %v1835 = vunpack.c.l.b16 %v1802
        %v1836 = vunpack.c.l.b16 %v1803
        %v1837 = vunpack.c.l.b16 %v1804
        %v1838 = vunpack.c.l.b16 %v1805
        %v1839 = vpack.c.b16 %v1824, %v1823
        %v1840 = vpack.c.b16 %v1826, %v1825
        %v1841 = vpack.c.b16 %v1828, %v1827
        %v1842 = vpack.c.b16 %v1830, %v1829
        %v1843 = vpack.c.b16 %v1832, %v1831
        %v1844 = vpack.c.b16 %v1834, %v1833
        %v1845 = vpack.c.b16 %v1836, %v1835
        %v1846 = vpack.c.b16 %v1838, %v1837
        %1855 = vmatprep.subr.bf16.mxu0 0
        %1856 = vmatpush1.bf16.msra.mxu0 %v1839
        %1857 = vmatprep.subr.bf16.mxu0 0
        %1858 = vmatpush1.bf16.msra.mxu0 %v1840
        %1859 = vmatprep.subr.bf16.mxu0 0
        %1860 = vmatpush1.bf16.msra.mxu0 %v1841
        %1861 = vmatprep.subr.bf16.mxu0 0
        %1862 = vmatpush1.bf16.msra.mxu0 %v1842
        %1863 = vmatprep.subr.bf16.mxu0 0
        %1864 = vmatpush1.bf16.msra.mxu0 %v1843
        %1865 = vmatprep.subr.bf16.mxu0 0
        %1866 = vmatpush1.bf16.msra.mxu0 %v1844
        %1867 = vmatprep.subr.bf16.mxu0 0
        %1868 = vmatpush1.bf16.msra.mxu0 %v1845
        %1869 = vmatprep.subr.bf16.mxu0 0
        %1870 = vmatpush1.bf16.msra.mxu0 %v1846
        %1871 = vmatprep.subr.bf16.mxu0 0
        %1872 = vmatpush1.bf16.msra.mxu0 0
        %1873 = vmatprep.subr.bf16.mxu0 0
        %1874 = vmatpush1.bf16.msra.mxu0 0
        %1875 = vmatprep.subr.bf16.mxu0 0
        %1876 = vmatpush1.bf16.msra.mxu0 0
        %1877 = vmatprep.subr.bf16.mxu0 0
        %1878 = vmatpush1.bf16.msra.mxu0 0
        %1879 = vmatprep.subr.bf16.mxu0 0
        %1880 = vmatpush1.bf16.msra.mxu0 0
        %1881 = vmatprep.subr.bf16.mxu0 0
        %1882 = vmatpush1.bf16.msra.mxu0 0
        %1883 = vmatprep.subr.bf16.mxu0 0
        %1884 = vmatpush1.bf16.msra.mxu0 0
        %1885 = vmatprep.subr.bf16.mxu0 0
        %1886 = vmatpush1.bf16.msra.mxu0 0
        %1887 = vmatprep.mubr.bf16.mxu0 0
        %1888 = vmatmul.mubr.bf16.gmra.mrb[0].mxu0 %v1806
        %v1889 = vpop.f32.mrb[0].mxu0
        %v1890 = vadd.f32 0.0, %v1889
        %v1891 = vpop.f32.mrb[0].mxu0
        %v1892 = vpop.f32.mrb[0].mxu0
        %v1893 = vadd.f32 0.0, %v1892
        %v1894 = vpop.f32.mrb[0].mxu0
        %1895 = vdwg.mxu0
        %v1896 = vadd.f32 %v1781, %v1890
        %v1897 = vadd.f32 %v1784, %v1893
        %v1899 = vlaneseq
        %v1900 = vshrl.u32 %v1899, 7
        %v1901 = vsub.s32 0, %v1900
        %v1902 = vrot.slane %v1568, %v1901
        %v1904 = vadd.f32 %v1896, %v1902
        %v1905 = vadd.f32 %v1897, %v1902
        %vm1906 = vcmp.gt.f32.partialorder %v1904, 0.0
        %vm1907 = vcmp.gt.f32.partialorder %v1905, 0.0
        %v1908 = vmul.f32 %v1904, 0.01
        %v1909 = vmul.f32 %v1905, 0.01
        %v1910 = vsel %vm1906, %v1904, %v1908
        %v1911 = vsel %vm1907, %v1905, %v1909
        %v1912 = vld [vmem:[#allocation2 + $0x8] sm:$0xff]
        %v1913 = vld [vmem:[#allocation2 + $0x10] sm:$0xff]
        %v1914 = vadd.f32 %v1910, %v1912
        %v1915 = vadd.f32 %v1911, %v1913
        %1916 = vst [vmem:[#allocation2 + $0x8] sm:$0xff] %v1914
        %1917 = vst [vmem:[#allocation2 + $0x10] sm:$0xff] %v1915
        %s1918 = scalar_lea.vmem [#allocation7], 2
        %v1919 = vld [vmem:[%s1918] sm:$0x1]
        %v1920 = vld [vmem:[#allocation2] sm:$0xff]
        %v1921 = vld [vmem:[#allocation2 + $0x8] sm:$0xff]
        %s1922 = scalar_lea.vmem [#allocation4], 384
        %v1923 = vld [vmem:[%s1922] sm:$0xf]
        %v1924 = vld [vmem:[%s1922 + $0x4] sm:$0xf]
        %v1925 = vld [vmem:[%s1922 + $0x8] sm:$0xf]
        %v1926 = vld [vmem:[%s1922 + $0xc] sm:$0xf]
        %v1927 = vld [vmem:[%s1922 + $0x10] sm:$0xf]
        %v1928 = vld [vmem:[%s1922 + $0x14] sm:$0xf]
        %v1929 = vld [vmem:[%s1922 + $0x18] sm:$0xf]
        %v1930 = vld [vmem:[%s1922 + $0x1c] sm:$0xf]
        %v1931 = vld [vmem:[%s1922 + $0x20] sm:$0xf]
        %v1932 = vld [vmem:[%s1922 + $0x24] sm:$0xf]
        %v1933 = vld [vmem:[%s1922 + $0x28] sm:$0xf]
        %v1934 = vld [vmem:[%s1922 + $0x2c] sm:$0xf]
        %v1935 = vld [vmem:[%s1922 + $0x30] sm:$0xf]
        %v1936 = vld [vmem:[%s1922 + $0x34] sm:$0xf]
        %v1937 = vld [vmem:[%s1922 + $0x38] sm:$0xf]
        %v1938 = vld [vmem:[%s1922 + $0x3c] sm:$0xf]
        %v1939 = vpack.c.bf16 %v1921, %v1920
        %v1940 = vld [vmem:[#allocation2 + $0x4] sm:$0xff]
        %v1941 = vld [vmem:[#allocation2 + $0xc] sm:$0xff]
        %s1942 = scalar_lea.vmem [#allocation4], 448
        %v1943 = vld [vmem:[%s1942] sm:$0xf]
        %v1944 = vld [vmem:[%s1942 + $0x4] sm:$0xf]
        %v1945 = vld [vmem:[%s1942 + $0x8] sm:$0xf]
        %v1946 = vld [vmem:[%s1942 + $0xc] sm:$0xf]
        %v1947 = vld [vmem:[%s1942 + $0x10] sm:$0xf]
        %v1948 = vld [vmem:[%s1942 + $0x14] sm:$0xf]
        %v1949 = vld [vmem:[%s1942 + $0x18] sm:$0xf]
        %v1950 = vld [vmem:[%s1942 + $0x1c] sm:$0xf]
        %v1951 = vld [vmem:[%s1942 + $0x20] sm:$0xf]
        %v1952 = vld [vmem:[%s1942 + $0x24] sm:$0xf]
        %v1953 = vld [vmem:[%s1942 + $0x28] sm:$0xf]
        %v1954 = vld [vmem:[%s1942 + $0x2c] sm:$0xf]
        %v1955 = vld [vmem:[%s1942 + $0x30] sm:$0xf]
        %v1956 = vld [vmem:[%s1942 + $0x34] sm:$0xf]
        %v1957 = vld [vmem:[%s1942 + $0x38] sm:$0xf]
        %v1958 = vld [vmem:[%s1942 + $0x3c] sm:$0xf]
        %v1959 = vpack.c.bf16 %v1941, %v1940
        %v1976 = vunpack.c.l.b16 %v1943
        %v1977 = vunpack.c.l.b16 %v1944
        %v1978 = vunpack.c.l.b16 %v1945
        %v1979 = vunpack.c.l.b16 %v1946
        %v1980 = vunpack.c.l.b16 %v1947
        %v1981 = vunpack.c.l.b16 %v1948
        %v1982 = vunpack.c.l.b16 %v1949
        %v1983 = vunpack.c.l.b16 %v1950
        %v1984 = vunpack.c.l.b16 %v1951
        %v1985 = vunpack.c.l.b16 %v1952
        %v1986 = vunpack.c.l.b16 %v1953
        %v1987 = vunpack.c.l.b16 %v1954
        %v1988 = vunpack.c.l.b16 %v1955
        %v1989 = vunpack.c.l.b16 %v1956
        %v1990 = vunpack.c.l.b16 %v1957
        %v1991 = vunpack.c.l.b16 %v1958
        %v1992 = vpack.c.b16 %v1977, %v1976
        %v1993 = vpack.c.b16 %v1979, %v1978
        %v1994 = vpack.c.b16 %v1981, %v1980
        %v1995 = vpack.c.b16 %v1983, %v1982
        %v1996 = vpack.c.b16 %v1985, %v1984
        %v1997 = vpack.c.b16 %v1987, %v1986
        %v1998 = vpack.c.b16 %v1989, %v1988
        %v1999 = vpack.c.b16 %v1991, %v1990
        %2008 = vmatprep.subr.bf16.mxu0 0
        %2009 = vmatpush1.bf16.msra.mxu0 %v1992
        %2010 = vmatprep.subr.bf16.mxu0 0
        %2011 = vmatpush1.bf16.msra.mxu0 %v1993
        %2012 = vmatprep.subr.bf16.mxu0 0
        %2013 = vmatpush1.bf16.msra.mxu0 %v1994
        %2014 = vmatprep.subr.bf16.mxu0 0
        %2015 = vmatpush1.bf16.msra.mxu0 %v1995
        %2016 = vmatprep.subr.bf16.mxu0 0
        %2017 = vmatpush1.bf16.msra.mxu0 %v1996
        %2018 = vmatprep.subr.bf16.mxu0 0
        %2019 = vmatpush1.bf16.msra.mxu0 %v1997
        %2020 = vmatprep.subr.bf16.mxu0 0
        %2021 = vmatpush1.bf16.msra.mxu0 %v1998
        %2022 = vmatprep.subr.bf16.mxu0 0
        %2023 = vmatpush1.bf16.msra.mxu0 %v1999
        %2024 = vmatprep.subr.bf16.mxu0 0
        %2025 = vmatpush1.bf16.msra.mxu0 0
        %2026 = vmatprep.subr.bf16.mxu0 0
        %2027 = vmatpush1.bf16.msra.mxu0 0
        %2028 = vmatprep.subr.bf16.mxu0 0
        %2029 = vmatpush1.bf16.msra.mxu0 0
        %2030 = vmatprep.subr.bf16.mxu0 0
        %2031 = vmatpush1.bf16.msra.mxu0 0
        %2032 = vmatprep.subr.bf16.mxu0 0
        %2033 = vmatpush1.bf16.msra.mxu0 0
        %2034 = vmatprep.subr.bf16.mxu0 0
        %2035 = vmatpush1.bf16.msra.mxu0 0
        %2036 = vmatprep.subr.bf16.mxu0 0
        %2037 = vmatpush1.bf16.msra.mxu0 0
        %2038 = vmatprep.subr.bf16.mxu0 0
        %2039 = vmatpush1.bf16.msra.mxu0 0
        %2040 = vmatprep.mubr.bf16.mxu0 0
        %2041 = vmatmul.mubr.bf16.gmra.mrb[0].mxu0 %v1959
        %v2042 = vpop.f32.mrb[0].mxu0
        %v2043 = vadd.f32 0.0, %v2042
        %v2044 = vpop.f32.mrb[0].mxu0
        %v2045 = vpop.f32.mrb[0].mxu0
        %v2046 = vadd.f32 0.0, %v2045
        %v2047 = vpop.f32.mrb[0].mxu0
        %2048 = vdwg.mxu0
        %v2065 = vunpack.c.l.b16 %v1923
        %v2066 = vunpack.c.l.b16 %v1924
        %v2067 = vunpack.c.l.b16 %v1925
        %v2068 = vunpack.c.l.b16 %v1926
        %v2069 = vunpack.c.l.b16 %v1927
        %v2070 = vunpack.c.l.b16 %v1928
        %v2071 = vunpack.c.l.b16 %v1929
        %v2072 = vunpack.c.l.b16 %v1930
        %v2073 = vunpack.c.l.b16 %v1931
        %v2074 = vunpack.c.l.b16 %v1932
        %v2075 = vunpack.c.l.b16 %v1933
        %v2076 = vunpack.c.l.b16 %v1934
        %v2077 = vunpack.c.l.b16 %v1935
        %v2078 = vunpack.c.l.b16 %v1936
        %v2079 = vunpack.c.l.b16 %v1937
        %v2080 = vunpack.c.l.b16 %v1938
        %v2081 = vpack.c.b16 %v2066, %v2065
        %v2082 = vpack.c.b16 %v2068, %v2067
        %v2083 = vpack.c.b16 %v2070, %v2069
        %v2084 = vpack.c.b16 %v2072, %v2071
        %v2085 = vpack.c.b16 %v2074, %v2073
        %v2086 = vpack.c.b16 %v2076, %v2075
        %v2087 = vpack.c.b16 %v2078, %v2077
        %v2088 = vpack.c.b16 %v2080, %v2079
        %2097 = vmatprep.subr.bf16.mxu0 0
        %2098 = vmatpush1.bf16.msra.mxu0 %v2081
        %2099 = vmatprep.subr.bf16.mxu0 0
        %2100 = vmatpush1.bf16.msra.mxu0 %v2082
        %2101 = vmatprep.subr.bf16.mxu0 0
        %2102 = vmatpush1.bf16.msra.mxu0 %v2083
        %2103 = vmatprep.subr.bf16.mxu0 0
        %2104 = vmatpush1.bf16.msra.mxu0 %v2084
        %2105 = vmatprep.subr.bf16.mxu0 0
        %2106 = vmatpush1.bf16.msra.mxu0 %v2085
        %2107 = vmatprep.subr.bf16.mxu0 0
        %2108 = vmatpush1.bf16.msra.mxu0 %v2086
        %2109 = vmatprep.subr.bf16.mxu0 0
        %2110 = vmatpush1.bf16.msra.mxu0 %v2087
        %2111 = vmatprep.subr.bf16.mxu0 0
        %2112 = vmatpush1.bf16.msra.mxu0 %v2088
        %2113 = vmatprep.subr.bf16.mxu0 0
        %2114 = vmatpush1.bf16.msra.mxu0 0
        %2115 = vmatprep.subr.bf16.mxu0 0
        %2116 = vmatpush1.bf16.msra.mxu0 0
        %2117 = vmatprep.subr.bf16.mxu0 0
        %2118 = vmatpush1.bf16.msra.mxu0 0
        %2119 = vmatprep.subr.bf16.mxu0 0
        %2120 = vmatpush1.bf16.msra.mxu0 0
        %2121 = vmatprep.subr.bf16.mxu0 0
        %2122 = vmatpush1.bf16.msra.mxu0 0
        %2123 = vmatprep.subr.bf16.mxu0 0
        %2124 = vmatpush1.bf16.msra.mxu0 0
        %2125 = vmatprep.subr.bf16.mxu0 0
        %2126 = vmatpush1.bf16.msra.mxu0 0
        %2127 = vmatprep.subr.bf16.mxu0 0
        %2128 = vmatpush1.bf16.msra.mxu0 0
        %2129 = vmatprep.mubr.bf16.mxu0 0
        %2130 = vmatmul.mubr.bf16.gmra.mrb[0].mxu0 %v1939
        %v2131 = vpop.f32.mrb[0].mxu0
        %v2132 = vadd.f32 %v2043, %v2131
        %v2133 = vpop.f32.mrb[0].mxu0
        %v2134 = vpop.f32.mrb[0].mxu0
        %v2135 = vadd.f32 %v2046, %v2134
        %v2136 = vpop.f32.mrb[0].mxu0
        %2137 = vdwg.mxu0
        %v2138 = vld [vmem:[#allocation2 + $0x8] sm:$0xff]
        %v2139 = vld [vmem:[#allocation2 + $0x10] sm:$0xff]
        %s2140 = scalar_lea.vmem [#allocation4], 512
        %v2141 = vld [vmem:[%s2140] sm:$0xf]
        %v2142 = vld [vmem:[%s2140 + $0x4] sm:$0xf]
        %v2143 = vld [vmem:[%s2140 + $0x8] sm:$0xf]
        %v2144 = vld [vmem:[%s2140 + $0xc] sm:$0xf]
        %v2145 = vld [vmem:[%s2140 + $0x10] sm:$0xf]
        %v2146 = vld [vmem:[%s2140 + $0x14] sm:$0xf]
        %v2147 = vld [vmem:[%s2140 + $0x18] sm:$0xf]
        %v2148 = vld [vmem:[%s2140 + $0x1c] sm:$0xf]
        %v2149 = vld [vmem:[%s2140 + $0x20] sm:$0xf]
        %v2150 = vld [vmem:[%s2140 + $0x24] sm:$0xf]
        %v2151 = vld [vmem:[%s2140 + $0x28] sm:$0xf]
        %v2152 = vld [vmem:[%s2140 + $0x2c] sm:$0xf]
        %v2153 = vld [vmem:[%s2140 + $0x30] sm:$0xf]
        %v2154 = vld [vmem:[%s2140 + $0x34] sm:$0xf]
        %v2155 = vld [vmem:[%s2140 + $0x38] sm:$0xf]
        %v2156 = vld [vmem:[%s2140 + $0x3c] sm:$0xf]
        %v2157 = vpack.c.bf16 %v2139, %v2138
        %v2174 = vunpack.c.l.b16 %v2141
        %v2175 = vunpack.c.l.b16 %v2142
        %v2176 = vunpack.c.l.b16 %v2143
        %v2177 = vunpack.c.l.b16 %v2144
        %v2178 = vunpack.c.l.b16 %v2145
        %v2179 = vunpack.c.l.b16 %v2146
        %v2180 = vunpack.c.l.b16 %v2147
        %v2181 = vunpack.c.l.b16 %v2148
        %v2182 = vunpack.c.l.b16 %v2149
        %v2183 = vunpack.c.l.b16 %v2150
        %v2184 = vunpack.c.l.b16 %v2151
        %v2185 = vunpack.c.l.b16 %v2152
        %v2186 = vunpack.c.l.b16 %v2153
        %v2187 = vunpack.c.l.b16 %v2154
        %v2188 = vunpack.c.l.b16 %v2155
        %v2189 = vunpack.c.l.b16 %v2156
        %v2190 = vpack.c.b16 %v2175, %v2174
        %v2191 = vpack.c.b16 %v2177, %v2176
        %v2192 = vpack.c.b16 %v2179, %v2178
        %v2193 = vpack.c.b16 %v2181, %v2180
        %v2194 = vpack.c.b16 %v2183, %v2182
        %v2195 = vpack.c.b16 %v2185, %v2184
        %v2196 = vpack.c.b16 %v2187, %v2186
        %v2197 = vpack.c.b16 %v2189, %v2188
        %2206 = vmatprep.subr.bf16.mxu0 0
        %2207 = vmatpush1.bf16.msra.mxu0 %v2190
        %2208 = vmatprep.subr.bf16.mxu0 0
        %2209 = vmatpush1.bf16.msra.mxu0 %v2191
        %2210 = vmatprep.subr.bf16.mxu0 0
        %2211 = vmatpush1.bf16.msra.mxu0 %v2192
        %2212 = vmatprep.subr.bf16.mxu0 0
        %2213 = vmatpush1.bf16.msra.mxu0 %v2193
        %2214 = vmatprep.subr.bf16.mxu0 0
        %2215 = vmatpush1.bf16.msra.mxu0 %v2194
        %2216 = vmatprep.subr.bf16.mxu0 0
        %2217 = vmatpush1.bf16.msra.mxu0 %v2195
        %2218 = vmatprep.subr.bf16.mxu0 0
        %2219 = vmatpush1.bf16.msra.mxu0 %v2196
        %2220 = vmatprep.subr.bf16.mxu0 0
        %2221 = vmatpush1.bf16.msra.mxu0 %v2197
        %2222 = vmatprep.subr.bf16.mxu0 0
        %2223 = vmatpush1.bf16.msra.mxu0 0
        %2224 = vmatprep.subr.bf16.mxu0 0
        %2225 = vmatpush1.bf16.msra.mxu0 0
        %2226 = vmatprep.subr.bf16.mxu0 0
        %2227 = vmatpush1.bf16.msra.mxu0 0
        %2228 = vmatprep.subr.bf16.mxu0 0
        %2229 = vmatpush1.bf16.msra.mxu0 0
        %2230 = vmatprep.subr.bf16.mxu0 0
        %2231 = vmatpush1.bf16.msra.mxu0 0
        %2232 = vmatprep.subr.bf16.mxu0 0
        %2233 = vmatpush1.bf16.msra.mxu0 0
        %2234 = vmatprep.subr.bf16.mxu0 0
        %2235 = vmatpush1.bf16.msra.mxu0 0
        %2236 = vmatprep.subr.bf16.mxu0 0
        %2237 = vmatpush1.bf16.msra.mxu0 0
        %2238 = vmatprep.mubr.bf16.mxu0 0
        %2239 = vmatmul.mubr.bf16.gmra.mrb[0].mxu0 %v2157
        %v2240 = vpop.f32.mrb[0].mxu0
        %v2241 = vadd.f32 0.0, %v2240
        %v2242 = vpop.f32.mrb[0].mxu0
        %v2243 = vpop.f32.mrb[0].mxu0
        %v2244 = vadd.f32 0.0, %v2243
        %v2245 = vpop.f32.mrb[0].mxu0
        %2246 = vdwg.mxu0
        %v2247 = vadd.f32 %v2132, %v2241
        %v2248 = vadd.f32 %v2135, %v2244
        %v2250 = vlaneseq
        %v2251 = vshrl.u32 %v2250, 7
        %v2252 = vsub.s32 0, %v2251
        %v2253 = vrot.slane %v1919, %v2252
        %v2255 = vadd.f32 %v2247, %v2253
        %v2256 = vadd.f32 %v2248, %v2253
        %vm2257 = vcmp.gt.f32.partialorder %v2255, 0.0
        %vm2258 = vcmp.gt.f32.partialorder %v2256, 0.0
        %v2259 = vmul.f32 %v2255, 0.01
        %v2260 = vmul.f32 %v2256, 0.01
        %v2261 = vsel %vm2257, %v2255, %v2259
        %v2262 = vsel %vm2258, %v2256, %v2260
        %2263 = vst [vmem:[#allocation3 + $0x8] sm:$0xff] %v2261
        %2264 = vst [vmem:[#allocation3 + $0x10] sm:$0xff] %v2262
        %s2265 = scalar_lea.vmem [#allocation10], 2
        %v2266 = vld [vmem:[%s2265] sm:$0x1]
        %v2267 = vld [vmem:[#allocation3] sm:$0xff]
        %v2268 = vld [vmem:[#allocation3 + $0x8] sm:$0xff]
        %s2269 = scalar_lea.vmem [#allocation9], 384
        %v2270 = vld [vmem:[%s2269] sm:$0xf]
        %v2271 = vld [vmem:[%s2269 + $0x4] sm:$0xf]
        %v2272 = vld [vmem:[%s2269 + $0x8] sm:$0xf]
        %v2273 = vld [vmem:[%s2269 + $0xc] sm:$0xf]
        %v2274 = vld [vmem:[%s2269 + $0x10] sm:$0xf]
        %v2275 = vld [vmem:[%s2269 + $0x14] sm:$0xf]
        %v2276 = vld [vmem:[%s2269 + $0x18] sm:$0xf]
        %v2277 = vld [vmem:[%s2269 + $0x1c] sm:$0xf]
        %v2278 = vld [vmem:[%s2269 + $0x20] sm:$0xf]
        %v2279 = vld [vmem:[%s2269 + $0x24] sm:$0xf]
        %v2280 = vld [vmem:[%s2269 + $0x28] sm:$0xf]
        %v2281 = vld [vmem:[%s2269 + $0x2c] sm:$0xf]
        %v2282 = vld [vmem:[%s2269 + $0x30] sm:$0xf]
        %v2283 = vld [vmem:[%s2269 + $0x34] sm:$0xf]
        %v2284 = vld [vmem:[%s2269 + $0x38] sm:$0xf]
        %v2285 = vld [vmem:[%s2269 + $0x3c] sm:$0xf]
        %v2286 = vpack.c.bf16 %v2268, %v2267
        %v2287 = vld [vmem:[#allocation3 + $0x4] sm:$0xff]
        %v2288 = vld [vmem:[#allocation3 + $0xc] sm:$0xff]
        %s2289 = scalar_lea.vmem [#allocation9], 448
        %v2290 = vld [vmem:[%s2289] sm:$0xf]
        %v2291 = vld [vmem:[%s2289 + $0x4] sm:$0xf]
        %v2292 = vld [vmem:[%s2289 + $0x8] sm:$0xf]
        %v2293 = vld [vmem:[%s2289 + $0xc] sm:$0xf]
        %v2294 = vld [vmem:[%s2289 + $0x10] sm:$0xf]
        %v2295 = vld [vmem:[%s2289 + $0x14] sm:$0xf]
        %v2296 = vld [vmem:[%s2289 + $0x18] sm:$0xf]
        %v2297 = vld [vmem:[%s2289 + $0x1c] sm:$0xf]
        %v2298 = vld [vmem:[%s2289 + $0x20] sm:$0xf]
        %v2299 = vld [vmem:[%s2289 + $0x24] sm:$0xf]
        %v2300 = vld [vmem:[%s2289 + $0x28] sm:$0xf]
        %v2301 = vld [vmem:[%s2289 + $0x2c] sm:$0xf]
        %v2302 = vld [vmem:[%s2289 + $0x30] sm:$0xf]
        %v2303 = vld [vmem:[%s2289 + $0x34] sm:$0xf]
        %v2304 = vld [vmem:[%s2289 + $0x38] sm:$0xf]
        %v2305 = vld [vmem:[%s2289 + $0x3c] sm:$0xf]
        %v2306 = vpack.c.bf16 %v2288, %v2287
        %v2323 = vunpack.c.l.b16 %v2290
        %v2324 = vunpack.c.l.b16 %v2291
        %v2325 = vunpack.c.l.b16 %v2292
        %v2326 = vunpack.c.l.b16 %v2293
        %v2327 = vunpack.c.l.b16 %v2294
        %v2328 = vunpack.c.l.b16 %v2295
        %v2329 = vunpack.c.l.b16 %v2296
        %v2330 = vunpack.c.l.b16 %v2297
        %v2331 = vunpack.c.l.b16 %v2298
        %v2332 = vunpack.c.l.b16 %v2299
        %v2333 = vunpack.c.l.b16 %v2300
        %v2334 = vunpack.c.l.b16 %v2301
        %v2335 = vunpack.c.l.b16 %v2302
        %v2336 = vunpack.c.l.b16 %v2303
        %v2337 = vunpack.c.l.b16 %v2304
        %v2338 = vunpack.c.l.b16 %v2305
        %v2339 = vpack.c.b16 %v2324, %v2323
        %v2340 = vpack.c.b16 %v2326, %v2325
        %v2341 = vpack.c.b16 %v2328, %v2327
        %v2342 = vpack.c.b16 %v2330, %v2329
        %v2343 = vpack.c.b16 %v2332, %v2331
        %v2344 = vpack.c.b16 %v2334, %v2333
        %v2345 = vpack.c.b16 %v2336, %v2335
        %v2346 = vpack.c.b16 %v2338, %v2337
        %2355 = vmatprep.subr.bf16.mxu0 0
        %2356 = vmatpush1.bf16.msra.mxu0 %v2339
        %2357 = vmatprep.subr.bf16.mxu0 0
        %2358 = vmatpush1.bf16.msra.mxu0 %v2340
        %2359 = vmatprep.subr.bf16.mxu0 0
        %2360 = vmatpush1.bf16.msra.mxu0 %v2341
        %2361 = vmatprep.subr.bf16.mxu0 0
        %2362 = vmatpush1.bf16.msra.mxu0 %v2342
        %2363 = vmatprep.subr.bf16.mxu0 0
        %2364 = vmatpush1.bf16.msra.mxu0 %v2343
        %2365 = vmatprep.subr.bf16.mxu0 0
        %2366 = vmatpush1.bf16.msra.mxu0 %v2344
        %2367 = vmatprep.subr.bf16.mxu0 0
        %2368 = vmatpush1.bf16.msra.mxu0 %v2345
        %2369 = vmatprep.subr.bf16.mxu0 0
        %2370 = vmatpush1.bf16.msra.mxu0 %v2346
        %2371 = vmatprep.subr.bf16.mxu0 0
        %2372 = vmatpush1.bf16.msra.mxu0 0
        %2373 = vmatprep.subr.bf16.mxu0 0
        %2374 = vmatpush1.bf16.msra.mxu0 0
        %2375 = vmatprep.subr.bf16.mxu0 0
        %2376 = vmatpush1.bf16.msra.mxu0 0
        %2377 = vmatprep.subr.bf16.mxu0 0
        %2378 = vmatpush1.bf16.msra.mxu0 0
        %2379 = vmatprep.subr.bf16.mxu0 0
        %2380 = vmatpush1.bf16.msra.mxu0 0
        %2381 = vmatprep.subr.bf16.mxu0 0
        %2382 = vmatpush1.bf16.msra.mxu0 0
        %2383 = vmatprep.subr.bf16.mxu0 0
        %2384 = vmatpush1.bf16.msra.mxu0 0
        %2385 = vmatprep.subr.bf16.mxu0 0
        %2386 = vmatpush1.bf16.msra.mxu0 0
        %2387 = vmatprep.mubr.bf16.mxu0 0
        %2388 = vmatmul.mubr.bf16.gmra.mrb[0].mxu0 %v2306
        %v2389 = vpop.f32.mrb[0].mxu0
        %v2390 = vadd.f32 0.0, %v2389
        %v2391 = vpop.f32.mrb[0].mxu0
        %v2392 = vpop.f32.mrb[0].mxu0
        %v2393 = vadd.f32 0.0, %v2392
        %v2394 = vpop.f32.mrb[0].mxu0
        %2395 = vdwg.mxu0
        %v2412 = vunpack.c.l.b16 %v2270
        %v2413 = vunpack.c.l.b16 %v2271
        %v2414 = vunpack.c.l.b16 %v2272
        %v2415 = vunpack.c.l.b16 %v2273
        %v2416 = vunpack.c.l.b16 %v2274
        %v2417 = vunpack.c.l.b16 %v2275
        %v2418 = vunpack.c.l.b16 %v2276
        %v2419 = vunpack.c.l.b16 %v2277
        %v2420 = vunpack.c.l.b16 %v2278
        %v2421 = vunpack.c.l.b16 %v2279
        %v2422 = vunpack.c.l.b16 %v2280
        %v2423 = vunpack.c.l.b16 %v2281
        %v2424 = vunpack.c.l.b16 %v2282
        %v2425 = vunpack.c.l.b16 %v2283
        %v2426 = vunpack.c.l.b16 %v2284
        %v2427 = vunpack.c.l.b16 %v2285
        %v2428 = vpack.c.b16 %v2413, %v2412
        %v2429 = vpack.c.b16 %v2415, %v2414
        %v2430 = vpack.c.b16 %v2417, %v2416
        %v2431 = vpack.c.b16 %v2419, %v2418
        %v2432 = vpack.c.b16 %v2421, %v2420
        %v2433 = vpack.c.b16 %v2423, %v2422
        %v2434 = vpack.c.b16 %v2425, %v2424
        %v2435 = vpack.c.b16 %v2427, %v2426
        %2444 = vmatprep.subr.bf16.mxu0 0
        %2445 = vmatpush1.bf16.msra.mxu0 %v2428
        %2446 = vmatprep.subr.bf16.mxu0 0
        %2447 = vmatpush1.bf16.msra.mxu0 %v2429
        %2448 = vmatprep.subr.bf16.mxu0 0
        %2449 = vmatpush1.bf16.msra.mxu0 %v2430
        %2450 = vmatprep.subr.bf16.mxu0 0
        %2451 = vmatpush1.bf16.msra.mxu0 %v2431
        %2452 = vmatprep.subr.bf16.mxu0 0
        %2453 = vmatpush1.bf16.msra.mxu0 %v2432
        %2454 = vmatprep.subr.bf16.mxu0 0
        %2455 = vmatpush1.bf16.msra.mxu0 %v2433
        %2456 = vmatprep.subr.bf16.mxu0 0
        %2457 = vmatpush1.bf16.msra.mxu0 %v2434
        %2458 = vmatprep.subr.bf16.mxu0 0
        %2459 = vmatpush1.bf16.msra.mxu0 %v2435
        %2460 = vmatprep.subr.bf16.mxu0 0
        %2461 = vmatpush1.bf16.msra.mxu0 0
        %2462 = vmatprep.subr.bf16.mxu0 0
        %2463 = vmatpush1.bf16.msra.mxu0 0
        %2464 = vmatprep.subr.bf16.mxu0 0
        %2465 = vmatpush1.bf16.msra.mxu0 0
        %2466 = vmatprep.subr.bf16.mxu0 0
        %2467 = vmatpush1.bf16.msra.mxu0 0
        %2468 = vmatprep.subr.bf16.mxu0 0
        %2469 = vmatpush1.bf16.msra.mxu0 0
        %2470 = vmatprep.subr.bf16.mxu0 0
        %2471 = vmatpush1.bf16.msra.mxu0 0
        %2472 = vmatprep.subr.bf16.mxu0 0
        %2473 = vmatpush1.bf16.msra.mxu0 0
        %2474 = vmatprep.subr.bf16.mxu0 0
        %2475 = vmatpush1.bf16.msra.mxu0 0
        %2476 = vmatprep.mubr.bf16.mxu0 0
        %2477 = vmatmul.mubr.bf16.gmra.mrb[0].mxu0 %v2286
        %v2478 = vpop.f32.mrb[0].mxu0
        %v2479 = vadd.f32 %v2390, %v2478
        %v2480 = vpop.f32.mrb[0].mxu0
        %v2481 = vpop.f32.mrb[0].mxu0
        %v2482 = vadd.f32 %v2393, %v2481
        %v2483 = vpop.f32.mrb[0].mxu0
        %2484 = vdwg.mxu0
        %v2485 = vld [vmem:[#allocation3 + $0x8] sm:$0xff]
        %v2486 = vld [vmem:[#allocation3 + $0x10] sm:$0xff]
        %s2487 = scalar_lea.vmem [#allocation9], 512
        %v2488 = vld [vmem:[%s2487] sm:$0xf]
        %v2489 = vld [vmem:[%s2487 + $0x4] sm:$0xf]
        %v2490 = vld [vmem:[%s2487 + $0x8] sm:$0xf]
        %v2491 = vld [vmem:[%s2487 + $0xc] sm:$0xf]
        %v2492 = vld [vmem:[%s2487 + $0x10] sm:$0xf]
        %v2493 = vld [vmem:[%s2487 + $0x14] sm:$0xf]
        %v2494 = vld [vmem:[%s2487 + $0x18] sm:$0xf]
        %v2495 = vld [vmem:[%s2487 + $0x1c] sm:$0xf]
        %v2496 = vld [vmem:[%s2487 + $0x20] sm:$0xf]
        %v2497 = vld [vmem:[%s2487 + $0x24] sm:$0xf]
        %v2498 = vld [vmem:[%s2487 + $0x28] sm:$0xf]
        %v2499 = vld [vmem:[%s2487 + $0x2c] sm:$0xf]
        %v2500 = vld [vmem:[%s2487 + $0x30] sm:$0xf]
        %v2501 = vld [vmem:[%s2487 + $0x34] sm:$0xf]
        %v2502 = vld [vmem:[%s2487 + $0x38] sm:$0xf]
        %v2503 = vld [vmem:[%s2487 + $0x3c] sm:$0xf]
        %v2504 = vpack.c.bf16 %v2486, %v2485
        %v2521 = vunpack.c.l.b16 %v2488
        %v2522 = vunpack.c.l.b16 %v2489
        %v2523 = vunpack.c.l.b16 %v2490
        %v2524 = vunpack.c.l.b16 %v2491
        %v2525 = vunpack.c.l.b16 %v2492
        %v2526 = vunpack.c.l.b16 %v2493
        %v2527 = vunpack.c.l.b16 %v2494
        %v2528 = vunpack.c.l.b16 %v2495
        %v2529 = vunpack.c.l.b16 %v2496
        %v2530 = vunpack.c.l.b16 %v2497
        %v2531 = vunpack.c.l.b16 %v2498
        %v2532 = vunpack.c.l.b16 %v2499
        %v2533 = vunpack.c.l.b16 %v2500
        %v2534 = vunpack.c.l.b16 %v2501
        %v2535 = vunpack.c.l.b16 %v2502
        %v2536 = vunpack.c.l.b16 %v2503
        %v2537 = vpack.c.b16 %v2522, %v2521
        %v2538 = vpack.c.b16 %v2524, %v2523
        %v2539 = vpack.c.b16 %v2526, %v2525
        %v2540 = vpack.c.b16 %v2528, %v2527
        %v2541 = vpack.c.b16 %v2530, %v2529
        %v2542 = vpack.c.b16 %v2532, %v2531
        %v2543 = vpack.c.b16 %v2534, %v2533
        %v2544 = vpack.c.b16 %v2536, %v2535
        %2553 = vmatprep.subr.bf16.mxu0 0
        %2554 = vmatpush1.bf16.msra.mxu0 %v2537
        %2555 = vmatprep.subr.bf16.mxu0 0
        %2556 = vmatpush1.bf16.msra.mxu0 %v2538
        %2557 = vmatprep.subr.bf16.mxu0 0
        %2558 = vmatpush1.bf16.msra.mxu0 %v2539
        %2559 = vmatprep.subr.bf16.mxu0 0
        %2560 = vmatpush1.bf16.msra.mxu0 %v2540
        %2561 = vmatprep.subr.bf16.mxu0 0
        %2562 = vmatpush1.bf16.msra.mxu0 %v2541
        %2563 = vmatprep.subr.bf16.mxu0 0
        %2564 = vmatpush1.bf16.msra.mxu0 %v2542
        %2565 = vmatprep.subr.bf16.mxu0 0
        %2566 = vmatpush1.bf16.msra.mxu0 %v2543
        %2567 = vmatprep.subr.bf16.mxu0 0
        %2568 = vmatpush1.bf16.msra.mxu0 %v2544
        %2569 = vmatprep.subr.bf16.mxu0 0
        %2570 = vmatpush1.bf16.msra.mxu0 0
        %2571 = vmatprep.subr.bf16.mxu0 0
        %2572 = vmatpush1.bf16.msra.mxu0 0
        %2573 = vmatprep.subr.bf16.mxu0 0
        %2574 = vmatpush1.bf16.msra.mxu0 0
        %2575 = vmatprep.subr.bf16.mxu0 0
        %2576 = vmatpush1.bf16.msra.mxu0 0
        %2577 = vmatprep.subr.bf16.mxu0 0
        %2578 = vmatpush1.bf16.msra.mxu0 0
        %2579 = vmatprep.subr.bf16.mxu0 0
        %2580 = vmatpush1.bf16.msra.mxu0 0
        %2581 = vmatprep.subr.bf16.mxu0 0
        %2582 = vmatpush1.bf16.msra.mxu0 0
        %2583 = vmatprep.subr.bf16.mxu0 0
        %2584 = vmatpush1.bf16.msra.mxu0 0
        %2585 = vmatprep.mubr.bf16.mxu0 0
        %2586 = vmatmul.mubr.bf16.gmra.mrb[0].mxu0 %v2504
        %v2587 = vpop.f32.mrb[0].mxu0
        %v2588 = vadd.f32 0.0, %v2587
        %v2589 = vpop.f32.mrb[0].mxu0
        %v2590 = vpop.f32.mrb[0].mxu0
        %v2591 = vadd.f32 0.0, %v2590
        %v2592 = vpop.f32.mrb[0].mxu0
        %2593 = vdwg.mxu0
        %v2594 = vadd.f32 %v2479, %v2588
        %v2595 = vadd.f32 %v2482, %v2591
        %v2597 = vlaneseq
        %v2598 = vshrl.u32 %v2597, 7
        %v2599 = vsub.s32 0, %v2598
        %v2600 = vrot.slane %v2266, %v2599
        %v2602 = vadd.f32 %v2594, %v2600
        %v2603 = vadd.f32 %v2595, %v2600
        %vm2604 = vcmp.gt.f32.partialorder %v2602, 0.0
        %vm2605 = vcmp.gt.f32.partialorder %v2603, 0.0
        %v2606 = vmul.f32 %v2602, 0.01
        %v2607 = vmul.f32 %v2603, 0.01
        %v2608 = vsel %vm2604, %v2602, %v2606
        %v2609 = vsel %vm2605, %v2603, %v2607
        %v2610 = vld [vmem:[#allocation2 + $0x8] sm:$0xff]
        %v2611 = vld [vmem:[#allocation2 + $0x10] sm:$0xff]
        %s2612 = scalar_lea.vmem [#allocation12], 64
        %v2613 = vld [vmem:[%s2612] sm:$0xf]
        %v2614 = vld [vmem:[%s2612 + $0x4] sm:$0xf]
        %v2615 = vld [vmem:[%s2612 + $0x8] sm:$0xf]
        %v2616 = vld [vmem:[%s2612 + $0xc] sm:$0xf]
        %v2617 = vld [vmem:[%s2612 + $0x10] sm:$0xf]
        %v2618 = vld [vmem:[%s2612 + $0x14] sm:$0xf]
        %v2619 = vld [vmem:[%s2612 + $0x18] sm:$0xf]
        %v2620 = vld [vmem:[%s2612 + $0x1c] sm:$0xf]
        %v2621 = vld [vmem:[%s2612 + $0x20] sm:$0xf]
        %v2622 = vld [vmem:[%s2612 + $0x24] sm:$0xf]
        %v2623 = vld [vmem:[%s2612 + $0x28] sm:$0xf]
        %v2624 = vld [vmem:[%s2612 + $0x2c] sm:$0xf]
        %v2625 = vld [vmem:[%s2612 + $0x30] sm:$0xf]
        %v2626 = vld [vmem:[%s2612 + $0x34] sm:$0xf]
        %v2627 = vld [vmem:[%s2612 + $0x38] sm:$0xf]
        %v2628 = vld [vmem:[%s2612 + $0x3c] sm:$0xf]
        %v2629 = vpack.c.bf16 %v2611, %v2610
        %s2630 = scalar_lea.vmem %s6, 1
        %v2631 = vld [vmem:[%s2630] sm:$0x1]
        %v2633 = vlaneseq
        %v2634 = vshrl.u32 %v2633, 7
        %v2635 = vsub.s32 0, %v2634
        %v2636 = vrot.slane %v2631, %v2635
        %v2654 = vunpack.c.l.b16 %v2613
        %v2655 = vunpack.c.l.b16 %v2614
        %v2656 = vunpack.c.l.b16 %v2615
        %v2657 = vunpack.c.l.b16 %v2616
        %v2658 = vunpack.c.l.b16 %v2617
        %v2659 = vunpack.c.l.b16 %v2618
        %v2660 = vunpack.c.l.b16 %v2619
        %v2661 = vunpack.c.l.b16 %v2620
        %v2662 = vunpack.c.l.b16 %v2621
        %v2663 = vunpack.c.l.b16 %v2622
        %v2664 = vunpack.c.l.b16 %v2623
        %v2665 = vunpack.c.l.b16 %v2624
        %v2666 = vunpack.c.l.b16 %v2625
        %v2667 = vunpack.c.l.b16 %v2626
        %v2668 = vunpack.c.l.b16 %v2627
        %v2669 = vunpack.c.l.b16 %v2628
        %v2670 = vpack.c.b16 %v2655, %v2654
        %v2671 = vpack.c.b16 %v2657, %v2656
        %v2672 = vpack.c.b16 %v2659, %v2658
        %v2673 = vpack.c.b16 %v2661, %v2660
        %v2674 = vpack.c.b16 %v2663, %v2662
        %v2675 = vpack.c.b16 %v2665, %v2664
        %v2676 = vpack.c.b16 %v2667, %v2666
        %v2677 = vpack.c.b16 %v2669, %v2668
        %2686 = vmatprep.subr.bf16.mxu0 0
        %2687 = vmatpush1.bf16.msra.mxu0 %v2670
        %2688 = vmatprep.subr.bf16.mxu0 0
        %2689 = vmatpush1.bf16.msra.mxu0 %v2671
        %2690 = vmatprep.subr.bf16.mxu0 0
        %2691 = vmatpush1.bf16.msra.mxu0 %v2672
        %2692 = vmatprep.subr.bf16.mxu0 0
        %2693 = vmatpush1.bf16.msra.mxu0 %v2673
        %2694 = vmatprep.subr.bf16.mxu0 0
        %2695 = vmatpush1.bf16.msra.mxu0 %v2674
        %2696 = vmatprep.subr.bf16.mxu0 0
        %2697 = vmatpush1.bf16.msra.mxu0 %v2675
        %2698 = vmatprep.subr.bf16.mxu0 0
        %2699 = vmatpush1.bf16.msra.mxu0 %v2676
        %2700 = vmatprep.subr.bf16.mxu0 0
        %2701 = vmatpush1.bf16.msra.mxu0 %v2677
        %2702 = vmatprep.subr.bf16.mxu0 0
        %2703 = vmatpush1.bf16.msra.mxu0 0
        %2704 = vmatprep.subr.bf16.mxu0 0
        %2705 = vmatpush1.bf16.msra.mxu0 0
        %2706 = vmatprep.subr.bf16.mxu0 0
        %2707 = vmatpush1.bf16.msra.mxu0 0
        %2708 = vmatprep.subr.bf16.mxu0 0
        %2709 = vmatpush1.bf16.msra.mxu0 0
        %2710 = vmatprep.subr.bf16.mxu0 0
        %2711 = vmatpush1.bf16.msra.mxu0 0
        %2712 = vmatprep.subr.bf16.mxu0 0
        %2713 = vmatpush1.bf16.msra.mxu0 0
        %2714 = vmatprep.subr.bf16.mxu0 0
        %2715 = vmatpush1.bf16.msra.mxu0 0
        %2716 = vmatprep.subr.bf16.mxu0 0
        %2717 = vmatpush1.bf16.msra.mxu0 0
        %2718 = vmatprep.mubr.bf16.mxu0 0
        %2719 = vmatmul.mubr.bf16.gmra.mrb[0].mxu0 %v2629
        %v2720 = vpop.f32.mrb[0].mxu0
        %v2721 = vadd.f32 %v2636, %v2720
        %v2722 = vpop.f32.mrb[0].mxu0
        %v2723 = vpop.f32.mrb[0].mxu0
        %v2724 = vadd.f32 %v2636, %v2723
        %v2725 = vpop.f32.mrb[0].mxu0
        %2726 = vdwg.mxu0
        %v2727 = vadd.f32 %v2608, %v2721
        %v2728 = vadd.f32 %v2609, %v2724
        %2729 = vst [vmem:[#allocation2 + $0x8] sm:$0xff] %v2727
        %2730 = vst [vmem:[#allocation2 + $0x10] sm:$0xff] %v2728
        %v2731 = vld [vmem:[#allocation2 + $0x8] sm:$0xff]
        %v2732 = vld [vmem:[#allocation2 + $0x10] sm:$0xff]
        %v2733 = vmax.f32 %v2731, %v2732
        %v2734 = vrot.slane %v2733, 4
        %v2735 = vmax.f32 %v2733, %v2734
        %v2736 = vrot.slane %v2735, 2
        %v2737 = vmax.f32 %v2735, %v2736
        %v2738 = vrot.slane %v2737, 1
        %v2739 = vmax.f32 %v2737, %v2738
        %v2740 = vld [vmem:[%s7] sm:$0xf]
        %v2741 = vld [vmem:[%s7 + $0x4] sm:$0xf]
        %v2742 = vld [vmem:[%s7 + $0x8] sm:$0xf]
        %v2743 = vld [vmem:[%s7 + $0xc] sm:$0xf]
        %v2744 = vld [vmem:[%s7 + $0x10] sm:$0xf]
        %v2745 = vld [vmem:[%s7 + $0x14] sm:$0xf]
        %v2746 = vld [vmem:[%s7 + $0x18] sm:$0xf]
        %v2747 = vld [vmem:[%s7 + $0x1c] sm:$0xf]
        %v2748 = vld [vmem:[%s7 + $0x20] sm:$0xf]
        %v2749 = vld [vmem:[%s7 + $0x24] sm:$0xf]
        %v2750 = vld [vmem:[%s7 + $0x28] sm:$0xf]
        %v2751 = vld [vmem:[%s7 + $0x2c] sm:$0xf]
        %v2752 = vld [vmem:[%s7 + $0x30] sm:$0xf]
        %v2753 = vld [vmem:[%s7 + $0x34] sm:$0xf]
        %v2754 = vld [vmem:[%s7 + $0x38] sm:$0xf]
        %v2755 = vld [vmem:[%s7 + $0x3c] sm:$0xf]
        %v2756 = vpack.c.bf16 %v2739, %v2739
        %v2757 = vld [vmem:[%s8] sm:$0x1]
        %v2774 = vunpack.c.l.b16 %v2740
        %v2775 = vunpack.c.l.b16 %v2741
        %v2776 = vunpack.c.l.b16 %v2742
        %v2777 = vunpack.c.l.b16 %v2743
        %v2778 = vunpack.c.l.b16 %v2744
        %v2779 = vunpack.c.l.b16 %v2745
        %v2780 = vunpack.c.l.b16 %v2746
        %v2781 = vunpack.c.l.b16 %v2747
        %v2782 = vunpack.c.l.b16 %v2748
        %v2783 = vunpack.c.l.b16 %v2749
        %v2784 = vunpack.c.l.b16 %v2750
        %v2785 = vunpack.c.l.b16 %v2751
        %v2786 = vunpack.c.l.b16 %v2752
        %v2787 = vunpack.c.l.b16 %v2753
        %v2788 = vunpack.c.l.b16 %v2754
        %v2789 = vunpack.c.l.b16 %v2755
        %v2790 = vpack.c.b16 %v2775, %v2774
        %v2791 = vpack.c.b16 %v2777, %v2776
        %v2792 = vpack.c.b16 %v2779, %v2778
        %v2793 = vpack.c.b16 %v2781, %v2780
        %v2794 = vpack.c.b16 %v2783, %v2782
        %v2795 = vpack.c.b16 %v2785, %v2784
        %v2796 = vpack.c.b16 %v2787, %v2786
        %v2797 = vpack.c.b16 %v2789, %v2788
        %2806 = vmatprep.subr.bf16.mxu0 0
        %2807 = vmatpush1.bf16.msra.mxu0 %v2790
        %2808 = vmatprep.subr.bf16.mxu0 0
        %2809 = vmatpush1.bf16.msra.mxu0 %v2791
        %2810 = vmatprep.subr.bf16.mxu0 0
        %2811 = vmatpush1.bf16.msra.mxu0 %v2792
        %2812 = vmatprep.subr.bf16.mxu0 0
        %2813 = vmatpush1.bf16.msra.mxu0 %v2793
        %2814 = vmatprep.subr.bf16.mxu0 0
        %2815 = vmatpush1.bf16.msra.mxu0 %v2794
        %2816 = vmatprep.subr.bf16.mxu0 0
        %2817 = vmatpush1.bf16.msra.mxu0 %v2795
        %2818 = vmatprep.subr.bf16.mxu0 0
        %2819 = vmatpush1.bf16.msra.mxu0 %v2796
        %2820 = vmatprep.subr.bf16.mxu0 0
        %2821 = vmatpush1.bf16.msra.mxu0 %v2797
        %2822 = vmatprep.subr.bf16.mxu0 0
        %2823 = vmatpush1.bf16.msra.mxu0 0
        %2824 = vmatprep.subr.bf16.mxu0 0
        %2825 = vmatpush1.bf16.msra.mxu0 0
        %2826 = vmatprep.subr.bf16.mxu0 0
        %2827 = vmatpush1.bf16.msra.mxu0 0
        %2828 = vmatprep.subr.bf16.mxu0 0
        %2829 = vmatpush1.bf16.msra.mxu0 0
        %2830 = vmatprep.subr.bf16.mxu0 0
        %2831 = vmatpush1.bf16.msra.mxu0 0
        %2832 = vmatprep.subr.bf16.mxu0 0
        %2833 = vmatpush1.bf16.msra.mxu0 0
        %2834 = vmatprep.subr.bf16.mxu0 0
        %2835 = vmatpush1.bf16.msra.mxu0 0
        %2836 = vmatprep.subr.bf16.mxu0 0
        %2837 = vmatpush1.bf16.msra.mxu0 0
        %2838 = vmatprep.mubr.bf16.mxu0 0
        %2839 = vmatmul.mubr.bf16.gmra.mrb[0].mxu0 %v2756
        %v2840 = vpop.f32.mrb[0].mxu0
        %v2841 = vadd.f32 %v2757, %v2840
        %v2842 = vpop.f32.mrb[0].mxu0
        %v2843 = vpop.f32.mrb[0].mxu0
        %v2844 = vpop.f32.mrb[0].mxu0
        %2845 = vdwg.mxu0
        %2846 = vst [vmem:[%s397] sm:$0x1] %v2841
        %s2847 = sand.u32 %s228, 1
        %s2848 = scalar_lea.sflag [#allocation6], %s2847
        %s2849 = sand.u32 %s228, 1
        %s2850 = scalar_lea.vmem [#allocation13], %s2849
        // Predicated region
        $region77: #{tpu_custom_call.1} parent=55 // pred_check
          %p2851 = pneg %p238
        $region78: #{tpu_custom_call.1} parent=55 // pred_check_branch
          %2853 = sbr.rel (%p2851) target = $region80
        $region79: #{tpu_custom_call.1} parent=55 // pred_region
          %s2855 = ssub.s32 16, 16
          %2856 = vsyncadd %s2848, %s2855
          %s2857 = smul.addr %s26, 16
          %s2858 = scalar_lea.hbm %s9, %s2857
          %s2860 = sshll.u32 %s2850, 4
          %s2861 = int_to_ptr.vmem [resolvable:$true] %s2860
          %2863 = dma.vmem_to_hbm [thread:$0]  %s2861, 16, %s2858, %s2848
        $region80: #{tpu_custom_call.1} parent=55 // pred_fallthru
          _
      $region56: #{tpu_custom_call.1} parent=5 // pred_fallthru
        _
      %p2864 = scmp.le.s32.totalorder 2, %s21
      // Predicated region
      $region81: #{tpu_custom_call.1} parent=5 // pred_check
        %p2865 = pneg %p2864
      $region82: #{tpu_custom_call.1} parent=5 // pred_check_branch
        %2867 = sbr.rel (%p2865) target = $region84
      $region83: #{tpu_custom_call.1} parent=5 // pred_region
        %s2868 = ssub.s32 %s21, 2
        // Predicated region
        $region85: #{tpu_custom_call.1} parent=83 // pred_check
          %p2869 = pneg %p244
        $region86: #{tpu_custom_call.1} parent=83 // pred_check_branch
          %2871 = sbr.rel (%p2869) target = $region88
        $region87: #{tpu_custom_call.1} parent=83 // pred_region
          %s2872 = sand.u32 %s229, 1
          %s2873 = scalar_lea.sflag [#allocation6], %s2872
          %s2874 = sand.u32 %s229, 1
          %s2875 = scalar_lea.vmem [#allocation13], %s2874
          %2876 = dma.done %s2873, 16
        $region88: #{tpu_custom_call.1} parent=83 // pred_fallthru
          _
      $region84: #{tpu_custom_call.1} parent=5 // pred_fallthru
        _
    $region6: #{tpu_custom_call.1} parent=1 // loop_footer
      %s25 = sadd.s32 1, %s21
    $region7: #{tpu_custom_call.1} parent=1 // loop_footer_branch
      %20 = sbr.rel target = $region3
    $region8: #{tpu_custom_call.1} parent=1 // loop_exit
      _
    %2877 = vsyncpa [#allocation5], 1
    %s2878 = scalar_lea.sflag [#allocation5], 1
    %2879 = vsyncpa %s2878, 1
    %2880 = vsyncpa [#allocation8], 1
    %2881 = vsyncpa [#allocation11], 1
    %2882 = vsyncpa [#allocation6], 1
    %s2883 = scalar_lea.sflag [#allocation6], 1
    %2884 = vsyncpa %s2883, 1

</llo_original>
